<compile_context>
chip_gen: v5e
topology: v5e:2x2
jax: 0.10.0
libtpu: 0.0.40
codegen_flags: <defaults>
</compile_context>

<pallas_src>
import functools

import jax
import jax.numpy as jnp
from jax.experimental import pallas as pl
from jax.experimental.pallas import tpu as pltpu

_EPS = 1e-5                              # GroupNorm / InstanceNorm default eps
_VMEM_LIMIT_BYTES = 48 * 1024 * 1024     # > default scoped limit on v5e/v6e/v7x,
                                         # < v7x's 64 MiB physical per-TC VMEM
_VMEM_BLOCK_BUDGET = 24 * 1024 * 1024    # per-step streamed bytes (x2 dbl-buffer)


# --------------------------------------------------------------------------
# In-kernel building blocks
# --------------------------------------------------------------------------

def _instnorm(y, g, b):
    """Single-pass per-sample per-channel instance norm of y (Bb, Ms, C), f32."""
    n = y.shape[1]
    s1 = jnp.sum(y, axis=1, keepdims=True)
    s2 = jnp.sum(y * y, axis=1, keepdims=True)
    mean = s1 * (1.0 / n)
    var = jnp.maximum(s2 * (1.0 / n) - mean * mean, 0.0)
    inv = jax.lax.rsqrt(var + _EPS)                    # EUP, effectively free
    return (y - mean) * inv * g + b


def _conv_main(x_ref, w_ref, g_ref, b_ref, *, kh, kw, stride, oh, ow, hq):
    """conv (kh*kw tap matmuls, in-VMEM im2col) + instance-norm, f32 result."""
    Bb = x_ref.shape[0]
    cin = x_ref.shape[-1]
    cout = w_ref.shape[-1]
    ms = oh * ow
    s = stride
    # Load once, upcast to f32 so the unaligned sublane slices below stay on the
    # well-trodden 32-bit relayout path; taps are re-cast to bf16 for the MXU
    # (bit-exact round trip), so HBM traffic and MXU inputs stay bf16.
    xp = x_ref[...].astype(jnp.float32)                # (Bb, s*s*hq, wq, cin)
    acc = jnp.zeros((Bb * ms, cout), jnp.float32)
    for i in range(kh):                                # unrolled: kh*kw taps
        for j in range(kw):
            r0 = ((i % s) * s + (j % s)) * hq + i // s  # phase row + H offset
            c0 = j // s
            tap = xp[:, r0:r0 + oh, c0:c0 + ow, :].reshape(Bb * ms, cin)
            acc = acc + jnp.dot(tap.astype(jnp.bfloat16), w_ref[i * kw + j],
                                preferred_element_type=jnp.float32)
    return _instnorm(acc.reshape(Bb, ms, cout), g_ref[...], b_ref[...])


def _conv_in_kernel(x_ref, w_ref, g_ref, b_ref, o_ref, *, relu, **cfg):
    """conv -> instance-norm -> optional ReLU."""
    out = _conv_main(x_ref, w_ref, g_ref, b_ref, **cfg)
    if relu:
        out = jnp.maximum(out, 0.0)
    o_ref[...] = out.astype(o_ref.dtype)


def _conv_in_add_relu_kernel(x_ref, w_ref, g_ref, b_ref, s_ref, o_ref, **cfg):
    """conv -> instance-norm -> + identity shortcut (f32) -> ReLU."""
    out = _conv_main(x_ref, w_ref, g_ref, b_ref, **cfg)
    out = out + s_ref[...].astype(jnp.float32)
    o_ref[...] = jnp.maximum(out, 0.0).astype(o_ref.dtype)


def _conv_in_scconv_relu_kernel(x_ref, w_ref, g_ref, b_ref,
                                sx_ref, sw_ref, sg_ref, sb_ref, o_ref, **cfg):
    """conv -> IN, fused 1x1-conv shortcut -> IN, add, ReLU (one kernel)."""
    out = _conv_main(x_ref, w_ref, g_ref, b_ref, **cfg)
    Bb, ms, sc_cin = sx_ref.shape
    cout = o_ref.shape[-1]
    sx = sx_ref[...].reshape(Bb * ms, sc_cin)
    ys = jnp.dot(sx, sw_ref[...], preferred_element_type=jnp.float32)
    sc = _instnorm(ys.reshape(Bb, ms, cout), sg_ref[...], sb_ref[...])
    o_ref[...] = jnp.maximum(out + sc, 0.0).astype(o_ref.dtype)


# --------------------------------------------------------------------------
# Wrapper glue
# --------------------------------------------------------------------------

def _pad_and_phase(x, pad, stride):
    """Zero-pad spatially and fold stride phases into the H axis.

    (B, H, W, C) -> (B, s*s*Hq, Wq, C); phase p = hr*s + wr occupies rows
    [p*Hq, (p+1)*Hq), so every conv tap becomes a contiguous static slice in
    the kernel. Total bytes stay 1x (no im2col inflation).
    """
    if pad:
        x = jnp.pad(x, ((0, 0), (pad, pad), (pad, pad), (0, 0)))
    B, Hp, Wp, C = x.shape
    s = stride
    if s == 1:
        return x
    eh, ew = (-Hp) % s, (-Wp) % s
    if eh or ew:
        x = jnp.pad(x, ((0, 0), (0, eh), (0, ew), (0, 0)))
        Hp, Wp = Hp + eh, Wp + ew
    hq, wq = Hp // s, Wp // s
    x = x.reshape(B, hq, s, wq, s, C)
    x = jnp.transpose(x, (0, 2, 4, 1, 3, 5))           # (B, s, s, hq, wq, C)
    return x.reshape(B, s * s * hq, wq, C)


def _pick_bb(B, Ms, per_sample_bytes, target_m=256):
    """Samples per grid step: push M = Bb*Ms toward >=256 (MXU fill), keep the
    grid >= 2 steps (v7x two TensorCores), stay inside the VMEM budget with
    double-buffering, and keep B divisible by Bb."""
    bb = max(1, min(B, pl.cdiv(target_m, Ms)))
    while bb > 1 and 2 * bb * per_sample_bytes > _VMEM_BLOCK_BUDGET:
        bb -= 1
    while bb > 1 and B // bb < 2:
        bb -= 1
    while B % bb:
        bb -= 1
    return bb


def conv_instnorm(x, w_oihw, gamma, beta, *, stride, pad, relu=True,
                  sc_x=None, sc_w=None, sc_g=None, sc_b=None,
                  out_dtype=jnp.float32):
    """Fused Conv2d(bias=False) + GroupNorm(C,C) [+ shortcut] [+ ReLU].

    shortcut: sc_w given   -> fused 1x1 conv + instance-norm on sc_x, then add;
              sc_x only    -> identity add of sc_x (f32);
              neither      -> no residual.
    """
    B, H, W, cin = x.shape
    cout, cin_w, kh, kw = w_oihw.shape
    assert cin_w == cin
    OH = (H + 2 * pad - kh) // stride + 1
    OW = (W + 2 * pad - kw) // stride + 1
    Ms = OH * OW

    xph = _pad_and_phase(x, pad, stride).astype(jnp.bfloat16)  # (B, PH, Wq, cin)
    _, PH, Wq, _ = xph.shape
    hq = PH // (stride * stride)

    wt = jnp.transpose(w_oihw, (2, 3, 1, 0)).reshape(kh * kw, cin, cout)
    wt = wt.astype(jnp.bfloat16)
    g2 = gamma.reshape(1, cout).astype(jnp.float32)
    b2 = beta.reshape(1, cout).astype(jnp.float32)

    itemsize = jnp.dtype(out_dtype).itemsize
    per_sample_bytes = PH * Wq * cin * 2 + Ms * cout * itemsize
    if sc_x is not None:
        per_sample_bytes += Ms * sc_x.shape[-1] * (2 if sc_w is not None else 4)
    Bb = _pick_bb(B, Ms, per_sample_bytes)
    grid = (B // Bb,)

    in_specs = [
        pl.BlockSpec((Bb, PH, Wq, cin), lambda b: (b, 0, 0, 0)),  # activations
        pl.BlockSpec((kh * kw, cin, cout), lambda b: (0, 0, 0)),  # per-tap weights
        pl.BlockSpec((1, cout), lambda b: (0, 0)),                # gamma
        pl.BlockSpec((1, cout), lambda b: (0, 0)),                # beta
    ]
    args = [xph, wt, g2, b2]

    flops = 2 * B * Ms * (kh * kw * cin) * cout
    bytes_accessed = (xph.size * 2 + wt.size * 2 + (g2.size + b2.size) * 4
                      + B * Ms * cout * itemsize)
    common = dict(kh=kh, kw=kw, stride=stride, oh=OH, ow=OW, hq=hq)

    if sc_w is not None:
        # Fused 1x1 downsample shortcut (conv + instance-norm) in the same body.
        sc_cin = sc_x.shape[-1]
        sxr = sc_x.reshape(B, Ms, sc_cin).astype(jnp.bfloat16)
        swt = jnp.transpose(sc_w.reshape(cout, sc_cin), (1, 0)).astype(jnp.bfloat16)
        sg2 = sc_g.reshape(1, cout).astype(jnp.float32)
        sb2 = sc_b.reshape(1, cout).astype(jnp.float32)
        in_specs += [
            pl.BlockSpec((Bb, Ms, sc_cin), lambda b: (b, 0, 0)),
            pl.BlockSpec((sc_cin, cout), lambda b: (0, 0)),
            pl.BlockSpec((1, cout), lambda b: (0, 0)),
            pl.BlockSpec((1, cout), lambda b: (0, 0)),
        ]
        args += [sxr, swt, sg2, sb2]
        kernel = functools.partial(_conv_in_scconv_relu_kernel, **common)
        flops += 2 * B * Ms * sc_cin * cout
        bytes_accessed += sxr.size * 2 + swt.size * 2 + (sg2.size + sb2.size) * 4
    elif sc_x is not None:
        # Identity shortcut: residual add kept in f32 to match the reference.
        sxr = sc_x.reshape(B, Ms, cout).astype(jnp.float32)
        in_specs.append(pl.BlockSpec((Bb, Ms, cout), lambda b: (b, 0, 0)))
        args.append(sxr)
        kernel = functools.partial(_conv_in_add_relu_kernel, **common)
        bytes_accessed += sxr.size * 4
    else:
        kernel = functools.partial(_conv_in_kernel, relu=relu, **common)

    out = pl.pallas_call(
        kernel,
        out_shape=jax.ShapeDtypeStruct((B, Ms, cout), out_dtype),
        grid_spec=pltpu.PrefetchScalarGridSpec(
            num_scalar_prefetch=0,
            grid=grid,
            in_specs=in_specs,
            out_specs=pl.BlockSpec((Bb, Ms, cout), lambda b: (b, 0, 0)),
        ),
        compiler_params=pltpu.CompilerParams(
            dimension_semantics=("parallel",),
            vmem_limit_bytes=_VMEM_LIMIT_BYTES),
        cost_estimate=pl.CostEstimate(
            flops=int(flops),
            transcendentals=int(2 * B * cout),
            bytes_accessed=int(bytes_accessed)),
    )(*args)
    return out.reshape(B, OH, OW, cout)


# --------------------------------------------------------------------------
# BasicBlock: params + forward (matches the PyTorch module's forward)
# --------------------------------------------------------------------------

def init_block_params(key, in_planes, planes, stride):
    k1, k2, k3 = jax.random.split(key, 3)
    p = {
        "conv1_w": jax.random.normal(k1, (planes, in_planes, 3, 3),
                                     jnp.float32) / jnp.sqrt(in_planes * 9.0),
        "bn1_g": jnp.ones((planes,), jnp.float32),
        "bn1_b": jnp.zeros((planes,), jnp.float32),
        "conv2_w": jax.random.normal(k2, (planes, planes, 3, 3),
                                     jnp.float32) / jnp.sqrt(planes * 9.0),
        "bn2_g": jnp.ones((planes,), jnp.float32),
        "bn2_b": jnp.zeros((planes,), jnp.float32),
    }
    if stride != 1 or in_planes != planes:   # downsample shortcut: 1x1 conv + norm
        p["sc_w"] = jax.random.normal(k3, (planes, in_planes, 1, 1),
                                      jnp.float32) / jnp.sqrt(float(in_planes))
        p["sc_g"] = jnp.ones((planes,), jnp.float32)
        p["sc_b"] = jnp.zeros((planes,), jnp.float32)
    return p


def basic_block_forward(params, x_nhwc, *, stride):
    """out = relu(bn2(conv2(relu(bn1(conv1(x))))) + shortcut(x)) — 2 pallas_calls."""
    in_planes = x_nhwc.shape[-1]
    planes = params["conv1_w"].shape[0]
    downsample = stride != 1 or in_planes != planes

    # conv1 -> in1 -> relu (activation carried bf16 into the next conv)
    out1 = conv_instnorm(x_nhwc, params["conv1_w"], params["bn1_g"],
                         params["bn1_b"], stride=stride, pad=1, relu=True,
                         out_dtype=jnp.bfloat16)

    if downsample:
        # 1x1 stride-s shortcut conv + IN fused into the conv2 kernel; only the
        # stride-subsampled x (1/s^2 of x bytes) crosses HBM.
        sx = x_nhwc[:, ::stride, ::stride, :]
        out = conv_instnorm(out1, params["conv2_w"], params["bn2_g"],
                            params["bn2_b"], stride=1, pad=1, relu=True,
                            sc_x=sx, sc_w=params["sc_w"],
                            sc_g=params["sc_g"], sc_b=params["sc_b"],
                            out_dtype=jnp.float32)
    else:
        out = conv_instnorm(out1, params["conv2_w"], params["bn2_g"],
                            params["bn2_b"], stride=1, pad=1, relu=True,
                            sc_x=x_nhwc, out_dtype=jnp.float32)
    return out


# --------------------------------------------------------------------------
# Pure-JAX reference (mirrors the kernel's bf16 casts -> tight tolerance)
# --------------------------------------------------------------------------

def _ref_conv(x, w, stride, pad):
    return jax.lax.conv_general_dilated(
        x, w, window_strides=(stride, stride),
        padding=[(pad, pad), (pad, pad)],
        dimension_numbers=("NHWC", "OIHW", "NHWC"))


def _ref_instnorm(y, g, b):
    mean = jnp.mean(y, axis=(1, 2), keepdims=True)
    var = jnp.mean(jnp.square(y - mean), axis=(1, 2), keepdims=True)
    return ((y - mean) * jax.lax.rsqrt(var + _EPS)
            * g.reshape(1, 1, 1, -1) + b.reshape(1, 1, 1, -1))


def basic_block_reference(p, x, *, stride):
    bf = lambda a: a.astype(jnp.bfloat16).astype(jnp.float32)
    in_planes = x.shape[-1]
    planes = p["conv1_w"].shape[0]
    y1 = _ref_conv(bf(x), bf(p["conv1_w"]), stride, 1)
    out1 = bf(jnp.maximum(_ref_instnorm(y1, p["bn1_g"], p["bn1_b"]), 0.0))
    y2 = _ref_conv(out1, bf(p["conv2_w"]), 1, 1)
    out2 = _ref_instnorm(y2, p["bn2_g"], p["bn2_b"])
    if stride != 1 or in_planes != planes:
        sx = x[:, ::stride, ::stride, :]
        ys = _ref_conv(bf(sx), bf(p["sc_w"]), 1, 0)
        sc = _ref_instnorm(ys, p["sc_g"], p["sc_b"])
    else:
        sc = x
    return jnp.maximum(out2 + sc, 0.0)


# --------------------------------------------------------------------------

if __name__ == "__main__":
    batch, in_planes, planes, spatial = 2, 16, 32, 16

    key = jax.random.PRNGKey(0)
    kx, kp1, kp2 = jax.random.split(key, 3)
    x = jax.random.normal(kx, (batch, in_planes, spatial, spatial), jnp.float32)

    params1 = init_block_params(kp1, in_planes, planes, stride=2)  # downsample block
    params2 = init_block_params(kp2, planes, planes, stride=1)     # identity block

    def forward(p1, p2, x_nchw):
        h = jnp.transpose(x_nchw, (0, 2, 3, 1))            # NCHW -> NHWC
        h = basic_block_forward(p1, h, stride=2)
        h = basic_block_forward(p2, h, stride=1)
        return jnp.transpose(h, (0, 3, 1, 2))              # NHWC -> NCHW

    def reference(p1, p2, x_nchw):
        h = jnp.transpose(x_nchw, (0, 2, 3, 1))
        h = basic_block_reference(p1, h, stride=2)
        h = basic_block_reference(p2, h, stride=1)
        return jnp.transpose(h, (0, 3, 1, 2))

    out = jax.jit(forward)(params1, params2, x)
    jax.block_until_ready(out)
    assert out.shape == (batch, planes, spatial // 2, spatial // 2), out.shape
    assert bool(jnp.all(jnp.isfinite(out)))

    ref = jax.jit(reference)(params1, params2, x)
    err = float(jnp.max(jnp.abs(out - ref)))
    assert err < 2e-2, f"max abs diff vs reference: {err}"
    print("KERNEL_OK")
</pallas_src>

<mosaic_0001>
module attributes {stable_mosaic.version = 11 : i64} {
  func.func @_conv_in_kernel(%arg0: i32, %arg1: memref<1x36x9x16xbf16, #tpu.memory_space<vmem>>, %arg2: memref<9x16x32xbf16, #tpu.memory_space<vmem>>, %arg3: memref<1x32xf32, #tpu.memory_space<vmem>>, %arg4: memref<1x32xf32, #tpu.memory_space<vmem>>, %arg5: memref<1x64x32xbf16, #tpu.memory_space<vmem>>) attributes {dimension_semantics = [#tpu.dimension_semantics<parallel>], iteration_bounds = array<i64: 2>, scalar_prefetch = 0 : i64, scratch_operands = 0 : i64, tpu.core_type = #tpu.core_type<tc>, window_params = [{transform_indices = @transform_0, window_bounds = array<i64: 1, 36, 9, 16>}, {pipeline_mode = #tpu.pipeline_mode<synchronous>, transform_indices = @transform_1, window_bounds = array<i64: 9, 16, 32>}, {pipeline_mode = #tpu.pipeline_mode<synchronous>, transform_indices = @transform_2, window_bounds = array<i64: 1, 32>}, {pipeline_mode = #tpu.pipeline_mode<synchronous>, transform_indices = @transform_3, window_bounds = array<i64: 1, 32>}, {transform_indices = @transform_4, window_bounds = array<i64: 1, 64, 32>}]} {
    %c0 = arith.constant 0 : index
    %c0_0 = arith.constant 0 : index
    %c0_1 = arith.constant 0 : index
    %c0_2 = arith.constant 0 : index
    %0 = vector.load %arg1[%c0, %c0_0, %c0_1, %c0_2] : memref<1x36x9x16xbf16, #tpu.memory_space<vmem>>, vector<1x36x9x16xbf16>
    %1 = arith.extf %0 : vector<1x36x9x16xbf16> to vector<1x36x9x16xf32>
    %cst = arith.constant 0.000000e+00 : f32
    %2 = vector.broadcast %cst : f32 to vector<64x32xf32>
    %3 = vector.extract_strided_slice %1 {offsets = [0, 0, 0, 0], sizes = [1, 8, 8, 16], strides = [1, 1, 1, 1]} : vector<1x36x9x16xf32> to vector<1x8x8x16xf32>
    %4 = vector.shape_cast %3 : vector<1x8x8x16xf32> to vector<64x16xf32>
    %5 = arith.truncf %4 : vector<64x16xf32> to vector<64x16xbf16>
    %c0_3 = arith.constant 0 : index
    %c0_4 = arith.constant 0 : index
    %c0_5 = arith.constant 0 : index
    %6 = vector.load %arg2[%c0_3, %c0_4, %c0_5] : memref<9x16x32xbf16, #tpu.memory_space<vmem>>, vector<1x16x32xbf16>
    %7 = vector.shape_cast %6 : vector<1x16x32xbf16> to vector<16x32xbf16>
    %cst_6 = arith.constant dense<0.000000e+00> : vector<64x32xf32>
    %8 = tpu.matmul %5, %7, %cst_6 {dimension_numbers = #tpu.dot_dimension_numbers<[1], [0], [0], [1], [0, 0, 1, 1], [], []>} : vector<64x16xbf16>, vector<16x32xbf16>, vector<64x32xf32> -> vector<64x32xf32>
    %9 = arith.addf %2, %8 : vector<64x32xf32>
    %10 = vector.extract_strided_slice %1 {offsets = [0, 9, 0, 0], sizes = [1, 8, 8, 16], strides = [1, 1, 1, 1]} : vector<1x36x9x16xf32> to vector<1x8x8x16xf32>
    %11 = vector.shape_cast %10 : vector<1x8x8x16xf32> to vector<64x16xf32>
    %12 = arith.truncf %11 : vector<64x16xf32> to vector<64x16xbf16>
    %c1 = arith.constant 1 : index
    %c0_7 = arith.constant 0 : index
    %c0_8 = arith.constant 0 : index
    %13 = vector.load %arg2[%c1, %c0_7, %c0_8] : memref<9x16x32xbf16, #tpu.memory_space<vmem>>, vector<1x16x32xbf16>
    %14 = vector.shape_cast %13 : vector<1x16x32xbf16> to vector<16x32xbf16>
    %cst_9 = arith.constant dense<0.000000e+00> : vector<64x32xf32>
    %15 = tpu.matmul %12, %14, %cst_9 {dimension_numbers = #tpu.dot_dimension_numbers<[1], [0], [0], [1], [0, 0, 1, 1], [], []>} : vector<64x16xbf16>, vector<16x32xbf16>, vector<64x32xf32> -> vector<64x32xf32>
    %16 = arith.addf %9, %15 : vector<64x32xf32>
    %17 = vector.extract_strided_slice %1 {offsets = [0, 0, 1, 0], sizes = [1, 8, 8, 16], strides = [1, 1, 1, 1]} : vector<1x36x9x16xf32> to vector<1x8x8x16xf32>
    %18 = vector.shape_cast %17 : vector<1x8x8x16xf32> to vector<64x16xf32>
    %19 = arith.truncf %18 : vector<64x16xf32> to vector<64x16xbf16>
    %c2 = arith.constant 2 : index
    %c0_10 = arith.constant 0 : index
    %c0_11 = arith.constant 0 : index
    %20 = vector.load %arg2[%c2, %c0_10, %c0_11] : memref<9x16x32xbf16, #tpu.memory_space<vmem>>, vector<1x16x32xbf16>
    %21 = vector.shape_cast %20 : vector<1x16x32xbf16> to vector<16x32xbf16>
    %cst_12 = arith.constant dense<0.000000e+00> : vector<64x32xf32>
    %22 = tpu.matmul %19, %21, %cst_12 {dimension_numbers = #tpu.dot_dimension_numbers<[1], [0], [0], [1], [0, 0, 1, 1], [], []>} : vector<64x16xbf16>, vector<16x32xbf16>, vector<64x32xf32> -> vector<64x32xf32>
    %23 = arith.addf %16, %22 : vector<64x32xf32>
    %24 = vector.extract_strided_slice %1 {offsets = [0, 18, 0, 0], sizes = [1, 8, 8, 16], strides = [1, 1, 1, 1]} : vector<1x36x9x16xf32> to vector<1x8x8x16xf32>
    %25 = vector.shape_cast %24 : vector<1x8x8x16xf32> to vector<64x16xf32>
    %26 = arith.truncf %25 : vector<64x16xf32> to vector<64x16xbf16>
    %c3 = arith.constant 3 : index
    %c0_13 = arith.constant 0 : index
    %c0_14 = arith.constant 0 : index
    %27 = vector.load %arg2[%c3, %c0_13, %c0_14] : memref<9x16x32xbf16, #tpu.memory_space<vmem>>, vector<1x16x32xbf16>
    %28 = vector.shape_cast %27 : vector<1x16x32xbf16> to vector<16x32xbf16>
    %cst_15 = arith.constant dense<0.000000e+00> : vector<64x32xf32>
    %29 = tpu.matmul %26, %28, %cst_15 {dimension_numbers = #tpu.dot_dimension_numbers<[1], [0], [0], [1], [0, 0, 1, 1], [], []>} : vector<64x16xbf16>, vector<16x32xbf16>, vector<64x32xf32> -> vector<64x32xf32>
    %30 = arith.addf %23, %29 : vector<64x32xf32>
    %31 = vector.extract_strided_slice %1 {offsets = [0, 27, 0, 0], sizes = [1, 8, 8, 16], strides = [1, 1, 1, 1]} : vector<1x36x9x16xf32> to vector<1x8x8x16xf32>
    %32 = vector.shape_cast %31 : vector<1x8x8x16xf32> to vector<64x16xf32>
    %33 = arith.truncf %32 : vector<64x16xf32> to vector<64x16xbf16>
    %c4 = arith.constant 4 : index
    %c0_16 = arith.constant 0 : index
    %c0_17 = arith.constant 0 : index
    %34 = vector.load %arg2[%c4, %c0_16, %c0_17] : memref<9x16x32xbf16, #tpu.memory_space<vmem>>, vector<1x16x32xbf16>
    %35 = vector.shape_cast %34 : vector<1x16x32xbf16> to vector<16x32xbf16>
    %cst_18 = arith.constant dense<0.000000e+00> : vector<64x32xf32>
    %36 = tpu.matmul %33, %35, %cst_18 {dimension_numbers = #tpu.dot_dimension_numbers<[1], [0], [0], [1], [0, 0, 1, 1], [], []>} : vector<64x16xbf16>, vector<16x32xbf16>, vector<64x32xf32> -> vector<64x32xf32>
    %37 = arith.addf %30, %36 : vector<64x32xf32>
    %38 = vector.extract_strided_slice %1 {offsets = [0, 18, 1, 0], sizes = [1, 8, 8, 16], strides = [1, 1, 1, 1]} : vector<1x36x9x16xf32> to vector<1x8x8x16xf32>
    %39 = vector.shape_cast %38 : vector<1x8x8x16xf32> to vector<64x16xf32>
    %40 = arith.truncf %39 : vector<64x16xf32> to vector<64x16xbf16>
    %c5 = arith.constant 5 : index
    %c0_19 = arith.constant 0 : index
    %c0_20 = arith.constant 0 : index
    %41 = vector.load %arg2[%c5, %c0_19, %c0_20] : memref<9x16x32xbf16, #tpu.memory_space<vmem>>, vector<1x16x32xbf16>
    %42 = vector.shape_cast %41 : vector<1x16x32xbf16> to vector<16x32xbf16>
    %cst_21 = arith.constant dense<0.000000e+00> : vector<64x32xf32>
    %43 = tpu.matmul %40, %42, %cst_21 {dimension_numbers = #tpu.dot_dimension_numbers<[1], [0], [0], [1], [0, 0, 1, 1], [], []>} : vector<64x16xbf16>, vector<16x32xbf16>, vector<64x32xf32> -> vector<64x32xf32>
    %44 = arith.addf %37, %43 : vector<64x32xf32>
    %45 = vector.extract_strided_slice %1 {offsets = [0, 1, 0, 0], sizes = [1, 8, 8, 16], strides = [1, 1, 1, 1]} : vector<1x36x9x16xf32> to vector<1x8x8x16xf32>
    %46 = vector.shape_cast %45 : vector<1x8x8x16xf32> to vector<64x16xf32>
    %47 = arith.truncf %46 : vector<64x16xf32> to vector<64x16xbf16>
    %c6 = arith.constant 6 : index
    %c0_22 = arith.constant 0 : index
    %c0_23 = arith.constant 0 : index
    %48 = vector.load %arg2[%c6, %c0_22, %c0_23] : memref<9x16x32xbf16, #tpu.memory_space<vmem>>, vector<1x16x32xbf16>
    %49 = vector.shape_cast %48 : vector<1x16x32xbf16> to vector<16x32xbf16>
    %cst_24 = arith.constant dense<0.000000e+00> : vector<64x32xf32>
    %50 = tpu.matmul %47, %49, %cst_24 {dimension_numbers = #tpu.dot_dimension_numbers<[1], [0], [0], [1], [0, 0, 1, 1], [], []>} : vector<64x16xbf16>, vector<16x32xbf16>, vector<64x32xf32> -> vector<64x32xf32>
    %51 = arith.addf %44, %50 : vector<64x32xf32>
    %52 = vector.extract_strided_slice %1 {offsets = [0, 10, 0, 0], sizes = [1, 8, 8, 16], strides = [1, 1, 1, 1]} : vector<1x36x9x16xf32> to vector<1x8x8x16xf32>
    %53 = vector.shape_cast %52 : vector<1x8x8x16xf32> to vector<64x16xf32>
    %54 = arith.truncf %53 : vector<64x16xf32> to vector<64x16xbf16>
    %c7 = arith.constant 7 : index
    %c0_25 = arith.constant 0 : index
    %c0_26 = arith.constant 0 : index
    %55 = vector.load %arg2[%c7, %c0_25, %c0_26] : memref<9x16x32xbf16, #tpu.memory_space<vmem>>, vector<1x16x32xbf16>
    %56 = vector.shape_cast %55 : vector<1x16x32xbf16> to vector<16x32xbf16>
    %cst_27 = arith.constant dense<0.000000e+00> : vector<64x32xf32>
    %57 = tpu.matmul %54, %56, %cst_27 {dimension_numbers = #tpu.dot_dimension_numbers<[1], [0], [0], [1], [0, 0, 1, 1], [], []>} : vector<64x16xbf16>, vector<16x32xbf16>, vector<64x32xf32> -> vector<64x32xf32>
    %58 = arith.addf %51, %57 : vector<64x32xf32>
    %59 = vector.extract_strided_slice %1 {offsets = [0, 1, 1, 0], sizes = [1, 8, 8, 16], strides = [1, 1, 1, 1]} : vector<1x36x9x16xf32> to vector<1x8x8x16xf32>
    %60 = vector.shape_cast %59 : vector<1x8x8x16xf32> to vector<64x16xf32>
    %61 = arith.truncf %60 : vector<64x16xf32> to vector<64x16xbf16>
    %c8 = arith.constant 8 : index
    %c0_28 = arith.constant 0 : index
    %c0_29 = arith.constant 0 : index
    %62 = vector.load %arg2[%c8, %c0_28, %c0_29] : memref<9x16x32xbf16, #tpu.memory_space<vmem>>, vector<1x16x32xbf16>
    %63 = vector.shape_cast %62 : vector<1x16x32xbf16> to vector<16x32xbf16>
    %cst_30 = arith.constant dense<0.000000e+00> : vector<64x32xf32>
    %64 = tpu.matmul %61, %63, %cst_30 {dimension_numbers = #tpu.dot_dimension_numbers<[1], [0], [0], [1], [0, 0, 1, 1], [], []>} : vector<64x16xbf16>, vector<16x32xbf16>, vector<64x32xf32> -> vector<64x32xf32>
    %65 = arith.addf %58, %64 : vector<64x32xf32>
    %66 = vector.shape_cast %65 : vector<64x32xf32> to vector<1x64x32xf32>
    %c0_31 = arith.constant 0 : index
    %c0_32 = arith.constant 0 : index
    %67 = vector.load %arg3[%c0_31, %c0_32] : memref<1x32xf32, #tpu.memory_space<vmem>>, vector<1x32xf32>
    %c0_33 = arith.constant 0 : index
    %c0_34 = arith.constant 0 : index
    %68 = vector.load %arg4[%c0_33, %c0_34] : memref<1x32xf32, #tpu.memory_space<vmem>>, vector<1x32xf32>
    %cst_35 = arith.constant dense<0.000000e+00> : vector<1x32xf32>
    %69 = vector.multi_reduction <add>, %66, %cst_35 [1] : vector<1x64x32xf32> to vector<1x32xf32>
    %70 = vector.shape_cast %69 : vector<1x32xf32> to vector<1x1x32xf32>
    %71 = arith.mulf %66, %66 : vector<1x64x32xf32>
    %cst_36 = arith.constant dense<0.000000e+00> : vector<1x32xf32>
    %72 = vector.multi_reduction <add>, %71, %cst_36 [1] : vector<1x64x32xf32> to vector<1x32xf32>
    %73 = vector.shape_cast %72 : vector<1x32xf32> to vector<1x1x32xf32>
    %cst_37 = arith.constant 1.562500e-02 : f32
    %74 = vector.broadcast %cst_37 : f32 to vector<1x1x32xf32>
    %75 = arith.mulf %70, %74 : vector<1x1x32xf32>
    %cst_38 = arith.constant 1.562500e-02 : f32
    %76 = vector.broadcast %cst_38 : f32 to vector<1x1x32xf32>
    %77 = arith.mulf %73, %76 : vector<1x1x32xf32>
    %78 = arith.mulf %75, %75 : vector<1x1x32xf32>
    %79 = arith.subf %77, %78 : vector<1x1x32xf32>
    %cst_39 = arith.constant 0.000000e+00 : f32
    %80 = vector.broadcast %cst_39 : f32 to vector<1x1x32xf32>
    %81 = arith.maximumf %79, %80 : vector<1x1x32xf32>
    %cst_40 = arith.constant 9.99999974E-6 : f32
    %82 = vector.broadcast %cst_40 : f32 to vector<1x1x32xf32>
    %83 = arith.addf %81, %82 : vector<1x1x32xf32>
    %84 = math.rsqrt %83 : vector<1x1x32xf32>
    %85 = vector.broadcast %75 : vector<1x1x32xf32> to vector<1x64x32xf32>
    %86 = arith.subf %66, %85 : vector<1x64x32xf32>
    %87 = vector.broadcast %84 : vector<1x1x32xf32> to vector<1x64x32xf32>
    %88 = arith.mulf %86, %87 : vector<1x64x32xf32>
    %89 = vector.shape_cast %67 : vector<1x32xf32> to vector<1x1x32xf32>
    %90 = vector.broadcast %89 : vector<1x1x32xf32> to vector<1x64x32xf32>
    %91 = arith.mulf %88, %90 : vector<1x64x32xf32>
    %92 = vector.shape_cast %68 : vector<1x32xf32> to vector<1x1x32xf32>
    %93 = vector.broadcast %92 : vector<1x1x32xf32> to vector<1x64x32xf32>
    %94 = arith.addf %91, %93 : vector<1x64x32xf32>
    %cst_41 = arith.constant 0.000000e+00 : f32
    %95 = vector.broadcast %cst_41 : f32 to vector<1x64x32xf32>
    %96 = arith.maximumf %94, %95 : vector<1x64x32xf32>
    %97 = arith.truncf %96 : vector<1x64x32xf32> to vector<1x64x32xbf16>
    %c0_42 = arith.constant 0 : index
    %c0_43 = arith.constant 0 : index
    %c0_44 = arith.constant 0 : index
    %98 = vector.load %arg5[%c0_42, %c0_43, %c0_44] : memref<1x64x32xbf16, #tpu.memory_space<vmem>>, vector<1x64x32xbf16>
    tpu.vector_store %arg5[%c0_42, %c0_43, %c0_44], %97 {strides = array<i32>} : memref<1x64x32xbf16, #tpu.memory_space<vmem>>, vector<1x64x32xbf16>,
    return
  }
  func.func @transform_0(%arg0: i32) -> (i32, i32, i32, i32) {
    %c0_i32 = arith.constant 0 : i32
    %c0_i32_0 = arith.constant 0 : i32
    %c0_i32_1 = arith.constant 0 : i32
    %c0_i32_2 = arith.constant 0 : i32
    return %arg0, %c0_i32, %c0_i32_0, %c0_i32_1 : i32, i32, i32, i32
  }
  func.func @transform_1(%arg0: i32) -> (i32, i32, i32) {
    %c0_i32 = arith.constant 0 : i32
    %c0_i32_0 = arith.constant 0 : i32
    %c0_i32_1 = arith.constant 0 : i32
    %c0_i32_2 = arith.constant 0 : i32
    return %c0_i32, %c0_i32_0, %c0_i32_1 : i32, i32, i32
  }
  func.func @transform_2(%arg0: i32) -> (i32, i32) {
    %c0_i32 = arith.constant 0 : i32
    %c0_i32_0 = arith.constant 0 : i32
    %c0_i32_1 = arith.constant 0 : i32
    return %c0_i32, %c0_i32_0 : i32, i32
  }
  func.func @transform_3(%arg0: i32) -> (i32, i32) {
    %c0_i32 = arith.constant 0 : i32
    %c0_i32_0 = arith.constant 0 : i32
    %c0_i32_1 = arith.constant 0 : i32
    return %c0_i32, %c0_i32_0 : i32, i32
  }
  func.func @transform_4(%arg0: i32) -> (i32, i32, i32) {
    %c0_i32 = arith.constant 0 : i32
    %c0_i32_0 = arith.constant 0 : i32
    %c0_i32_1 = arith.constant 0 : i32
    return %arg0, %c0_i32, %c0_i32_0 : i32, i32, i32
  }
}

module attributes {stable_mosaic.version = 11 : i64} {
  func.func @_conv_in_scconv_relu_kernel(%arg0: i32, %arg1: memref<1x10x10x32xbf16, #tpu.memory_space<vmem>>, %arg2: memref<9x32x32xbf16, #tpu.memory_space<vmem>>, %arg3: memref<1x32xf32, #tpu.memory_space<vmem>>, %arg4: memref<1x32xf32, #tpu.memory_space<vmem>>, %arg5: memref<1x64x16xbf16, #tpu.memory_space<vmem>>, %arg6: memref<16x32xbf16, #tpu.memory_space<vmem>>, %arg7: memref<1x32xf32, #tpu.memory_space<vmem>>, %arg8: memref<1x32xf32, #tpu.memory_space<vmem>>, %arg9: memref<1x64x32xf32, #tpu.memory_space<vmem>>) attributes {dimension_semantics = [#tpu.dimension_semantics<parallel>], iteration_bounds = array<i64: 2>, scalar_prefetch = 0 : i64, scratch_operands = 0 : i64, tpu.core_type = #tpu.core_type<tc>, window_params = [{transform_indices = @transform_0, window_bounds = array<i64: 1, 10, 10, 32>}, {pipeline_mode = #tpu.pipeline_mode<synchronous>, transform_indices = @transform_1, window_bounds = array<i64: 9, 32, 32>}, {pipeline_mode = #tpu.pipeline_mode<synchronous>, transform_indices = @transform_2, window_bounds = array<i64: 1, 32>}, {pipeline_mode = #tpu.pipeline_mode<synchronous>, transform_indices = @transform_3, window_bounds = array<i64: 1, 32>}, {transform_indices = @transform_4, window_bounds = array<i64: 1, 64, 16>}, {pipeline_mode = #tpu.pipeline_mode<synchronous>, transform_indices = @transform_5, window_bounds = array<i64: 16, 32>}, {pipeline_mode = #tpu.pipeline_mode<synchronous>, transform_indices = @transform_6, window_bounds = array<i64: 1, 32>}, {pipeline_mode = #tpu.pipeline_mode<synchronous>, transform_indices = @transform_7, window_bounds = array<i64: 1, 32>}, {transform_indices = @transform_8, window_bounds = array<i64: 1, 64, 32>}]} {
    %c0 = arith.constant 0 : index
    %c0_0 = arith.constant 0 : index
    %c0_1 = arith.constant 0 : index
    %c0_2 = arith.constant 0 : index
    %0 = vector.load %arg1[%c0, %c0_0, %c0_1, %c0_2] : memref<1x10x10x32xbf16, #tpu.memory_space<vmem>>, vector<1x10x10x32xbf16>
    %1 = arith.extf %0 : vector<1x10x10x32xbf16> to vector<1x10x10x32xf32>
    %cst = arith.constant 0.000000e+00 : f32
    %2 = vector.broadcast %cst : f32 to vector<64x32xf32>
    %3 = vector.extract_strided_slice %1 {offsets = [0, 0, 0, 0], sizes = [1, 8, 8, 32], strides = [1, 1, 1, 1]} : vector<1x10x10x32xf32> to vector<1x8x8x32xf32>
    %4 = vector.shape_cast %3 : vector<1x8x8x32xf32> to vector<64x32xf32>
    %5 = arith.truncf %4 : vector<64x32xf32> to vector<64x32xbf16>
    %c0_3 = arith.constant 0 : index
    %c0_4 = arith.constant 0 : index
    %c0_5 = arith.constant 0 : index
    %6 = vector.load %arg2[%c0_3, %c0_4, %c0_5] : memref<9x32x32xbf16, #tpu.memory_space<vmem>>, vector<1x32x32xbf16>
    %7 = vector.shape_cast %6 : vector<1x32x32xbf16> to vector<32x32xbf16>
    %cst_6 = arith.constant dense<0.000000e+00> : vector<64x32xf32>
    %8 = tpu.matmul %5, %7, %cst_6 {dimension_numbers = #tpu.dot_dimension_numbers<[1], [0], [0], [1], [0, 0, 1, 1], [], []>} : vector<64x32xbf16>, vector<32x32xbf16>, vector<64x32xf32> -> vector<64x32xf32>
    %9 = arith.addf %2, %8 : vector<64x32xf32>
    %10 = vector.extract_strided_slice %1 {offsets = [0, 0, 1, 0], sizes = [1, 8, 8, 32], strides = [1, 1, 1, 1]} : vector<1x10x10x32xf32> to vector<1x8x8x32xf32>
    %11 = vector.shape_cast %10 : vector<1x8x8x32xf32> to vector<64x32xf32>
    %12 = arith.truncf %11 : vector<64x32xf32> to vector<64x32xbf16>
    %c1 = arith.constant 1 : index
    %c0_7 = arith.constant 0 : index
    %c0_8 = arith.constant 0 : index
    %13 = vector.load %arg2[%c1, %c0_7, %c0_8] : memref<9x32x32xbf16, #tpu.memory_space<vmem>>, vector<1x32x32xbf16>
    %14 = vector.shape_cast %13 : vector<1x32x32xbf16> to vector<32x32xbf16>
    %cst_9 = arith.constant dense<0.000000e+00> : vector<64x32xf32>
    %15 = tpu.matmul %12, %14, %cst_9 {dimension_numbers = #tpu.dot_dimension_numbers<[1], [0], [0], [1], [0, 0, 1, 1], [], []>} : vector<64x32xbf16>, vector<32x32xbf16>, vector<64x32xf32> -> vector<64x32xf32>
    %16 = arith.addf %9, %15 : vector<64x32xf32>
    %17 = vector.extract_strided_slice %1 {offsets = [0, 0, 2, 0], sizes = [1, 8, 8, 32], strides = [1, 1, 1, 1]} : vector<1x10x10x32xf32> to vector<1x8x8x32xf32>
    %18 = vector.shape_cast %17 : vector<1x8x8x32xf32> to vector<64x32xf32>
    %19 = arith.truncf %18 : vector<64x32xf32> to vector<64x32xbf16>
    %c2 = arith.constant 2 : index
    %c0_10 = arith.constant 0 : index
    %c0_11 = arith.constant 0 : index
    %20 = vector.load %arg2[%c2, %c0_10, %c0_11] : memref<9x32x32xbf16, #tpu.memory_space<vmem>>, vector<1x32x32xbf16>
    %21 = vector.shape_cast %20 : vector<1x32x32xbf16> to vector<32x32xbf16>
    %cst_12 = arith.constant dense<0.000000e+00> : vector<64x32xf32>
    %22 = tpu.matmul %19, %21, %cst_12 {dimension_numbers = #tpu.dot_dimension_numbers<[1], [0], [0], [1], [0, 0, 1, 1], [], []>} : vector<64x32xbf16>, vector<32x32xbf16>, vector<64x32xf32> -> vector<64x32xf32>
    %23 = arith.addf %16, %22 : vector<64x32xf32>
    %24 = vector.extract_strided_slice %1 {offsets = [0, 1, 0, 0], sizes = [1, 8, 8, 32], strides = [1, 1, 1, 1]} : vector<1x10x10x32xf32> to vector<1x8x8x32xf32>
    %25 = vector.shape_cast %24 : vector<1x8x8x32xf32> to vector<64x32xf32>
    %26 = arith.truncf %25 : vector<64x32xf32> to vector<64x32xbf16>
    %c3 = arith.constant 3 : index
    %c0_13 = arith.constant 0 : index
    %c0_14 = arith.constant 0 : index
    %27 = vector.load %arg2[%c3, %c0_13, %c0_14] : memref<9x32x32xbf16, #tpu.memory_space<vmem>>, vector<1x32x32xbf16>
    %28 = vector.shape_cast %27 : vector<1x32x32xbf16> to vector<32x32xbf16>
    %cst_15 = arith.constant dense<0.000000e+00> : vector<64x32xf32>
    %29 = tpu.matmul %26, %28, %cst_15 {dimension_numbers = #tpu.dot_dimension_numbers<[1], [0], [0], [1], [0, 0, 1, 1], [], []>} : vector<64x32xbf16>, vector<32x32xbf16>, vector<64x32xf32> -> vector<64x32xf32>
    %30 = arith.addf %23, %29 : vector<64x32xf32>
    %31 = vector.extract_strided_slice %1 {offsets = [0, 1, 1, 0], sizes = [1, 8, 8, 32], strides = [1, 1, 1, 1]} : vector<1x10x10x32xf32> to vector<1x8x8x32xf32>
    %32 = vector.shape_cast %31 : vector<1x8x8x32xf32> to vector<64x32xf32>
    %33 = arith.truncf %32 : vector<64x32xf32> to vector<64x32xbf16>
    %c4 = arith.constant 4 : index
    %c0_16 = arith.constant 0 : index
    %c0_17 = arith.constant 0 : index
    %34 = vector.load %arg2[%c4, %c0_16, %c0_17] : memref<9x32x32xbf16, #tpu.memory_space<vmem>>, vector<1x32x32xbf16>
    %35 = vector.shape_cast %34 : vector<1x32x32xbf16> to vector<32x32xbf16>
    %cst_18 = arith.constant dense<0.000000e+00> : vector<64x32xf32>
    %36 = tpu.matmul %33, %35, %cst_18 {dimension_numbers = #tpu.dot_dimension_numbers<[1], [0], [0], [1], [0, 0, 1, 1], [], []>} : vector<64x32xbf16>, vector<32x32xbf16>, vector<64x32xf32> -> vector<64x32xf32>
    %37 = arith.addf %30, %36 : vector<64x32xf32>
    %38 = vector.extract_strided_slice %1 {offsets = [0, 1, 2, 0], sizes = [1, 8, 8, 32], strides = [1, 1, 1, 1]} : vector<1x10x10x32xf32> to vector<1x8x8x32xf32>
    %39 = vector.shape_cast %38 : vector<1x8x8x32xf32> to vector<64x32xf32>
    %40 = arith.truncf %39 : vector<64x32xf32> to vector<64x32xbf16>
    %c5 = arith.constant 5 : index
    %c0_19 = arith.constant 0 : index
    %c0_20 = arith.constant 0 : index
    %41 = vector.load %arg2[%c5, %c0_19, %c0_20] : memref<9x32x32xbf16, #tpu.memory_space<vmem>>, vector<1x32x32xbf16>
    %42 = vector.shape_cast %41 : vector<1x32x32xbf16> to vector<32x32xbf16>
    %cst_21 = arith.constant dense<0.000000e+00> : vector<64x32xf32>
    %43 = tpu.matmul %40, %42, %cst_21 {dimension_numbers = #tpu.dot_dimension_numbers<[1], [0], [0], [1], [0, 0, 1, 1], [], []>} : vector<64x32xbf16>, vector<32x32xbf16>, vector<64x32xf32> -> vector<64x32xf32>
    %44 = arith.addf %37, %43 : vector<64x32xf32>
    %45 = vector.extract_strided_slice %1 {offsets = [0, 2, 0, 0], sizes = [1, 8, 8, 32], strides = [1, 1, 1, 1]} : vector<1x10x10x32xf32> to vector<1x8x8x32xf32>
    %46 = vector.shape_cast %45 : vector<1x8x8x32xf32> to vector<64x32xf32>
    %47 = arith.truncf %46 : vector<64x32xf32> to vector<64x32xbf16>
    %c6 = arith.constant 6 : index
    %c0_22 = arith.constant 0 : index
    %c0_23 = arith.constant 0 : index
    %48 = vector.load %arg2[%c6, %c0_22, %c0_23] : memref<9x32x32xbf16, #tpu.memory_space<vmem>>, vector<1x32x32xbf16>
    %49 = vector.shape_cast %48 : vector<1x32x32xbf16> to vector<32x32xbf16>
    %cst_24 = arith.constant dense<0.000000e+00> : vector<64x32xf32>
    %50 = tpu.matmul %47, %49, %cst_24 {dimension_numbers = #tpu.dot_dimension_numbers<[1], [0], [0], [1], [0, 0, 1, 1], [], []>} : vector<64x32xbf16>, vector<32x32xbf16>, vector<64x32xf32> -> vector<64x32xf32>
    %51 = arith.addf %44, %50 : vector<64x32xf32>
    %52 = vector.extract_strided_slice %1 {offsets = [0, 2, 1, 0], sizes = [1, 8, 8, 32], strides = [1, 1, 1, 1]} : vector<1x10x10x32xf32> to vector<1x8x8x32xf32>
    %53 = vector.shape_cast %52 : vector<1x8x8x32xf32> to vector<64x32xf32>
    %54 = arith.truncf %53 : vector<64x32xf32> to vector<64x32xbf16>
    %c7 = arith.constant 7 : index
    %c0_25 = arith.constant 0 : index
    %c0_26 = arith.constant 0 : index
    %55 = vector.load %arg2[%c7, %c0_25, %c0_26] : memref<9x32x32xbf16, #tpu.memory_space<vmem>>, vector<1x32x32xbf16>
    %56 = vector.shape_cast %55 : vector<1x32x32xbf16> to vector<32x32xbf16>
    %cst_27 = arith.constant dense<0.000000e+00> : vector<64x32xf32>
    %57 = tpu.matmul %54, %56, %cst_27 {dimension_numbers = #tpu.dot_dimension_numbers<[1], [0], [0], [1], [0, 0, 1, 1], [], []>} : vector<64x32xbf16>, vector<32x32xbf16>, vector<64x32xf32> -> vector<64x32xf32>
    %58 = arith.addf %51, %57 : vector<64x32xf32>
    %59 = vector.extract_strided_slice %1 {offsets = [0, 2, 2, 0], sizes = [1, 8, 8, 32], strides = [1, 1, 1, 1]} : vector<1x10x10x32xf32> to vector<1x8x8x32xf32>
    %60 = vector.shape_cast %59 : vector<1x8x8x32xf32> to vector<64x32xf32>
    %61 = arith.truncf %60 : vector<64x32xf32> to vector<64x32xbf16>
    %c8 = arith.constant 8 : index
    %c0_28 = arith.constant 0 : index
    %c0_29 = arith.constant 0 : index
    %62 = vector.load %arg2[%c8, %c0_28, %c0_29] : memref<9x32x32xbf16, #tpu.memory_space<vmem>>, vector<1x32x32xbf16>
    %63 = vector.shape_cast %62 : vector<1x32x32xbf16> to vector<32x32xbf16>
    %cst_30 = arith.constant dense<0.000000e+00> : vector<64x32xf32>
    %64 = tpu.matmul %61, %63, %cst_30 {dimension_numbers = #tpu.dot_dimension_numbers<[1], [0], [0], [1], [0, 0, 1, 1], [], []>} : vector<64x32xbf16>, vector<32x32xbf16>, vector<64x32xf32> -> vector<64x32xf32>
    %65 = arith.addf %58, %64 : vector<64x32xf32>
    %66 = vector.shape_cast %65 : vector<64x32xf32> to vector<1x64x32xf32>
    %c0_31 = arith.constant 0 : index
    %c0_32 = arith.constant 0 : index
    %67 = vector.load %arg3[%c0_31, %c0_32] : memref<1x32xf32, #tpu.memory_space<vmem>>, vector<1x32xf32>
    %c0_33 = arith.constant 0 : index
    %c0_34 = arith.constant 0 : index
    %68 = vector.load %arg4[%c0_33, %c0_34] : memref<1x32xf32, #tpu.memory_space<vmem>>, vector<1x32xf32>
    %cst_35 = arith.constant dense<0.000000e+00> : vector<1x32xf32>
    %69 = vector.multi_reduction <add>, %66, %cst_35 [1] : vector<1x64x32xf32> to vector<1x32xf32>
    %70 = vector.shape_cast %69 : vector<1x32xf32> to vector<1x1x32xf32>
    %71 = arith.mulf %66, %66 : vector<1x64x32xf32>
    %cst_36 = arith.constant dense<0.000000e+00> : vector<1x32xf32>
    %72 = vector.multi_reduction <add>, %71, %cst_36 [1] : vector<1x64x32xf32> to vector<1x32xf32>
    %73 = vector.shape_cast %72 : vector<1x32xf32> to vector<1x1x32xf32>
    %cst_37 = arith.constant 1.562500e-02 : f32
    %74 = vector.broadcast %cst_37 : f32 to vector<1x1x32xf32>
    %75 = arith.mulf %70, %74 : vector<1x1x32xf32>
    %cst_38 = arith.constant 1.562500e-02 : f32
    %76 = vector.broadcast %cst_38 : f32 to vector<1x1x32xf32>
    %77 = arith.mulf %73, %76 : vector<1x1x32xf32>
    %78 = arith.mulf %75, %75 : vector<1x1x32xf32>
    %79 = arith.subf %77, %78 : vector<1x1x32xf32>
    %cst_39 = arith.constant 0.000000e+00 : f32
    %80 = vector.broadcast %cst_39 : f32 to vector<1x1x32xf32>
    %81 = arith.maximumf %79, %80 : vector<1x1x32xf32>
    %cst_40 = arith.constant 9.99999974E-6 : f32
    %82 = vector.broadcast %cst_40 : f32 to vector<1x1x32xf32>
    %83 = arith.addf %81, %82 : vector<1x1x32xf32>
    %84 = math.rsqrt %83 : vector<1x1x32xf32>
    %85 = vector.broadcast %75 : vector<1x1x32xf32> to vector<1x64x32xf32>
    %86 = arith.subf %66, %85 : vector<1x64x32xf32>
    %87 = vector.broadcast %84 : vector<1x1x32xf32> to vector<1x64x32xf32>
    %88 = arith.mulf %86, %87 : vector<1x64x32xf32>
    %89 = vector.shape_cast %67 : vector<1x32xf32> to vector<1x1x32xf32>
    %90 = vector.broadcast %89 : vector<1x1x32xf32> to vector<1x64x32xf32>
    %91 = arith.mulf %88, %90 : vector<1x64x32xf32>
    %92 = vector.shape_cast %68 : vector<1x32xf32> to vector<1x1x32xf32>
    %93 = vector.broadcast %92 : vector<1x1x32xf32> to vector<1x64x32xf32>
    %94 = arith.addf %91, %93 : vector<1x64x32xf32>
    %c0_41 = arith.constant 0 : index
    %c0_42 = arith.constant 0 : index
    %c0_43 = arith.constant 0 : index
    %95 = vector.load %arg5[%c0_41, %c0_42, %c0_43] : memref<1x64x16xbf16, #tpu.memory_space<vmem>>, vector<1x64x16xbf16>
    %96 = vector.shape_cast %95 : vector<1x64x16xbf16> to vector<64x16xbf16>
    %c0_44 = arith.constant 0 : index
    %c0_45 = arith.constant 0 : index
    %97 = vector.load %arg6[%c0_44, %c0_45] : memref<16x32xbf16, #tpu.memory_space<vmem>>, vector<16x32xbf16>
    %cst_46 = arith.constant dense<0.000000e+00> : vector<64x32xf32>
    %98 = tpu.matmul %96, %97, %cst_46 {dimension_numbers = #tpu.dot_dimension_numbers<[1], [0], [0], [1], [0, 0, 1, 1], [], []>} : vector<64x16xbf16>, vector<16x32xbf16>, vector<64x32xf32> -> vector<64x32xf32>
    %99 = vector.shape_cast %98 : vector<64x32xf32> to vector<1x64x32xf32>
    %c0_47 = arith.constant 0 : index
    %c0_48 = arith.constant 0 : index
    %100 = vector.load %arg7[%c0_47, %c0_48] : memref<1x32xf32, #tpu.memory_space<vmem>>, vector<1x32xf32>
    %c0_49 = arith.constant 0 : index
    %c0_50 = arith.constant 0 : index
    %101 = vector.load %arg8[%c0_49, %c0_50] : memref<1x32xf32, #tpu.memory_space<vmem>>, vector<1x32xf32>
    %cst_51 = arith.constant dense<0.000000e+00> : vector<1x32xf32>
    %102 = vector.multi_reduction <add>, %99, %cst_51 [1] : vector<1x64x32xf32> to vector<1x32xf32>
    %103 = vector.shape_cast %102 : vector<1x32xf32> to vector<1x1x32xf32>
    %104 = arith.mulf %99, %99 : vector<1x64x32xf32>
    %cst_52 = arith.constant dense<0.000000e+00> : vector<1x32xf32>
    %105 = vector.multi_reduction <add>, %104, %cst_52 [1] : vector<1x64x32xf32> to vector<1x32xf32>
    %106 = vector.shape_cast %105 : vector<1x32xf32> to vector<1x1x32xf32>
    %cst_53 = arith.constant 1.562500e-02 : f32
    %107 = vector.broadcast %cst_53 : f32 to vector<1x1x32xf32>
    %108 = arith.mulf %103, %107 : vector<1x1x32xf32>
    %cst_54 = arith.constant 1.562500e-02 : f32
    %109 = vector.broadcast %cst_54 : f32 to vector<1x1x32xf32>
    %110 = arith.mulf %106, %109 : vector<1x1x32xf32>
    %111 = arith.mulf %108, %108 : vector<1x1x32xf32>
    %112 = arith.subf %110, %111 : vector<1x1x32xf32>
    %cst_55 = arith.constant 0.000000e+00 : f32
    %113 = vector.broadcast %cst_55 : f32 to vector<1x1x32xf32>
    %114 = arith.maximumf %112, %113 : vector<1x1x32xf32>
    %cst_56 = arith.constant 9.99999974E-6 : f32
    %115 = vector.broadcast %cst_56 : f32 to vector<1x1x32xf32>
    %116 = arith.addf %114, %115 : vector<1x1x32xf32>
    %117 = math.rsqrt %116 : vector<1x1x32xf32>
    %118 = vector.broadcast %108 : vector<1x1x32xf32> to vector<1x64x32xf32>
    %119 = arith.subf %99, %118 : vector<1x64x32xf32>
    %120 = vector.broadcast %117 : vector<1x1x32xf32> to vector<1x64x32xf32>
    %121 = arith.mulf %119, %120 : vector<1x64x32xf32>
    %122 = vector.shape_cast %100 : vector<1x32xf32> to vector<1x1x32xf32>
    %123 = vector.broadcast %122 : vector<1x1x32xf32> to vector<1x64x32xf32>
    %124 = arith.mulf %121, %123 : vector<1x64x32xf32>
    %125 = vector.shape_cast %101 : vector<1x32xf32> to vector<1x1x32xf32>
    %126 = vector.broadcast %125 : vector<1x1x32xf32> to vector<1x64x32xf32>
    %127 = arith.addf %124, %126 : vector<1x64x32xf32>
    %128 = arith.addf %94, %127 : vector<1x64x32xf32>
    %cst_57 = arith.constant 0.000000e+00 : f32
    %129 = vector.broadcast %cst_57 : f32 to vector<1x64x32xf32>
    %130 = arith.maximumf %128, %129 : vector<1x64x32xf32>
    %c0_58 = arith.constant 0 : index
    %c0_59 = arith.constant 0 : index
    %c0_60 = arith.constant 0 : index
    %131 = vector.load %arg9[%c0_58, %c0_59, %c0_60] : memref<1x64x32xf32, #tpu.memory_space<vmem>>, vector<1x64x32xf32>
    tpu.vector_store %arg9[%c0_58, %c0_59, %c0_60], %130 {strides = array<i32>} : memref<1x64x32xf32, #tpu.memory_space<vmem>>, vector<1x64x32xf32>,
    return
  }
  func.func @transform_0(%arg0: i32) -> (i32, i32, i32, i32) {
    %c0_i32 = arith.constant 0 : i32
    %c0_i32_0 = arith.constant 0 : i32
    %c0_i32_1 = arith.constant 0 : i32
    %c0_i32_2 = arith.constant 0 : i32
    return %arg0, %c0_i32, %c0_i32_0, %c0_i32_1 : i32, i32, i32, i32
  }
  func.func @transform_1(%arg0: i32) -> (i32, i32, i32) {
    %c0_i32 = arith.constant 0 : i32
    %c0_i32_0 = arith.constant 0 : i32
    %c0_i32_1 = arith.constant 0 : i32
    %c0_i32_2 = arith.constant 0 : i32
    return %c0_i32, %c0_i32_0, %c0_i32_1 : i32, i32, i32
  }
  func.func @transform_2(%arg0: i32) -> (i32, i32) {
    %c0_i32 = arith.constant 0 : i32
    %c0_i32_0 = arith.constant 0 : i32
    %c0_i32_1 = arith.constant 0 : i32
    return %c0_i32, %c0_i32_0 : i32, i32
  }
  func.func @transform_3(%arg0: i32) -> (i32, i32) {
    %c0_i32 = arith.constant 0 : i32
    %c0_i32_0 = arith.constant 0 : i32
    %c0_i32_1 = arith.constant 0 : i32
    return %c0_i32, %c0_i32_0 : i32, i32
  }
  func.func @transform_4(%arg0: i32) -> (i32, i32, i32) {
    %c0_i32 = arith.constant 0 : i32
    %c0_i32_0 = arith.constant 0 : i32
    %c0_i32_1 = arith.constant 0 : i32
    return %arg0, %c0_i32, %c0_i32_0 : i32, i32, i32
  }
  func.func @transform_5(%arg0: i32) -> (i32, i32) {
    %c0_i32 = arith.constant 0 : i32
    %c0_i32_0 = arith.constant 0 : i32
    %c0_i32_1 = arith.constant 0 : i32
    return %c0_i32, %c0_i32_0 : i32, i32
  }
  func.func @transform_6(%arg0: i32) -> (i32, i32) {
    %c0_i32 = arith.constant 0 : i32
    %c0_i32_0 = arith.constant 0 : i32
    %c0_i32_1 = arith.constant 0 : i32
    return %c0_i32, %c0_i32_0 : i32, i32
  }
  func.func @transform_7(%arg0: i32) -> (i32, i32) {
    %c0_i32 = arith.constant 0 : i32
    %c0_i32_0 = arith.constant 0 : i32
    %c0_i32_1 = arith.constant 0 : i32
    return %c0_i32, %c0_i32_0 : i32, i32
  }
  func.func @transform_8(%arg0: i32) -> (i32, i32, i32) {
    %c0_i32 = arith.constant 0 : i32
    %c0_i32_0 = arith.constant 0 : i32
    %c0_i32_1 = arith.constant 0 : i32
    return %arg0, %c0_i32, %c0_i32_0 : i32, i32, i32
  }
}

module attributes {stable_mosaic.version = 11 : i64} {
  func.func @_conv_in_kernel(%arg0: i32, %arg1: memref<1x10x10x32xbf16, #tpu.memory_space<vmem>>, %arg2: memref<9x32x32xbf16, #tpu.memory_space<vmem>>, %arg3: memref<1x32xf32, #tpu.memory_space<vmem>>, %arg4: memref<1x32xf32, #tpu.memory_space<vmem>>, %arg5: memref<1x64x32xbf16, #tpu.memory_space<vmem>>) attributes {dimension_semantics = [#tpu.dimension_semantics<parallel>], iteration_bounds = array<i64: 2>, scalar_prefetch = 0 : i64, scratch_operands = 0 : i64, tpu.core_type = #tpu.core_type<tc>, window_params = [{transform_indices = @transform_0, window_bounds = array<i64: 1, 10, 10, 32>}, {pipeline_mode = #tpu.pipeline_mode<synchronous>, transform_indices = @transform_1, window_bounds = array<i64: 9, 32, 32>}, {pipeline_mode = #tpu.pipeline_mode<synchronous>, transform_indices = @transform_2, window_bounds = array<i64: 1, 32>}, {pipeline_mode = #tpu.pipeline_mode<synchronous>, transform_indices = @transform_3, window_bounds = array<i64: 1, 32>}, {transform_indices = @transform_4, window_bounds = array<i64: 1, 64, 32>}]} {
    %c0 = arith.constant 0 : index
    %c0_0 = arith.constant 0 : index
    %c0_1 = arith.constant 0 : index
    %c0_2 = arith.constant 0 : index
    %0 = vector.load %arg1[%c0, %c0_0, %c0_1, %c0_2] : memref<1x10x10x32xbf16, #tpu.memory_space<vmem>>, vector<1x10x10x32xbf16>
    %1 = arith.extf %0 : vector<1x10x10x32xbf16> to vector<1x10x10x32xf32>
    %cst = arith.constant 0.000000e+00 : f32
    %2 = vector.broadcast %cst : f32 to vector<64x32xf32>
    %3 = vector.extract_strided_slice %1 {offsets = [0, 0, 0, 0], sizes = [1, 8, 8, 32], strides = [1, 1, 1, 1]} : vector<1x10x10x32xf32> to vector<1x8x8x32xf32>
    %4 = vector.shape_cast %3 : vector<1x8x8x32xf32> to vector<64x32xf32>
    %5 = arith.truncf %4 : vector<64x32xf32> to vector<64x32xbf16>
    %c0_3 = arith.constant 0 : index
    %c0_4 = arith.constant 0 : index
    %c0_5 = arith.constant 0 : index
    %6 = vector.load %arg2[%c0_3, %c0_4, %c0_5] : memref<9x32x32xbf16, #tpu.memory_space<vmem>>, vector<1x32x32xbf16>
    %7 = vector.shape_cast %6 : vector<1x32x32xbf16> to vector<32x32xbf16>
    %cst_6 = arith.constant dense<0.000000e+00> : vector<64x32xf32>
    %8 = tpu.matmul %5, %7, %cst_6 {dimension_numbers = #tpu.dot_dimension_numbers<[1], [0], [0], [1], [0, 0, 1, 1], [], []>} : vector<64x32xbf16>, vector<32x32xbf16>, vector<64x32xf32> -> vector<64x32xf32>
    %9 = arith.addf %2, %8 : vector<64x32xf32>
    %10 = vector.extract_strided_slice %1 {offsets = [0, 0, 1, 0], sizes = [1, 8, 8, 32], strides = [1, 1, 1, 1]} : vector<1x10x10x32xf32> to vector<1x8x8x32xf32>
    %11 = vector.shape_cast %10 : vector<1x8x8x32xf32> to vector<64x32xf32>
    %12 = arith.truncf %11 : vector<64x32xf32> to vector<64x32xbf16>
    %c1 = arith.constant 1 : index
    %c0_7 = arith.constant 0 : index
    %c0_8 = arith.constant 0 : index
    %13 = vector.load %arg2[%c1, %c0_7, %c0_8] : memref<9x32x32xbf16, #tpu.memory_space<vmem>>, vector<1x32x32xbf16>
    %14 = vector.shape_cast %13 : vector<1x32x32xbf16> to vector<32x32xbf16>
    %cst_9 = arith.constant dense<0.000000e+00> : vector<64x32xf32>
    %15 = tpu.matmul %12, %14, %cst_9 {dimension_numbers = #tpu.dot_dimension_numbers<[1], [0], [0], [1], [0, 0, 1, 1], [], []>} : vector<64x32xbf16>, vector<32x32xbf16>, vector<64x32xf32> -> vector<64x32xf32>
    %16 = arith.addf %9, %15 : vector<64x32xf32>
    %17 = vector.extract_strided_slice %1 {offsets = [0, 0, 2, 0], sizes = [1, 8, 8, 32], strides = [1, 1, 1, 1]} : vector<1x10x10x32xf32> to vector<1x8x8x32xf32>
    %18 = vector.shape_cast %17 : vector<1x8x8x32xf32> to vector<64x32xf32>
    %19 = arith.truncf %18 : vector<64x32xf32> to vector<64x32xbf16>
    %c2 = arith.constant 2 : index
    %c0_10 = arith.constant 0 : index
    %c0_11 = arith.constant 0 : index
    %20 = vector.load %arg2[%c2, %c0_10, %c0_11] : memref<9x32x32xbf16, #tpu.memory_space<vmem>>, vector<1x32x32xbf16>
    %21 = vector.shape_cast %20 : vector<1x32x32xbf16> to vector<32x32xbf16>
    %cst_12 = arith.constant dense<0.000000e+00> : vector<64x32xf32>
    %22 = tpu.matmul %19, %21, %cst_12 {dimension_numbers = #tpu.dot_dimension_numbers<[1], [0], [0], [1], [0, 0, 1, 1], [], []>} : vector<64x32xbf16>, vector<32x32xbf16>, vector<64x32xf32> -> vector<64x32xf32>
    %23 = arith.addf %16, %22 : vector<64x32xf32>
    %24 = vector.extract_strided_slice %1 {offsets = [0, 1, 0, 0], sizes = [1, 8, 8, 32], strides = [1, 1, 1, 1]} : vector<1x10x10x32xf32> to vector<1x8x8x32xf32>
    %25 = vector.shape_cast %24 : vector<1x8x8x32xf32> to vector<64x32xf32>
    %26 = arith.truncf %25 : vector<64x32xf32> to vector<64x32xbf16>
    %c3 = arith.constant 3 : index
    %c0_13 = arith.constant 0 : index
    %c0_14 = arith.constant 0 : index
    %27 = vector.load %arg2[%c3, %c0_13, %c0_14] : memref<9x32x32xbf16, #tpu.memory_space<vmem>>, vector<1x32x32xbf16>
    %28 = vector.shape_cast %27 : vector<1x32x32xbf16> to vector<32x32xbf16>
    %cst_15 = arith.constant dense<0.000000e+00> : vector<64x32xf32>
    %29 = tpu.matmul %26, %28, %cst_15 {dimension_numbers = #tpu.dot_dimension_numbers<[1], [0], [0], [1], [0, 0, 1, 1], [], []>} : vector<64x32xbf16>, vector<32x32xbf16>, vector<64x32xf32> -> vector<64x32xf32>
    %30 = arith.addf %23, %29 : vector<64x32xf32>
    %31 = vector.extract_strided_slice %1 {offsets = [0, 1, 1, 0], sizes = [1, 8, 8, 32], strides = [1, 1, 1, 1]} : vector<1x10x10x32xf32> to vector<1x8x8x32xf32>
    %32 = vector.shape_cast %31 : vector<1x8x8x32xf32> to vector<64x32xf32>
    %33 = arith.truncf %32 : vector<64x32xf32> to vector<64x32xbf16>
    %c4 = arith.constant 4 : index
    %c0_16 = arith.constant 0 : index
    %c0_17 = arith.constant 0 : index
    %34 = vector.load %arg2[%c4, %c0_16, %c0_17] : memref<9x32x32xbf16, #tpu.memory_space<vmem>>, vector<1x32x32xbf16>
    %35 = vector.shape_cast %34 : vector<1x32x32xbf16> to vector<32x32xbf16>
    %cst_18 = arith.constant dense<0.000000e+00> : vector<64x32xf32>
    %36 = tpu.matmul %33, %35, %cst_18 {dimension_numbers = #tpu.dot_dimension_numbers<[1], [0], [0], [1], [0, 0, 1, 1], [], []>} : vector<64x32xbf16>, vector<32x32xbf16>, vector<64x32xf32> -> vector<64x32xf32>
    %37 = arith.addf %30, %36 : vector<64x32xf32>
    %38 = vector.extract_strided_slice %1 {offsets = [0, 1, 2, 0], sizes = [1, 8, 8, 32], strides = [1, 1, 1, 1]} : vector<1x10x10x32xf32> to vector<1x8x8x32xf32>
    %39 = vector.shape_cast %38 : vector<1x8x8x32xf32> to vector<64x32xf32>
    %40 = arith.truncf %39 : vector<64x32xf32> to vector<64x32xbf16>
    %c5 = arith.constant 5 : index
    %c0_19 = arith.constant 0 : index
    %c0_20 = arith.constant 0 : index
    %41 = vector.load %arg2[%c5, %c0_19, %c0_20] : memref<9x32x32xbf16, #tpu.memory_space<vmem>>, vector<1x32x32xbf16>
    %42 = vector.shape_cast %41 : vector<1x32x32xbf16> to vector<32x32xbf16>
    %cst_21 = arith.constant dense<0.000000e+00> : vector<64x32xf32>
    %43 = tpu.matmul %40, %42, %cst_21 {dimension_numbers = #tpu.dot_dimension_numbers<[1], [0], [0], [1], [0, 0, 1, 1], [], []>} : vector<64x32xbf16>, vector<32x32xbf16>, vector<64x32xf32> -> vector<64x32xf32>
    %44 = arith.addf %37, %43 : vector<64x32xf32>
    %45 = vector.extract_strided_slice %1 {offsets = [0, 2, 0, 0], sizes = [1, 8, 8, 32], strides = [1, 1, 1, 1]} : vector<1x10x10x32xf32> to vector<1x8x8x32xf32>
    %46 = vector.shape_cast %45 : vector<1x8x8x32xf32> to vector<64x32xf32>
    %47 = arith.truncf %46 : vector<64x32xf32> to vector<64x32xbf16>
    %c6 = arith.constant 6 : index
    %c0_22 = arith.constant 0 : index
    %c0_23 = arith.constant 0 : index
    %48 = vector.load %arg2[%c6, %c0_22, %c0_23] : memref<9x32x32xbf16, #tpu.memory_space<vmem>>, vector<1x32x32xbf16>
    %49 = vector.shape_cast %48 : vector<1x32x32xbf16> to vector<32x32xbf16>
    %cst_24 = arith.constant dense<0.000000e+00> : vector<64x32xf32>
    %50 = tpu.matmul %47, %49, %cst_24 {dimension_numbers = #tpu.dot_dimension_numbers<[1], [0], [0], [1], [0, 0, 1, 1], [], []>} : vector<64x32xbf16>, vector<32x32xbf16>, vector<64x32xf32> -> vector<64x32xf32>
    %51 = arith.addf %44, %50 : vector<64x32xf32>
    %52 = vector.extract_strided_slice %1 {offsets = [0, 2, 1, 0], sizes = [1, 8, 8, 32], strides = [1, 1, 1, 1]} : vector<1x10x10x32xf32> to vector<1x8x8x32xf32>
    %53 = vector.shape_cast %52 : vector<1x8x8x32xf32> to vector<64x32xf32>
    %54 = arith.truncf %53 : vector<64x32xf32> to vector<64x32xbf16>
    %c7 = arith.constant 7 : index
    %c0_25 = arith.constant 0 : index
    %c0_26 = arith.constant 0 : index
    %55 = vector.load %arg2[%c7, %c0_25, %c0_26] : memref<9x32x32xbf16, #tpu.memory_space<vmem>>, vector<1x32x32xbf16>
    %56 = vector.shape_cast %55 : vector<1x32x32xbf16> to vector<32x32xbf16>
    %cst_27 = arith.constant dense<0.000000e+00> : vector<64x32xf32>
    %57 = tpu.matmul %54, %56, %cst_27 {dimension_numbers = #tpu.dot_dimension_numbers<[1], [0], [0], [1], [0, 0, 1, 1], [], []>} : vector<64x32xbf16>, vector<32x32xbf16>, vector<64x32xf32> -> vector<64x32xf32>
    %58 = arith.addf %51, %57 : vector<64x32xf32>
    %59 = vector.extract_strided_slice %1 {offsets = [0, 2, 2, 0], sizes = [1, 8, 8, 32], strides = [1, 1, 1, 1]} : vector<1x10x10x32xf32> to vector<1x8x8x32xf32>
    %60 = vector.shape_cast %59 : vector<1x8x8x32xf32> to vector<64x32xf32>
    %61 = arith.truncf %60 : vector<64x32xf32> to vector<64x32xbf16>
    %c8 = arith.constant 8 : index
    %c0_28 = arith.constant 0 : index
    %c0_29 = arith.constant 0 : index
    %62 = vector.load %arg2[%c8, %c0_28, %c0_29] : memref<9x32x32xbf16, #tpu.memory_space<vmem>>, vector<1x32x32xbf16>
    %63 = vector.shape_cast %62 : vector<1x32x32xbf16> to vector<32x32xbf16>
    %cst_30 = arith.constant dense<0.000000e+00> : vector<64x32xf32>
    %64 = tpu.matmul %61, %63, %cst_30 {dimension_numbers = #tpu.dot_dimension_numbers<[1], [0], [0], [1], [0, 0, 1, 1], [], []>} : vector<64x32xbf16>, vector<32x32xbf16>, vector<64x32xf32> -> vector<64x32xf32>
    %65 = arith.addf %58, %64 : vector<64x32xf32>
    %66 = vector.shape_cast %65 : vector<64x32xf32> to vector<1x64x32xf32>
    %c0_31 = arith.constant 0 : index
    %c0_32 = arith.constant 0 : index
    %67 = vector.load %arg3[%c0_31, %c0_32] : memref<1x32xf32, #tpu.memory_space<vmem>>, vector<1x32xf32>
    %c0_33 = arith.constant 0 : index
    %c0_34 = arith.constant 0 : index
    %68 = vector.load %arg4[%c0_33, %c0_34] : memref<1x32xf32, #tpu.memory_space<vmem>>, vector<1x32xf32>
    %cst_35 = arith.constant dense<0.000000e+00> : vector<1x32xf32>
    %69 = vector.multi_reduction <add>, %66, %cst_35 [1] : vector<1x64x32xf32> to vector<1x32xf32>
    %70 = vector.shape_cast %69 : vector<1x32xf32> to vector<1x1x32xf32>
    %71 = arith.mulf %66, %66 : vector<1x64x32xf32>
    %cst_36 = arith.constant dense<0.000000e+00> : vector<1x32xf32>
    %72 = vector.multi_reduction <add>, %71, %cst_36 [1] : vector<1x64x32xf32> to vector<1x32xf32>
    %73 = vector.shape_cast %72 : vector<1x32xf32> to vector<1x1x32xf32>
    %cst_37 = arith.constant 1.562500e-02 : f32
    %74 = vector.broadcast %cst_37 : f32 to vector<1x1x32xf32>
    %75 = arith.mulf %70, %74 : vector<1x1x32xf32>
    %cst_38 = arith.constant 1.562500e-02 : f32
    %76 = vector.broadcast %cst_38 : f32 to vector<1x1x32xf32>
    %77 = arith.mulf %73, %76 : vector<1x1x32xf32>
    %78 = arith.mulf %75, %75 : vector<1x1x32xf32>
    %79 = arith.subf %77, %78 : vector<1x1x32xf32>
    %cst_39 = arith.constant 0.000000e+00 : f32
    %80 = vector.broadcast %cst_39 : f32 to vector<1x1x32xf32>
    %81 = arith.maximumf %79, %80 : vector<1x1x32xf32>
    %cst_40 = arith.constant 9.99999974E-6 : f32
    %82 = vector.broadcast %cst_40 : f32 to vector<1x1x32xf32>
    %83 = arith.addf %81, %82 : vector<1x1x32xf32>
    %84 = math.rsqrt %83 : vector<1x1x32xf32>
    %85 = vector.broadcast %75 : vector<1x1x32xf32> to vector<1x64x32xf32>
    %86 = arith.subf %66, %85 : vector<1x64x32xf32>
    %87 = vector.broadcast %84 : vector<1x1x32xf32> to vector<1x64x32xf32>
    %88 = arith.mulf %86, %87 : vector<1x64x32xf32>
    %89 = vector.shape_cast %67 : vector<1x32xf32> to vector<1x1x32xf32>
    %90 = vector.broadcast %89 : vector<1x1x32xf32> to vector<1x64x32xf32>
    %91 = arith.mulf %88, %90 : vector<1x64x32xf32>
    %92 = vector.shape_cast %68 : vector<1x32xf32> to vector<1x1x32xf32>
    %93 = vector.broadcast %92 : vector<1x1x32xf32> to vector<1x64x32xf32>
    %94 = arith.addf %91, %93 : vector<1x64x32xf32>
    %cst_41 = arith.constant 0.000000e+00 : f32
    %95 = vector.broadcast %cst_41 : f32 to vector<1x64x32xf32>
    %96 = arith.maximumf %94, %95 : vector<1x64x32xf32>
    %97 = arith.truncf %96 : vector<1x64x32xf32> to vector<1x64x32xbf16>
    %c0_42 = arith.constant 0 : index
    %c0_43 = arith.constant 0 : index
    %c0_44 = arith.constant 0 : index
    %98 = vector.load %arg5[%c0_42, %c0_43, %c0_44] : memref<1x64x32xbf16, #tpu.memory_space<vmem>>, vector<1x64x32xbf16>
    tpu.vector_store %arg5[%c0_42, %c0_43, %c0_44], %97 {strides = array<i32>} : memref<1x64x32xbf16, #tpu.memory_space<vmem>>, vector<1x64x32xbf16>,
    return
  }
  func.func @transform_0(%arg0: i32) -> (i32, i32, i32, i32) {
    %c0_i32 = arith.constant 0 : i32
    %c0_i32_0 = arith.constant 0 : i32
    %c0_i32_1 = arith.constant 0 : i32
    %c0_i32_2 = arith.constant 0 : i32
    return %arg0, %c0_i32, %c0_i32_0, %c0_i32_1 : i32, i32, i32, i32
  }
  func.func @transform_1(%arg0: i32) -> (i32, i32, i32) {
    %c0_i32 = arith.constant 0 : i32
    %c0_i32_0 = arith.constant 0 : i32
    %c0_i32_1 = arith.constant 0 : i32
    %c0_i32_2 = arith.constant 0 : i32
    return %c0_i32, %c0_i32_0, %c0_i32_1 : i32, i32, i32
  }
  func.func @transform_2(%arg0: i32) -> (i32, i32) {
    %c0_i32 = arith.constant 0 : i32
    %c0_i32_0 = arith.constant 0 : i32
    %c0_i32_1 = arith.constant 0 : i32
    return %c0_i32, %c0_i32_0 : i32, i32
  }
  func.func @transform_3(%arg0: i32) -> (i32, i32) {
    %c0_i32 = arith.constant 0 : i32
    %c0_i32_0 = arith.constant 0 : i32
    %c0_i32_1 = arith.constant 0 : i32
    return %c0_i32, %c0_i32_0 : i32, i32
  }
  func.func @transform_4(%arg0: i32) -> (i32, i32, i32) {
    %c0_i32 = arith.constant 0 : i32
    %c0_i32_0 = arith.constant 0 : i32
    %c0_i32_1 = arith.constant 0 : i32
    return %arg0, %c0_i32, %c0_i32_0 : i32, i32, i32
  }
}

module attributes {stable_mosaic.version = 11 : i64} {
  func.func @_conv_in_add_relu_kernel(%arg0: i32, %arg1: memref<1x10x10x32xbf16, #tpu.memory_space<vmem>>, %arg2: memref<9x32x32xbf16, #tpu.memory_space<vmem>>, %arg3: memref<1x32xf32, #tpu.memory_space<vmem>>, %arg4: memref<1x32xf32, #tpu.memory_space<vmem>>, %arg5: memref<1x64x32xf32, #tpu.memory_space<vmem>>, %arg6: memref<1x64x32xf32, #tpu.memory_space<vmem>>) attributes {dimension_semantics = [#tpu.dimension_semantics<parallel>], iteration_bounds = array<i64: 2>, scalar_prefetch = 0 : i64, scratch_operands = 0 : i64, tpu.core_type = #tpu.core_type<tc>, window_params = [{transform_indices = @transform_0, window_bounds = array<i64: 1, 10, 10, 32>}, {pipeline_mode = #tpu.pipeline_mode<synchronous>, transform_indices = @transform_1, window_bounds = array<i64: 9, 32, 32>}, {pipeline_mode = #tpu.pipeline_mode<synchronous>, transform_indices = @transform_2, window_bounds = array<i64: 1, 32>}, {pipeline_mode = #tpu.pipeline_mode<synchronous>, transform_indices = @transform_3, window_bounds = array<i64: 1, 32>}, {transform_indices = @transform_4, window_bounds = array<i64: 1, 64, 32>}, {transform_indices = @transform_5, window_bounds = array<i64: 1, 64, 32>}]} {
    %c0 = arith.constant 0 : index
    %c0_0 = arith.constant 0 : index
    %c0_1 = arith.constant 0 : index
    %c0_2 = arith.constant 0 : index
    %0 = vector.load %arg1[%c0, %c0_0, %c0_1, %c0_2] : memref<1x10x10x32xbf16, #tpu.memory_space<vmem>>, vector<1x10x10x32xbf16>
    %1 = arith.extf %0 : vector<1x10x10x32xbf16> to vector<1x10x10x32xf32>
    %cst = arith.constant 0.000000e+00 : f32
    %2 = vector.broadcast %cst : f32 to vector<64x32xf32>
    %3 = vector.extract_strided_slice %1 {offsets = [0, 0, 0, 0], sizes = [1, 8, 8, 32], strides = [1, 1, 1, 1]} : vector<1x10x10x32xf32> to vector<1x8x8x32xf32>
    %4 = vector.shape_cast %3 : vector<1x8x8x32xf32> to vector<64x32xf32>
    %5 = arith.truncf %4 : vector<64x32xf32> to vector<64x32xbf16>
    %c0_3 = arith.constant 0 : index
    %c0_4 = arith.constant 0 : index
    %c0_5 = arith.constant 0 : index
    %6 = vector.load %arg2[%c0_3, %c0_4, %c0_5] : memref<9x32x32xbf16, #tpu.memory_space<vmem>>, vector<1x32x32xbf16>
    %7 = vector.shape_cast %6 : vector<1x32x32xbf16> to vector<32x32xbf16>
    %cst_6 = arith.constant dense<0.000000e+00> : vector<64x32xf32>
    %8 = tpu.matmul %5, %7, %cst_6 {dimension_numbers = #tpu.dot_dimension_numbers<[1], [0], [0], [1], [0, 0, 1, 1], [], []>} : vector<64x32xbf16>, vector<32x32xbf16>, vector<64x32xf32> -> vector<64x32xf32>
    %9 = arith.addf %2, %8 : vector<64x32xf32>
    %10 = vector.extract_strided_slice %1 {offsets = [0, 0, 1, 0], sizes = [1, 8, 8, 32], strides = [1, 1, 1, 1]} : vector<1x10x10x32xf32> to vector<1x8x8x32xf32>
    %11 = vector.shape_cast %10 : vector<1x8x8x32xf32> to vector<64x32xf32>
    %12 = arith.truncf %11 : vector<64x32xf32> to vector<64x32xbf16>
    %c1 = arith.constant 1 : index
    %c0_7 = arith.constant 0 : index
    %c0_8 = arith.constant 0 : index
    %13 = vector.load %arg2[%c1, %c0_7, %c0_8] : memref<9x32x32xbf16, #tpu.memory_space<vmem>>, vector<1x32x32xbf16>
    %14 = vector.shape_cast %13 : vector<1x32x32xbf16> to vector<32x32xbf16>
    %cst_9 = arith.constant dense<0.000000e+00> : vector<64x32xf32>
    %15 = tpu.matmul %12, %14, %cst_9 {dimension_numbers = #tpu.dot_dimension_numbers<[1], [0], [0], [1], [0, 0, 1, 1], [], []>} : vector<64x32xbf16>, vector<32x32xbf16>, vector<64x32xf32> -> vector<64x32xf32>
    %16 = arith.addf %9, %15 : vector<64x32xf32>
    %17 = vector.extract_strided_slice %1 {offsets = [0, 0, 2, 0], sizes = [1, 8, 8, 32], strides = [1, 1, 1, 1]} : vector<1x10x10x32xf32> to vector<1x8x8x32xf32>
    %18 = vector.shape_cast %17 : vector<1x8x8x32xf32> to vector<64x32xf32>
    %19 = arith.truncf %18 : vector<64x32xf32> to vector<64x32xbf16>
    %c2 = arith.constant 2 : index
    %c0_10 = arith.constant 0 : index
    %c0_11 = arith.constant 0 : index
    %20 = vector.load %arg2[%c2, %c0_10, %c0_11] : memref<9x32x32xbf16, #tpu.memory_space<vmem>>, vector<1x32x32xbf16>
    %21 = vector.shape_cast %20 : vector<1x32x32xbf16> to vector<32x32xbf16>
    %cst_12 = arith.constant dense<0.000000e+00> : vector<64x32xf32>
    %22 = tpu.matmul %19, %21, %cst_12 {dimension_numbers = #tpu.dot_dimension_numbers<[1], [0], [0], [1], [0, 0, 1, 1], [], []>} : vector<64x32xbf16>, vector<32x32xbf16>, vector<64x32xf32> -> vector<64x32xf32>
    %23 = arith.addf %16, %22 : vector<64x32xf32>
    %24 = vector.extract_strided_slice %1 {offsets = [0, 1, 0, 0], sizes = [1, 8, 8, 32], strides = [1, 1, 1, 1]} : vector<1x10x10x32xf32> to vector<1x8x8x32xf32>
    %25 = vector.shape_cast %24 : vector<1x8x8x32xf32> to vector<64x32xf32>
    %26 = arith.truncf %25 : vector<64x32xf32> to vector<64x32xbf16>
    %c3 = arith.constant 3 : index
    %c0_13 = arith.constant 0 : index
    %c0_14 = arith.constant 0 : index
    %27 = vector.load %arg2[%c3, %c0_13, %c0_14] : memref<9x32x32xbf16, #tpu.memory_space<vmem>>, vector<1x32x32xbf16>
    %28 = vector.shape_cast %27 : vector<1x32x32xbf16> to vector<32x32xbf16>
    %cst_15 = arith.constant dense<0.000000e+00> : vector<64x32xf32>
    %29 = tpu.matmul %26, %28, %cst_15 {dimension_numbers = #tpu.dot_dimension_numbers<[1], [0], [0], [1], [0, 0, 1, 1], [], []>} : vector<64x32xbf16>, vector<32x32xbf16>, vector<64x32xf32> -> vector<64x32xf32>
    %30 = arith.addf %23, %29 : vector<64x32xf32>
    %31 = vector.extract_strided_slice %1 {offsets = [0, 1, 1, 0], sizes = [1, 8, 8, 32], strides = [1, 1, 1, 1]} : vector<1x10x10x32xf32> to vector<1x8x8x32xf32>
    %32 = vector.shape_cast %31 : vector<1x8x8x32xf32> to vector<64x32xf32>
    %33 = arith.truncf %32 : vector<64x32xf32> to vector<64x32xbf16>
    %c4 = arith.constant 4 : index
    %c0_16 = arith.constant 0 : index
    %c0_17 = arith.constant 0 : index
    %34 = vector.load %arg2[%c4, %c0_16, %c0_17] : memref<9x32x32xbf16, #tpu.memory_space<vmem>>, vector<1x32x32xbf16>
    %35 = vector.shape_cast %34 : vector<1x32x32xbf16> to vector<32x32xbf16>
    %cst_18 = arith.constant dense<0.000000e+00> : vector<64x32xf32>
    %36 = tpu.matmul %33, %35, %cst_18 {dimension_numbers = #tpu.dot_dimension_numbers<[1], [0], [0], [1], [0, 0, 1, 1], [], []>} : vector<64x32xbf16>, vector<32x32xbf16>, vector<64x32xf32> -> vector<64x32xf32>
    %37 = arith.addf %30, %36 : vector<64x32xf32>
    %38 = vector.extract_strided_slice %1 {offsets = [0, 1, 2, 0], sizes = [1, 8, 8, 32], strides = [1, 1, 1, 1]} : vector<1x10x10x32xf32> to vector<1x8x8x32xf32>
    %39 = vector.shape_cast %38 : vector<1x8x8x32xf32> to vector<64x32xf32>
    %40 = arith.truncf %39 : vector<64x32xf32> to vector<64x32xbf16>
    %c5 = arith.constant 5 : index
    %c0_19 = arith.constant 0 : index
    %c0_20 = arith.constant 0 : index
    %41 = vector.load %arg2[%c5, %c0_19, %c0_20] : memref<9x32x32xbf16, #tpu.memory_space<vmem>>, vector<1x32x32xbf16>
    %42 = vector.shape_cast %41 : vector<1x32x32xbf16> to vector<32x32xbf16>
    %cst_21 = arith.constant dense<0.000000e+00> : vector<64x32xf32>
    %43 = tpu.matmul %40, %42, %cst_21 {dimension_numbers = #tpu.dot_dimension_numbers<[1], [0], [0], [1], [0, 0, 1, 1], [], []>} : vector<64x32xbf16>, vector<32x32xbf16>, vector<64x32xf32> -> vector<64x32xf32>
    %44 = arith.addf %37, %43 : vector<64x32xf32>
    %45 = vector.extract_strided_slice %1 {offsets = [0, 2, 0, 0], sizes = [1, 8, 8, 32], strides = [1, 1, 1, 1]} : vector<1x10x10x32xf32> to vector<1x8x8x32xf32>
    %46 = vector.shape_cast %45 : vector<1x8x8x32xf32> to vector<64x32xf32>
    %47 = arith.truncf %46 : vector<64x32xf32> to vector<64x32xbf16>
    %c6 = arith.constant 6 : index
    %c0_22 = arith.constant 0 : index
    %c0_23 = arith.constant 0 : index
    %48 = vector.load %arg2[%c6, %c0_22, %c0_23] : memref<9x32x32xbf16, #tpu.memory_space<vmem>>, vector<1x32x32xbf16>
    %49 = vector.shape_cast %48 : vector<1x32x32xbf16> to vector<32x32xbf16>
    %cst_24 = arith.constant dense<0.000000e+00> : vector<64x32xf32>
    %50 = tpu.matmul %47, %49, %cst_24 {dimension_numbers = #tpu.dot_dimension_numbers<[1], [0], [0], [1], [0, 0, 1, 1], [], []>} : vector<64x32xbf16>, vector<32x32xbf16>, vector<64x32xf32> -> vector<64x32xf32>
    %51 = arith.addf %44, %50 : vector<64x32xf32>
    %52 = vector.extract_strided_slice %1 {offsets = [0, 2, 1, 0], sizes = [1, 8, 8, 32], strides = [1, 1, 1, 1]} : vector<1x10x10x32xf32> to vector<1x8x8x32xf32>
    %53 = vector.shape_cast %52 : vector<1x8x8x32xf32> to vector<64x32xf32>
    %54 = arith.truncf %53 : vector<64x32xf32> to vector<64x32xbf16>
    %c7 = arith.constant 7 : index
    %c0_25 = arith.constant 0 : index
    %c0_26 = arith.constant 0 : index
    %55 = vector.load %arg2[%c7, %c0_25, %c0_26] : memref<9x32x32xbf16, #tpu.memory_space<vmem>>, vector<1x32x32xbf16>
    %56 = vector.shape_cast %55 : vector<1x32x32xbf16> to vector<32x32xbf16>
    %cst_27 = arith.constant dense<0.000000e+00> : vector<64x32xf32>
    %57 = tpu.matmul %54, %56, %cst_27 {dimension_numbers = #tpu.dot_dimension_numbers<[1], [0], [0], [1], [0, 0, 1, 1], [], []>} : vector<64x32xbf16>, vector<32x32xbf16>, vector<64x32xf32> -> vector<64x32xf32>
    %58 = arith.addf %51, %57 : vector<64x32xf32>
    %59 = vector.extract_strided_slice %1 {offsets = [0, 2, 2, 0], sizes = [1, 8, 8, 32], strides = [1, 1, 1, 1]} : vector<1x10x10x32xf32> to vector<1x8x8x32xf32>
    %60 = vector.shape_cast %59 : vector<1x8x8x32xf32> to vector<64x32xf32>
    %61 = arith.truncf %60 : vector<64x32xf32> to vector<64x32xbf16>
    %c8 = arith.constant 8 : index
    %c0_28 = arith.constant 0 : index
    %c0_29 = arith.constant 0 : index
    %62 = vector.load %arg2[%c8, %c0_28, %c0_29] : memref<9x32x32xbf16, #tpu.memory_space<vmem>>, vector<1x32x32xbf16>
    %63 = vector.shape_cast %62 : vector<1x32x32xbf16> to vector<32x32xbf16>
    %cst_30 = arith.constant dense<0.000000e+00> : vector<64x32xf32>
    %64 = tpu.matmul %61, %63, %cst_30 {dimension_numbers = #tpu.dot_dimension_numbers<[1], [0], [0], [1], [0, 0, 1, 1], [], []>} : vector<64x32xbf16>, vector<32x32xbf16>, vector<64x32xf32> -> vector<64x32xf32>
    %65 = arith.addf %58, %64 : vector<64x32xf32>
    %66 = vector.shape_cast %65 : vector<64x32xf32> to vector<1x64x32xf32>
    %c0_31 = arith.constant 0 : index
    %c0_32 = arith.constant 0 : index
    %67 = vector.load %arg3[%c0_31, %c0_32] : memref<1x32xf32, #tpu.memory_space<vmem>>, vector<1x32xf32>
    %c0_33 = arith.constant 0 : index
    %c0_34 = arith.constant 0 : index
    %68 = vector.load %arg4[%c0_33, %c0_34] : memref<1x32xf32, #tpu.memory_space<vmem>>, vector<1x32xf32>
    %cst_35 = arith.constant dense<0.000000e+00> : vector<1x32xf32>
    %69 = vector.multi_reduction <add>, %66, %cst_35 [1] : vector<1x64x32xf32> to vector<1x32xf32>
    %70 = vector.shape_cast %69 : vector<1x32xf32> to vector<1x1x32xf32>
    %71 = arith.mulf %66, %66 : vector<1x64x32xf32>
    %cst_36 = arith.constant dense<0.000000e+00> : vector<1x32xf32>
    %72 = vector.multi_reduction <add>, %71, %cst_36 [1] : vector<1x64x32xf32> to vector<1x32xf32>
    %73 = vector.shape_cast %72 : vector<1x32xf32> to vector<1x1x32xf32>
    %cst_37 = arith.constant 1.562500e-02 : f32
    %74 = vector.broadcast %cst_37 : f32 to vector<1x1x32xf32>
    %75 = arith.mulf %70, %74 : vector<1x1x32xf32>
    %cst_38 = arith.constant 1.562500e-02 : f32
    %76 = vector.broadcast %cst_38 : f32 to vector<1x1x32xf32>
    %77 = arith.mulf %73, %76 : vector<1x1x32xf32>
    %78 = arith.mulf %75, %75 : vector<1x1x32xf32>
    %79 = arith.subf %77, %78 : vector<1x1x32xf32>
    %cst_39 = arith.constant 0.000000e+00 : f32
    %80 = vector.broadcast %cst_39 : f32 to vector<1x1x32xf32>
    %81 = arith.maximumf %79, %80 : vector<1x1x32xf32>
    %cst_40 = arith.constant 9.99999974E-6 : f32
    %82 = vector.broadcast %cst_40 : f32 to vector<1x1x32xf32>
    %83 = arith.addf %81, %82 : vector<1x1x32xf32>
    %84 = math.rsqrt %83 : vector<1x1x32xf32>
    %85 = vector.broadcast %75 : vector<1x1x32xf32> to vector<1x64x32xf32>
    %86 = arith.subf %66, %85 : vector<1x64x32xf32>
    %87 = vector.broadcast %84 : vector<1x1x32xf32> to vector<1x64x32xf32>
    %88 = arith.mulf %86, %87 : vector<1x64x32xf32>
    %89 = vector.shape_cast %67 : vector<1x32xf32> to vector<1x1x32xf32>
    %90 = vector.broadcast %89 : vector<1x1x32xf32> to vector<1x64x32xf32>
    %91 = arith.mulf %88, %90 : vector<1x64x32xf32>
    %92 = vector.shape_cast %68 : vector<1x32xf32> to vector<1x1x32xf32>
    %93 = vector.broadcast %92 : vector<1x1x32xf32> to vector<1x64x32xf32>
    %94 = arith.addf %91, %93 : vector<1x64x32xf32>
    %c0_41 = arith.constant 0 : index
    %c0_42 = arith.constant 0 : index
    %c0_43 = arith.constant 0 : index
    %95 = vector.load %arg5[%c0_41, %c0_42, %c0_43] : memref<1x64x32xf32, #tpu.memory_space<vmem>>, vector<1x64x32xf32>
    %96 = arith.addf %94, %95 : vector<1x64x32xf32>
    %cst_44 = arith.constant 0.000000e+00 : f32
    %97 = vector.broadcast %cst_44 : f32 to vector<1x64x32xf32>
    %98 = arith.maximumf %96, %97 : vector<1x64x32xf32>
    %c0_45 = arith.constant 0 : index
    %c0_46 = arith.constant 0 : index
    %c0_47 = arith.constant 0 : index
    %99 = vector.load %arg6[%c0_45, %c0_46, %c0_47] : memref<1x64x32xf32, #tpu.memory_space<vmem>>, vector<1x64x32xf32>
    tpu.vector_store %arg6[%c0_45, %c0_46, %c0_47], %98 {strides = array<i32>} : memref<1x64x32xf32, #tpu.memory_space<vmem>>, vector<1x64x32xf32>,
    return
  }
  func.func @transform_0(%arg0: i32) -> (i32, i32, i32, i32) {
    %c0_i32 = arith.constant 0 : i32
    %c0_i32_0 = arith.constant 0 : i32
    %c0_i32_1 = arith.constant 0 : i32
    %c0_i32_2 = arith.constant 0 : i32
    return %arg0, %c0_i32, %c0_i32_0, %c0_i32_1 : i32, i32, i32, i32
  }
  func.func @transform_1(%arg0: i32) -> (i32, i32, i32) {
    %c0_i32 = arith.constant 0 : i32
    %c0_i32_0 = arith.constant 0 : i32
    %c0_i32_1 = arith.constant 0 : i32
    %c0_i32_2 = arith.constant 0 : i32
    return %c0_i32, %c0_i32_0, %c0_i32_1 : i32, i32, i32
  }
  func.func @transform_2(%arg0: i32) -> (i32, i32) {
    %c0_i32 = arith.constant 0 : i32
    %c0_i32_0 = arith.constant 0 : i32
    %c0_i32_1 = arith.constant 0 : i32
    return %c0_i32, %c0_i32_0 : i32, i32
  }
  func.func @transform_3(%arg0: i32) -> (i32, i32) {
    %c0_i32 = arith.constant 0 : i32
    %c0_i32_0 = arith.constant 0 : i32
    %c0_i32_1 = arith.constant 0 : i32
    return %c0_i32, %c0_i32_0 : i32, i32
  }
  func.func @transform_4(%arg0: i32) -> (i32, i32, i32) {
    %c0_i32 = arith.constant 0 : i32
    %c0_i32_0 = arith.constant 0 : i32
    %c0_i32_1 = arith.constant 0 : i32
    return %arg0, %c0_i32, %c0_i32_0 : i32, i32, i32
  }
  func.func @transform_5(%arg0: i32) -> (i32, i32, i32) {
    %c0_i32 = arith.constant 0 : i32
    %c0_i32_0 = arith.constant 0 : i32
    %c0_i32_1 = arith.constant 0 : i32
    return %arg0, %c0_i32, %c0_i32_0 : i32, i32, i32
  }
}

</mosaic_0001>

<llo_original>
// kernel: forward.4
$region0: #{forward.4}
  #allocation0 [shape = 'u32[]', space=smem, size = 0x4, offset = 0x4, fixed_abs, tag = 'smem constant byte address 0x4 - core index']
  #allocation1 [shape = 'u32[72,128]{1,0:T(1,128)}', space=vmem, size = 0x9000, scoped, tag = 'internal scratch']
  %s0 = inlined_call_operand.vmem [shape: bf16[2,36,9,16], index: 0, kind: input, shape index: {}]
  %s1 = inlined_call_operand.vmem [shape: bf16[9,16,32], index: 1, kind: input, shape index: {}]
  %s2 = inlined_call_operand.vmem [shape: f32[1,32], index: 2, kind: input, shape index: {}]
  %s3 = inlined_call_operand.vmem [shape: f32[1,32], index: 3, kind: input, shape index: {}]
  %s4 = inlined_call_operand.vmem [shape: bf16[2,64,32], index: 4, kind: output, shape index: {}]
  %s5 = sld [smem:[#allocation0]]
  $region49: #{forward.4} parent=0
    _
  %s7 = ssub.s32 1, %s5
  %s8 = scalar_select 0, %s7, %s5
  loop: start=0, step=1, limit=4
  $region2: #{forward.4} parent=0 // loop_pre_header
    _
  $region3: #{forward.4} parent=0 // loop_header
    %s10 = sphi 0, %s14
    %p11 = scmp.ge.s32.totalorder %s10, 4
    %s20 = sphi 0, %s22
    %s23 = sphi 0, %s20
    %s24 = sphi 0, %s23
    %s40 = sphi 0, %s24
    %s44 = sphi 0, %s44
    %s46 = sphi 0, %s44
    %s47 = sphi 0, %s46
    %s61 = sphi 0, %s47
    %s65 = sphi 0, %s65
    %s67 = sphi 0, %s65
    %s68 = sphi 0, %s67
    %s82 = sphi 0, %s68
    %s86 = sphi 0, %s86
    %s88 = sphi 0, %s86
    %s89 = sphi 0, %s88
    %s103 = sphi 0, %s89
    %s109 = sphi 0, %s111
    %s112 = sphi 0, %s109
    %s113 = sphi 0, %s112
    %s129 = sphi 0, %s113
  $region4: #{forward.4} parent=0 // loop_header_branch
    %13 = sbr.rel (%p11) target = $region8
  $region5: #{forward.4} parent=0 // loop_body
    %s15 = ssub.s32 %s10, 1
    %s16 = ssub.s32 %s10, 2
    %s17 = sadd.s32 %s10, 1
    %s18 = ssub.s32 %s10, %s17
    %p19 = scmp.eq.s32.totalorder %s18, 0
    %s21 = sadd.s32 %s20, 1
    %s22 = scalar_select %p19, %s20, %s21
    %p25 = pneg %p19
    %p26 = scmp.eq.s32.totalorder %s10, 1
    %p27 = por %p25, %p26
    %p28 = scmp.ne.s32.totalorder %s20, %s23
    %p29 = scmp.eq.s32.totalorder %s10, 0
    %p30 = por %p28, %p29
    %p31 = scmp.ne.s32.totalorder %s20, %s23
    %p32 = scmp.eq.s32.totalorder %s15, 1
    %p33 = por %p31, %p32
    %p34 = scmp.ne.s32.totalorder %s23, %s24
    %p35 = scmp.eq.s32.totalorder %s15, 0
    %p36 = por %p34, %p35
    %p37 = scmp.ne.s32.totalorder %s23, %s24
    %p38 = scmp.eq.s32.totalorder %s16, 1
    %p39 = por %p37, %p38
    %p41 = scmp.ne.s32.totalorder %s24, %s40
    %p42 = scmp.eq.s32.totalorder %s16, 0
    %p43 = por %p41, %p42
    %s45 = sadd.s32 %s44, 1
    %p48 = scmp.eq.s32.totalorder %s10, 1
    %p49 = scmp.ne.s32.totalorder %s44, %s46
    %p50 = scmp.eq.s32.totalorder %s10, 0
    %p51 = por %p49, %p50
    %p52 = scmp.ne.s32.totalorder %s44, %s46
    %p53 = scmp.eq.s32.totalorder %s15, 1
    %p54 = por %p52, %p53
    %p55 = scmp.ne.s32.totalorder %s46, %s47
    %p56 = scmp.eq.s32.totalorder %s15, 0
    %p57 = por %p55, %p56
    %p58 = scmp.ne.s32.totalorder %s46, %s47
    %p59 = scmp.eq.s32.totalorder %s16, 1
    %p60 = por %p58, %p59
    %p62 = scmp.ne.s32.totalorder %s47, %s61
    %p63 = scmp.eq.s32.totalorder %s16, 0
    %p64 = por %p62, %p63
    %s66 = sadd.s32 %s65, 1
    %p69 = scmp.eq.s32.totalorder %s10, 1
    %p70 = scmp.ne.s32.totalorder %s65, %s67
    %p71 = scmp.eq.s32.totalorder %s10, 0
    %p72 = por %p70, %p71
    %p73 = scmp.ne.s32.totalorder %s65, %s67
    %p74 = scmp.eq.s32.totalorder %s15, 1
    %p75 = por %p73, %p74
    %p76 = scmp.ne.s32.totalorder %s67, %s68
    %p77 = scmp.eq.s32.totalorder %s15, 0
    %p78 = por %p76, %p77
    %p79 = scmp.ne.s32.totalorder %s67, %s68
    %p80 = scmp.eq.s32.totalorder %s16, 1
    %p81 = por %p79, %p80
    %p83 = scmp.ne.s32.totalorder %s68, %s82
    %p84 = scmp.eq.s32.totalorder %s16, 0
    %p85 = por %p83, %p84
    %s87 = sadd.s32 %s86, 1
    %p90 = scmp.eq.s32.totalorder %s10, 1
    %p91 = scmp.ne.s32.totalorder %s86, %s88
    %p92 = scmp.eq.s32.totalorder %s10, 0
    %p93 = por %p91, %p92
    %p94 = scmp.ne.s32.totalorder %s86, %s88
    %p95 = scmp.eq.s32.totalorder %s15, 1
    %p96 = por %p94, %p95
    %p97 = scmp.ne.s32.totalorder %s88, %s89
    %p98 = scmp.eq.s32.totalorder %s15, 0
    %p99 = por %p97, %p98
    %p100 = scmp.ne.s32.totalorder %s88, %s89
    %p101 = scmp.eq.s32.totalorder %s16, 1
    %p102 = por %p100, %p101
    %p104 = scmp.ne.s32.totalorder %s89, %s103
    %p105 = scmp.eq.s32.totalorder %s16, 0
    %p106 = por %p104, %p105
    %s107 = ssub.s32 %s10, %s17
    %p108 = scmp.eq.s32.totalorder %s107, 0
    %s110 = sadd.s32 %s109, 1
    %s111 = scalar_select %p108, %s109, %s110
    %p114 = pneg %p108
    %p115 = scmp.eq.s32.totalorder %s10, 1
    %p116 = por %p114, %p115
    %p117 = scmp.ne.s32.totalorder %s109, %s112
    %p118 = scmp.eq.s32.totalorder %s10, 0
    %p119 = por %p117, %p118
    %p120 = scmp.ne.s32.totalorder %s109, %s112
    %p121 = scmp.eq.s32.totalorder %s15, 1
    %p122 = por %p120, %p121
    %p123 = scmp.ne.s32.totalorder %s112, %s113
    %p124 = scmp.eq.s32.totalorder %s15, 0
    %p125 = por %p123, %p124
    %p126 = scmp.ne.s32.totalorder %s112, %s113
    %p127 = scmp.eq.s32.totalorder %s16, 1
    %p128 = por %p126, %p127
    %p130 = scmp.ne.s32.totalorder %s113, %s129
    %p131 = scmp.eq.s32.totalorder %s16, 0
    %p132 = por %p130, %p131
    %p133 = scmp.le.s32.totalorder 1, %s10
    %p134 = scmp.lt.s32.totalorder %s10, 3
    %p135 = pnand %p133, %p134
    %p136 = pneg %p135
    // Predicated region
    $region9: #{forward.4} parent=5 // pred_check
      _
    $region10: #{forward.4} parent=5 // pred_check_branch
      %138 = sbr.rel (%p135) target = $region12
    $region11: #{forward.4} parent=5 // pred_region
      %s139 = ssub.s32 %s10, 1
      // Predicated region
      $region13: #{forward.4} parent=11 // pred_check
        %p140 = pneg %p57
      $region14: #{forward.4} parent=11 // pred_check_branch
        %142 = sbr.rel (%p140) target = $region16
      $region15: #{forward.4} parent=11 // pred_region
        _
      $region16: #{forward.4} parent=11 // pred_fallthru
        _
      // Predicated region
      $region17: #{forward.4} parent=11 // pred_check
        %p143 = pneg %p78
      $region18: #{forward.4} parent=11 // pred_check_branch
        %145 = sbr.rel (%p143) target = $region20
      $region19: #{forward.4} parent=11 // pred_region
        _
      $region20: #{forward.4} parent=11 // pred_fallthru
        _
      // Predicated region
      $region21: #{forward.4} parent=11 // pred_check
        %p146 = pneg %p99
      $region22: #{forward.4} parent=11 // pred_check_branch
        %148 = sbr.rel (%p146) target = $region24
      $region23: #{forward.4} parent=11 // pred_region
        _
      $region24: #{forward.4} parent=11 // pred_fallthru
        _
    $region12: #{forward.4} parent=5 // pred_fallthru
      _
    %p149 = scmp.lt.s32.totalorder %s10, 2
    // Predicated region
    $region25: #{forward.4} parent=5 // pred_check
      %p150 = pneg %p149
    $region26: #{forward.4} parent=5 // pred_check_branch
      %152 = sbr.rel (%p150) target = $region28
    $region27: #{forward.4} parent=5 // pred_region
      // Predicated region
      $region29: #{forward.4} parent=27 // pred_check
        %p153 = pneg %p30
      $region30: #{forward.4} parent=27 // pred_check_branch
        %155 = sbr.rel (%p153) target = $region32
      $region31: #{forward.4} parent=27 // pred_region
        %p156 = scmp.lt.s32.totalorder %s10, 1
        %s157 = scalar_select %p156, %s10, 1
        %s158 = smul.addr %s157, 72
        %s159 = smul.addr %s158, 4
        %s160 = scalar_lea.vmem %s0, %s159
      $region32: #{forward.4} parent=27 // pred_fallthru
        _
    $region28: #{forward.4} parent=5 // pred_fallthru
      _
    %p161 = scmp.le.s32.totalorder 1, %s10
    %p162 = scmp.lt.s32.totalorder %s10, 3
    %p163 = pnand %p161, %p162
    %p164 = pneg %p163
    // Predicated region
    $region33: #{forward.4} parent=5 // pred_check
      _
    $region34: #{forward.4} parent=5 // pred_check_branch
      %166 = sbr.rel (%p163) target = $region36
    $region35: #{forward.4} parent=5 // pred_region
      %s167 = ssub.s32 %s10, 1
      %p168 = scmp.lt.s32.totalorder %s15, 1
      %s169 = scalar_select %p168, %s15, 1
      %s170 = smul.addr %s169, 72
      %s171 = smul.addr %s170, 4
      %s172 = scalar_lea.vmem %s0, %s171
      %p173 = pneg %p36
      %p174 = pneg %p33
      %p175 = pneg %p57
      %p176 = pneg %p54
      %p177 = pneg %p78
      %p178 = pneg %p75
      %p179 = pneg %p99
      %p180 = pneg %p96
      %p181 = pneg %p125
      %p182 = pneg %p122
      %p183 = scmp.lt.s32.totalorder %s15, 1
      %s184 = scalar_select %p183, %s15, 1
      %s185 = smul.addr %s184, 8
      %s186 = smul.addr %s185, 4
      %s187 = scalar_lea.vmem %s4, %s186
      %p188 = scmp.lt.s32.totalorder %s15, 1
      %s189 = scalar_select %p188, %s15, 1
      %s190 = smul.addr %s189, 72
      %s191 = smul.addr %s190, 4
      %s192 = scalar_lea.vmem %s0, %s191
      %p193 = scmp.lt.s32.totalorder %s15, 1
      %s194 = scalar_select %p193, %s15, 1
      %s195 = smul.addr %s194, 8
      %s196 = smul.addr %s195, 4
      %s197 = scalar_lea.vmem %s4, %s196
      %v199 = vld [vmem:[%s192] sm:$0xf]
      %v200 = vld [vmem:[%s192 + $0x4] sm:$0x1]
      %v201 = vld [vmem:[%s192 + $0x8] sm:$0xf]
      %v202 = vld [vmem:[%s192 + $0xc] sm:$0x1]
      %v203 = vld [vmem:[%s192 + $0x10] sm:$0xf]
      %v204 = vld [vmem:[%s192 + $0x14] sm:$0x1]
      %v205 = vld [vmem:[%s192 + $0x18] sm:$0xf]
      %v206 = vld [vmem:[%s192 + $0x1c] sm:$0x1]
      %v207 = vld [vmem:[%s192 + $0x20] sm:$0xf]
      %v208 = vld [vmem:[%s192 + $0x24] sm:$0x1]
      %v209 = vld [vmem:[%s192 + $0x28] sm:$0xf]
      %v210 = vld [vmem:[%s192 + $0x2c] sm:$0x1]
      %v211 = vld [vmem:[%s192 + $0x30] sm:$0xf]
      %v212 = vld [vmem:[%s192 + $0x34] sm:$0x1]
      %v213 = vld [vmem:[%s192 + $0x38] sm:$0xf]
      %v214 = vld [vmem:[%s192 + $0x3c] sm:$0x1]
      %v215 = vld [vmem:[%s192 + $0x40] sm:$0xf]
      %v216 = vld [vmem:[%s192 + $0x44] sm:$0x1]
      %v217 = vld [vmem:[%s192 + $0x48] sm:$0xf]
      %v218 = vld [vmem:[%s192 + $0x50] sm:$0xf]
      %v219 = vld [vmem:[%s192 + $0x58] sm:$0xf]
      %v220 = vld [vmem:[%s192 + $0x60] sm:$0xf]
      %v221 = vld [vmem:[%s192 + $0x68] sm:$0xf]
      %v222 = vld [vmem:[%s192 + $0x70] sm:$0xf]
      %v223 = vld [vmem:[%s192 + $0x78] sm:$0xf]
      %v224 = vld [vmem:[%s192 + $0x80] sm:$0xf]
      %v225 = vld [vmem:[%s192 + $0x88] sm:$0xf]
      %v226 = vld [vmem:[%s192 + $0x90] sm:$0xf]
      %v227 = vld [vmem:[%s192 + $0x94] sm:$0x1]
      %v228 = vld [vmem:[%s192 + $0x98] sm:$0xf]
      %v229 = vld [vmem:[%s192 + $0x9c] sm:$0x1]
      %v230 = vld [vmem:[%s192 + $0xa0] sm:$0xf]
      %v231 = vld [vmem:[%s192 + $0xa4] sm:$0x1]
      %v232 = vld [vmem:[%s192 + $0xa8] sm:$0xf]
      %v233 = vld [vmem:[%s192 + $0xac] sm:$0x1]
      %v234 = vld [vmem:[%s192 + $0xb0] sm:$0xf]
      %v235 = vld [vmem:[%s192 + $0xb4] sm:$0x1]
      %v236 = vld [vmem:[%s192 + $0xb8] sm:$0xf]
      %v237 = vld [vmem:[%s192 + $0xbc] sm:$0x1]
      %v238 = vld [vmem:[%s192 + $0xc0] sm:$0xf]
      %v239 = vld [vmem:[%s192 + $0xc4] sm:$0x1]
      %v240 = vld [vmem:[%s192 + $0xc8] sm:$0xf]
      %v241 = vld [vmem:[%s192 + $0xcc] sm:$0x1]
      %v242 = vld [vmem:[%s192 + $0xd8] sm:$0xf]
      %v243 = vld [vmem:[%s192 + $0xe0] sm:$0xf]
      %v244 = vld [vmem:[%s192 + $0xe8] sm:$0xf]
      %v245 = vld [vmem:[%s192 + $0xf0] sm:$0xf]
      %v246 = vld [vmem:[%s192 + $0xf8] sm:$0xf]
      %v247 = vld [vmem:[%s192 + $0x100] sm:$0xf]
      %v248 = vld [vmem:[%s192 + $0x108] sm:$0xf]
      %v249 = vld [vmem:[%s192 + $0x110] sm:$0xf]
      %v250 = vunpack.c.l.bf16 %v199
      %v251 = vunpack.c.l.bf16 %v200
      %v252 = vunpack.c.l.bf16 %v201
      %v253 = vunpack.c.l.bf16 %v202
      %v254 = vunpack.c.l.bf16 %v203
      %v255 = vunpack.c.l.bf16 %v204
      %v256 = vunpack.c.l.bf16 %v205
      %v257 = vunpack.c.l.bf16 %v206
      %v258 = vunpack.c.l.bf16 %v207
      %v259 = vunpack.c.l.bf16 %v208
      %v260 = vunpack.c.l.bf16 %v209
      %v261 = vunpack.c.l.bf16 %v210
      %v262 = vunpack.c.l.bf16 %v211
      %v263 = vunpack.c.l.bf16 %v212
      %v264 = vunpack.c.l.bf16 %v213
      %v265 = vunpack.c.l.bf16 %v214
      %v266 = vunpack.c.l.bf16 %v215
      %v267 = vunpack.c.l.bf16 %v216
      %v268 = vunpack.c.l.bf16 %v217
      %v269 = vunpack.c.l.bf16 %v218
      %v270 = vunpack.c.l.bf16 %v219
      %v271 = vunpack.c.l.bf16 %v220
      %v272 = vunpack.c.l.bf16 %v221
      %v273 = vunpack.c.l.bf16 %v222
      %v274 = vunpack.c.l.bf16 %v223
      %v275 = vunpack.c.l.bf16 %v224
      %v276 = vunpack.c.l.bf16 %v225
      %v277 = vunpack.c.l.bf16 %v226
      %v278 = vunpack.c.l.bf16 %v227
      %v279 = vunpack.c.l.bf16 %v228
      %v280 = vunpack.c.l.bf16 %v229
      %v281 = vunpack.c.l.bf16 %v230
      %v282 = vunpack.c.l.bf16 %v231
      %v283 = vunpack.c.l.bf16 %v232
      %v284 = vunpack.c.l.bf16 %v233
      %v285 = vunpack.c.l.bf16 %v234
      %v286 = vunpack.c.l.bf16 %v235
      %v287 = vunpack.c.l.bf16 %v236
      %v288 = vunpack.c.l.bf16 %v237
      %v289 = vunpack.c.l.bf16 %v238
      %v290 = vunpack.c.l.bf16 %v239
      %v291 = vunpack.c.l.bf16 %v240
      %v292 = vunpack.c.l.bf16 %v241
      %v293 = vunpack.c.l.bf16 %v242
      %v294 = vunpack.c.l.bf16 %v243
      %v295 = vunpack.c.l.bf16 %v244
      %v296 = vunpack.c.l.bf16 %v245
      %v297 = vunpack.c.l.bf16 %v246
      %v298 = vunpack.c.l.bf16 %v247
      %v299 = vunpack.c.l.bf16 %v248
      %v300 = vunpack.c.l.bf16 %v249
      %v301 = vpack.c.bf16 %v252, %v250
      %v302 = vpack.c.bf16 %v256, %v254
      %v303 = vpack.c.bf16 %v260, %v258
      %v304 = vpack.c.bf16 %v264, %v262
      %v305 = vld [vmem:[%s1] sm:$0xf]
      %v306 = vld [vmem:[%s1 + $0x4] sm:$0xf]
      %v307 = vpack.c.bf16 %v269, %v268
      %v308 = vpack.c.bf16 %v271, %v270
      %v309 = vpack.c.bf16 %v273, %v272
      %v310 = vpack.c.bf16 %v275, %v274
      %s311 = scalar_lea.vmem %s1, 8
      %v312 = vld [vmem:[%s311] sm:$0xf]
      %v313 = vld [vmem:[%s311 + $0x4] sm:$0xf]
      %v316 = vunpack.c.l.b16 %v312
      %v317 = vunpack.c.l.b16 %v313
      %v318 = vpack.c.b16 %v317, %v316
      %vm320 = vcmask 130048
      %v322 = vsel %vm320, %v307, 0
      %v325 = vsel %vm320, %v308, 0
      %v328 = vsel %vm320, %v309, 0
      %v331 = vsel %vm320, %v310, 0
      %333 = vmatpush.bf16.msra.mxu0 0
      %334 = vmatpush.bf16.msra.mxu0 0
      %335 = vmatpush.bf16.msra.mxu0 0
      %336 = vmatpush.bf16.msra.mxu0 0
      %337 = vmatpush.bf16.msra.mxu0 0
      %338 = vmatpush.bf16.msra.mxu0 0
      %339 = vmatpush.bf16.msra.mxu0 0
      %340 = vmatpush.bf16.msra.mxu0 %v318
      %341 = vmatmul.bf16.gmra.mxu0 %v322
      %v342 = vpop.f32.mrf.mxu0
      %v343 = vadd.f32 0.0, %v342
      %v344 = vpop.f32.mrf.mxu0
      %v345 = vadd.f32 0.0, %v344
      %346 = vmatmul.bf16.gmra.mxu0 %v325
      %v347 = vpop.f32.mrf.mxu0
      %v348 = vadd.f32 0.0, %v347
      %v349 = vpop.f32.mrf.mxu0
      %v350 = vadd.f32 0.0, %v349
      %351 = vmatmul.bf16.gmra.mxu0 %v328
      %v352 = vpop.f32.mrf.mxu0
      %v353 = vadd.f32 0.0, %v352
      %v354 = vpop.f32.mrf.mxu0
      %v355 = vadd.f32 0.0, %v354
      %356 = vmatmul.bf16.gmra.mxu0 %v331
      %v357 = vpop.f32.mrf.mxu0
      %v358 = vadd.f32 0.0, %v357
      %v359 = vpop.f32.mrf.mxu0
      %v360 = vadd.f32 0.0, %v359
      %361 = vdwg.mxu0
      %v364 = vunpack.c.l.b16 %v305
      %v365 = vunpack.c.l.b16 %v306
      %v366 = vpack.c.b16 %v365, %v364
      %v369 = vsel %vm320, %v301, 0
      %v372 = vsel %vm320, %v302, 0
      %v375 = vsel %vm320, %v303, 0
      %v378 = vsel %vm320, %v304, 0
      %380 = vmatpush.bf16.msra.mxu0 0
      %381 = vmatpush.bf16.msra.mxu0 0
      %382 = vmatpush.bf16.msra.mxu0 0
      %383 = vmatpush.bf16.msra.mxu0 0
      %384 = vmatpush.bf16.msra.mxu0 0
      %385 = vmatpush.bf16.msra.mxu0 0
      %386 = vmatpush.bf16.msra.mxu0 0
      %387 = vmatpush.bf16.msra.mxu0 %v366
      %388 = vmatmul.bf16.gmra.mxu0 %v369
      %v389 = vpop.f32.mrf.mxu0
      %v390 = vadd.f32 %v343, %v389
      %v391 = vpop.f32.mrf.mxu0
      %v392 = vadd.f32 %v345, %v391
      %393 = vmatmul.bf16.gmra.mxu0 %v372
      %v394 = vpop.f32.mrf.mxu0
      %v395 = vadd.f32 %v348, %v394
      %v396 = vpop.f32.mrf.mxu0
      %v397 = vadd.f32 %v350, %v396
      %398 = vmatmul.bf16.gmra.mxu0 %v375
      %v399 = vpop.f32.mrf.mxu0
      %v400 = vadd.f32 %v353, %v399
      %v401 = vpop.f32.mrf.mxu0
      %v402 = vadd.f32 %v355, %v401
      %403 = vmatmul.bf16.gmra.mxu0 %v378
      %v404 = vpop.f32.mrf.mxu0
      %v405 = vadd.f32 %v358, %v404
      %v406 = vpop.f32.mrf.mxu0
      %v407 = vadd.f32 %v360, %v406
      %408 = vdwg.mxu0
      %vm425 = vcmask 1046528
      %v426 = vrot.slane %v250, 1
      %v427 = vrot.slane %v251, 1
      %v428 = vsel %vm425, %v426, %v427
      %v429 = vrot.slane %v252, 1
      %v430 = vrot.slane %v253, 1
      %v431 = vsel %vm425, %v429, %v430
      %v432 = vrot.slane %v254, 1
      %v433 = vrot.slane %v255, 1
      %v434 = vsel %vm425, %v432, %v433
      %v435 = vrot.slane %v256, 1
      %v436 = vrot.slane %v257, 1
      %v437 = vsel %vm425, %v435, %v436
      %v438 = vrot.slane %v258, 1
      %v439 = vrot.slane %v259, 1
      %v440 = vsel %vm425, %v438, %v439
      %v441 = vrot.slane %v260, 1
      %v442 = vrot.slane %v261, 1
      %v443 = vsel %vm425, %v441, %v442
      %v444 = vrot.slane %v262, 1
      %v445 = vrot.slane %v263, 1
      %v446 = vsel %vm425, %v444, %v445
      %v447 = vrot.slane %v264, 1
      %v448 = vrot.slane %v265, 1
      %v449 = vsel %vm425, %v447, %v448
      %v458 = vpack.c.bf16 %v431, %v428
      %v459 = vpack.c.bf16 %v437, %v434
      %v460 = vpack.c.bf16 %v443, %v440
      %v461 = vpack.c.bf16 %v449, %v446
      %s462 = scalar_lea.vmem %s1, 16
      %v463 = vld [vmem:[%s462] sm:$0xf]
      %v464 = vld [vmem:[%s462 + $0x4] sm:$0xf]
      %v467 = vunpack.c.l.b16 %v463
      %v468 = vunpack.c.l.b16 %v464
      %v469 = vpack.c.b16 %v468, %v467
      %v472 = vsel %vm320, %v458, 0
      %v475 = vsel %vm320, %v459, 0
      %v478 = vsel %vm320, %v460, 0
      %v481 = vsel %vm320, %v461, 0
      %483 = vmatpush.bf16.msra.mxu0 0
      %484 = vmatpush.bf16.msra.mxu0 0
      %485 = vmatpush.bf16.msra.mxu0 0
      %486 = vmatpush.bf16.msra.mxu0 0
      %487 = vmatpush.bf16.msra.mxu0 0
      %488 = vmatpush.bf16.msra.mxu0 0
      %489 = vmatpush.bf16.msra.mxu0 0
      %490 = vmatpush.bf16.msra.mxu0 %v469
      %491 = vmatmul.bf16.gmra.mxu0 %v472
      %v492 = vpop.f32.mrf.mxu0
      %v493 = vadd.f32 0.0, %v492
      %v494 = vpop.f32.mrf.mxu0
      %v495 = vadd.f32 0.0, %v494
      %496 = vmatmul.bf16.gmra.mxu0 %v475
      %v497 = vpop.f32.mrf.mxu0
      %v498 = vadd.f32 0.0, %v497
      %v499 = vpop.f32.mrf.mxu0
      %v500 = vadd.f32 0.0, %v499
      %501 = vmatmul.bf16.gmra.mxu0 %v478
      %v502 = vpop.f32.mrf.mxu0
      %v503 = vadd.f32 0.0, %v502
      %v504 = vpop.f32.mrf.mxu0
      %v505 = vadd.f32 0.0, %v504
      %506 = vmatmul.bf16.gmra.mxu0 %v481
      %v507 = vpop.f32.mrf.mxu0
      %v508 = vadd.f32 0.0, %v507
      %v509 = vpop.f32.mrf.mxu0
      %v510 = vadd.f32 0.0, %v509
      %511 = vdwg.mxu0
      %v512 = vadd.f32 %v390, %v493
      %v513 = vadd.f32 %v392, %v495
      %v514 = vadd.f32 %v395, %v498
      %v515 = vadd.f32 %v397, %v500
      %v516 = vadd.f32 %v400, %v503
      %v517 = vadd.f32 %v402, %v505
      %v518 = vadd.f32 %v405, %v508
      %v519 = vadd.f32 %v407, %v510
      %v520 = vpack.c.bf16 %v279, %v277
      %v521 = vpack.c.bf16 %v283, %v281
      %v522 = vpack.c.bf16 %v287, %v285
      %v523 = vpack.c.bf16 %v291, %v289
      %s524 = scalar_lea.vmem %s1, 24
      %v525 = vld [vmem:[%s524] sm:$0xf]
      %v526 = vld [vmem:[%s524 + $0x4] sm:$0xf]
      %v529 = vunpack.c.l.b16 %v525
      %v530 = vunpack.c.l.b16 %v526
      %v531 = vpack.c.b16 %v530, %v529
      %v534 = vsel %vm320, %v520, 0
      %v537 = vsel %vm320, %v521, 0
      %v540 = vsel %vm320, %v522, 0
      %v543 = vsel %vm320, %v523, 0
      %545 = vmatpush.bf16.msra.mxu0 0
      %546 = vmatpush.bf16.msra.mxu0 0
      %547 = vmatpush.bf16.msra.mxu0 0
      %548 = vmatpush.bf16.msra.mxu0 0
      %549 = vmatpush.bf16.msra.mxu0 0
      %550 = vmatpush.bf16.msra.mxu0 0
      %551 = vmatpush.bf16.msra.mxu0 0
      %552 = vmatpush.bf16.msra.mxu0 %v531
      %553 = vmatmul.bf16.gmra.mxu0 %v534
      %v554 = vpop.f32.mrf.mxu0
      %v555 = vadd.f32 0.0, %v554
      %v556 = vpop.f32.mrf.mxu0
      %v557 = vadd.f32 0.0, %v556
      %558 = vmatmul.bf16.gmra.mxu0 %v537
      %v559 = vpop.f32.mrf.mxu0
      %v560 = vadd.f32 0.0, %v559
      %v561 = vpop.f32.mrf.mxu0
      %v562 = vadd.f32 0.0, %v561
      %563 = vmatmul.bf16.gmra.mxu0 %v540
      %v564 = vpop.f32.mrf.mxu0
      %v565 = vadd.f32 0.0, %v564
      %v566 = vpop.f32.mrf.mxu0
      %v567 = vadd.f32 0.0, %v566
      %568 = vmatmul.bf16.gmra.mxu0 %v543
      %v569 = vpop.f32.mrf.mxu0
      %v570 = vadd.f32 0.0, %v569
      %v571 = vpop.f32.mrf.mxu0
      %v572 = vadd.f32 0.0, %v571
      %573 = vdwg.mxu0
      %v574 = vadd.f32 %v512, %v555
      %v575 = vadd.f32 %v513, %v557
      %v576 = vadd.f32 %v514, %v560
      %v577 = vadd.f32 %v515, %v562
      %v578 = vadd.f32 %v516, %v565
      %v579 = vadd.f32 %v517, %v567
      %v580 = vadd.f32 %v518, %v570
      %v581 = vadd.f32 %v519, %v572
      %v582 = vpack.c.bf16 %v294, %v293
      %v583 = vpack.c.bf16 %v296, %v295
      %v584 = vpack.c.bf16 %v298, %v297
      %v585 = vpack.c.bf16 %v300, %v299
      %s586 = scalar_lea.vmem %s1, 32
      %v587 = vld [vmem:[%s586] sm:$0xf]
      %v588 = vld [vmem:[%s586 + $0x4] sm:$0xf]
      %v591 = vunpack.c.l.b16 %v587
      %v592 = vunpack.c.l.b16 %v588
      %v593 = vpack.c.b16 %v592, %v591
      %v596 = vsel %vm320, %v582, 0
      %v599 = vsel %vm320, %v583, 0
      %v602 = vsel %vm320, %v584, 0
      %v605 = vsel %vm320, %v585, 0
      %607 = vmatpush.bf16.msra.mxu0 0
      %608 = vmatpush.bf16.msra.mxu0 0
      %609 = vmatpush.bf16.msra.mxu0 0
      %610 = vmatpush.bf16.msra.mxu0 0
      %611 = vmatpush.bf16.msra.mxu0 0
      %612 = vmatpush.bf16.msra.mxu0 0
      %613 = vmatpush.bf16.msra.mxu0 0
      %614 = vmatpush.bf16.msra.mxu0 %v593
      %615 = vmatmul.bf16.gmra.mxu0 %v596
      %v616 = vpop.f32.mrf.mxu0
      %v617 = vadd.f32 0.0, %v616
      %v618 = vpop.f32.mrf.mxu0
      %v619 = vadd.f32 0.0, %v618
      %620 = vmatmul.bf16.gmra.mxu0 %v599
      %v621 = vpop.f32.mrf.mxu0
      %v622 = vadd.f32 0.0, %v621
      %v623 = vpop.f32.mrf.mxu0
      %v624 = vadd.f32 0.0, %v623
      %625 = vmatmul.bf16.gmra.mxu0 %v602
      %v626 = vpop.f32.mrf.mxu0
      %v627 = vadd.f32 0.0, %v626
      %v628 = vpop.f32.mrf.mxu0
      %v629 = vadd.f32 0.0, %v628
      %630 = vmatmul.bf16.gmra.mxu0 %v605
      %v631 = vpop.f32.mrf.mxu0
      %v632 = vadd.f32 0.0, %v631
      %v633 = vpop.f32.mrf.mxu0
      %v634 = vadd.f32 0.0, %v633
      %635 = vdwg.mxu0
      %v636 = vadd.f32 %v574, %v617
      %v637 = vadd.f32 %v575, %v619
      %v638 = vadd.f32 %v576, %v622
      %v639 = vadd.f32 %v577, %v624
      %v640 = vadd.f32 %v578, %v627
      %v641 = vadd.f32 %v579, %v629
      %v642 = vadd.f32 %v580, %v632
      %v643 = vadd.f32 %v581, %v634
      %v660 = vrot.slane %v277, 1
      %v661 = vrot.slane %v278, 1
      %v662 = vsel %vm425, %v660, %v661
      %v663 = vrot.slane %v279, 1
      %v664 = vrot.slane %v280, 1
      %v665 = vsel %vm425, %v663, %v664
      %v666 = vrot.slane %v281, 1
      %v667 = vrot.slane %v282, 1
      %v668 = vsel %vm425, %v666, %v667
      %v669 = vrot.slane %v283, 1
      %v670 = vrot.slane %v284, 1
      %v671 = vsel %vm425, %v669, %v670
      %v672 = vrot.slane %v285, 1
      %v673 = vrot.slane %v286, 1
      %v674 = vsel %vm425, %v672, %v673
      %v675 = vrot.slane %v287, 1
      %v676 = vrot.slane %v288, 1
      %v677 = vsel %vm425, %v675, %v676
      %v678 = vrot.slane %v289, 1
      %v679 = vrot.slane %v290, 1
      %v680 = vsel %vm425, %v678, %v679
      %v681 = vrot.slane %v291, 1
      %v682 = vrot.slane %v292, 1
      %v683 = vsel %vm425, %v681, %v682
      %v692 = vpack.c.bf16 %v665, %v662
      %v693 = vpack.c.bf16 %v671, %v668
      %v694 = vpack.c.bf16 %v677, %v674
      %v695 = vpack.c.bf16 %v683, %v680
      %s696 = scalar_lea.vmem %s1, 40
      %v697 = vld [vmem:[%s696] sm:$0xf]
      %v698 = vld [vmem:[%s696 + $0x4] sm:$0xf]
      %v701 = vunpack.c.l.b16 %v697
      %v702 = vunpack.c.l.b16 %v698
      %v703 = vpack.c.b16 %v702, %v701
      %v706 = vsel %vm320, %v692, 0
      %v709 = vsel %vm320, %v693, 0
      %v712 = vsel %vm320, %v694, 0
      %v715 = vsel %vm320, %v695, 0
      %717 = vmatpush.bf16.msra.mxu0 0
      %718 = vmatpush.bf16.msra.mxu0 0
      %719 = vmatpush.bf16.msra.mxu0 0
      %720 = vmatpush.bf16.msra.mxu0 0
      %721 = vmatpush.bf16.msra.mxu0 0
      %722 = vmatpush.bf16.msra.mxu0 0
      %723 = vmatpush.bf16.msra.mxu0 0
      %724 = vmatpush.bf16.msra.mxu0 %v703
      %725 = vmatmul.bf16.gmra.mxu0 %v706
      %v726 = vpop.f32.mrf.mxu0
      %v727 = vadd.f32 0.0, %v726
      %v728 = vpop.f32.mrf.mxu0
      %v729 = vadd.f32 0.0, %v728
      %730 = vmatmul.bf16.gmra.mxu0 %v709
      %v731 = vpop.f32.mrf.mxu0
      %v732 = vadd.f32 0.0, %v731
      %v733 = vpop.f32.mrf.mxu0
      %v734 = vadd.f32 0.0, %v733
      %735 = vmatmul.bf16.gmra.mxu0 %v712
      %v736 = vpop.f32.mrf.mxu0
      %v737 = vadd.f32 0.0, %v736
      %v738 = vpop.f32.mrf.mxu0
      %v739 = vadd.f32 0.0, %v738
      %740 = vmatmul.bf16.gmra.mxu0 %v715
      %v741 = vpop.f32.mrf.mxu0
      %v742 = vadd.f32 0.0, %v741
      %v743 = vpop.f32.mrf.mxu0
      %v744 = vadd.f32 0.0, %v743
      %745 = vdwg.mxu0
      %v746 = vadd.f32 %v636, %v727
      %v747 = vadd.f32 %v637, %v729
      %v748 = vadd.f32 %v638, %v732
      %v749 = vadd.f32 %v639, %v734
      %v750 = vadd.f32 %v640, %v737
      %v751 = vadd.f32 %v641, %v739
      %v752 = vadd.f32 %v642, %v742
      %v753 = vadd.f32 %v643, %v744
      %v754 = vpack.c.bf16 %v254, %v252
      %v755 = vpack.c.bf16 %v258, %v256
      %v756 = vpack.c.bf16 %v262, %v260
      %v757 = vpack.c.bf16 %v266, %v264
      %s758 = scalar_lea.vmem %s1, 48
      %v759 = vld [vmem:[%s758] sm:$0xf]
      %v760 = vld [vmem:[%s758 + $0x4] sm:$0xf]
      %v763 = vunpack.c.l.b16 %v759
      %v764 = vunpack.c.l.b16 %v760
      %v765 = vpack.c.b16 %v764, %v763
      %v768 = vsel %vm320, %v754, 0
      %v771 = vsel %vm320, %v755, 0
      %v774 = vsel %vm320, %v756, 0
      %v777 = vsel %vm320, %v757, 0
      %779 = vmatpush.bf16.msra.mxu0 0
      %780 = vmatpush.bf16.msra.mxu0 0
      %781 = vmatpush.bf16.msra.mxu0 0
      %782 = vmatpush.bf16.msra.mxu0 0
      %783 = vmatpush.bf16.msra.mxu0 0
      %784 = vmatpush.bf16.msra.mxu0 0
      %785 = vmatpush.bf16.msra.mxu0 0
      %786 = vmatpush.bf16.msra.mxu0 %v765
      %787 = vmatmul.bf16.gmra.mxu0 %v768
      %v788 = vpop.f32.mrf.mxu0
      %v789 = vadd.f32 0.0, %v788
      %v790 = vpop.f32.mrf.mxu0
      %v791 = vadd.f32 0.0, %v790
      %792 = vmatmul.bf16.gmra.mxu0 %v771
      %v793 = vpop.f32.mrf.mxu0
      %v794 = vadd.f32 0.0, %v793
      %v795 = vpop.f32.mrf.mxu0
      %v796 = vadd.f32 0.0, %v795
      %797 = vmatmul.bf16.gmra.mxu0 %v774
      %v798 = vpop.f32.mrf.mxu0
      %v799 = vadd.f32 0.0, %v798
      %v800 = vpop.f32.mrf.mxu0
      %v801 = vadd.f32 0.0, %v800
      %802 = vmatmul.bf16.gmra.mxu0 %v777
      %v803 = vpop.f32.mrf.mxu0
      %v804 = vadd.f32 0.0, %v803
      %v805 = vpop.f32.mrf.mxu0
      %v806 = vadd.f32 0.0, %v805
      %807 = vdwg.mxu0
      %v808 = vadd.f32 %v746, %v789
      %v809 = vadd.f32 %v747, %v791
      %v810 = vadd.f32 %v748, %v794
      %v811 = vadd.f32 %v749, %v796
      %v812 = vadd.f32 %v750, %v799
      %v813 = vadd.f32 %v751, %v801
      %v814 = vadd.f32 %v752, %v804
      %v815 = vadd.f32 %v753, %v806
      %v816 = vpack.c.bf16 %v270, %v269
      %v817 = vpack.c.bf16 %v272, %v271
      %v818 = vpack.c.bf16 %v274, %v273
      %v819 = vpack.c.bf16 %v276, %v275
      %s820 = scalar_lea.vmem %s1, 56
      %v821 = vld [vmem:[%s820] sm:$0xf]
      %v822 = vld [vmem:[%s820 + $0x4] sm:$0xf]
      %v825 = vunpack.c.l.b16 %v821
      %v826 = vunpack.c.l.b16 %v822
      %v827 = vpack.c.b16 %v826, %v825
      %v830 = vsel %vm320, %v816, 0
      %v833 = vsel %vm320, %v817, 0
      %v836 = vsel %vm320, %v818, 0
      %v839 = vsel %vm320, %v819, 0
      %841 = vmatpush.bf16.msra.mxu0 0
      %842 = vmatpush.bf16.msra.mxu0 0
      %843 = vmatpush.bf16.msra.mxu0 0
      %844 = vmatpush.bf16.msra.mxu0 0
      %845 = vmatpush.bf16.msra.mxu0 0
      %846 = vmatpush.bf16.msra.mxu0 0
      %847 = vmatpush.bf16.msra.mxu0 0
      %848 = vmatpush.bf16.msra.mxu0 %v827
      %849 = vmatmul.bf16.gmra.mxu0 %v830
      %v850 = vpop.f32.mrf.mxu0
      %v851 = vadd.f32 0.0, %v850
      %v852 = vpop.f32.mrf.mxu0
      %v853 = vadd.f32 0.0, %v852
      %854 = vmatmul.bf16.gmra.mxu0 %v833
      %v855 = vpop.f32.mrf.mxu0
      %v856 = vadd.f32 0.0, %v855
      %v857 = vpop.f32.mrf.mxu0
      %v858 = vadd.f32 0.0, %v857
      %859 = vmatmul.bf16.gmra.mxu0 %v836
      %v860 = vpop.f32.mrf.mxu0
      %v861 = vadd.f32 0.0, %v860
      %v862 = vpop.f32.mrf.mxu0
      %v863 = vadd.f32 0.0, %v862
      %864 = vmatmul.bf16.gmra.mxu0 %v839
      %v865 = vpop.f32.mrf.mxu0
      %v866 = vadd.f32 0.0, %v865
      %v867 = vpop.f32.mrf.mxu0
      %v868 = vadd.f32 0.0, %v867
      %869 = vdwg.mxu0
      %v870 = vadd.f32 %v808, %v851
      %v871 = vadd.f32 %v809, %v853
      %v872 = vadd.f32 %v810, %v856
      %v873 = vadd.f32 %v811, %v858
      %v874 = vadd.f32 %v812, %v861
      %v875 = vadd.f32 %v813, %v863
      %v876 = vadd.f32 %v814, %v866
      %v877 = vadd.f32 %v815, %v868
      %v880 = vrot.slane %v266, 1
      %v881 = vrot.slane %v267, 1
      %v882 = vsel %vm425, %v880, %v881
      %v884 = vpack.c.bf16 %v434, %v431
      %v885 = vpack.c.bf16 %v440, %v437
      %v886 = vpack.c.bf16 %v446, %v443
      %v887 = vpack.c.bf16 %v882, %v449
      %s888 = scalar_lea.vmem %s1, 64
      %v889 = vld [vmem:[%s888] sm:$0xf]
      %v890 = vld [vmem:[%s888 + $0x4] sm:$0xf]
      %v893 = vunpack.c.l.b16 %v889
      %v894 = vunpack.c.l.b16 %v890
      %v895 = vpack.c.b16 %v894, %v893
      %v898 = vsel %vm320, %v884, 0
      %v901 = vsel %vm320, %v885, 0
      %v904 = vsel %vm320, %v886, 0
      %v907 = vsel %vm320, %v887, 0
      %909 = vmatpush.bf16.msra.mxu0 0
      %910 = vmatpush.bf16.msra.mxu0 0
      %911 = vmatpush.bf16.msra.mxu0 0
      %912 = vmatpush.bf16.msra.mxu0 0
      %913 = vmatpush.bf16.msra.mxu0 0
      %914 = vmatpush.bf16.msra.mxu0 0
      %915 = vmatpush.bf16.msra.mxu0 0
      %916 = vmatpush.bf16.msra.mxu0 %v895
      %917 = vmatmul.bf16.gmra.mxu0 %v898
      %v918 = vpop.f32.mrf.mxu0
      %v919 = vadd.f32 0.0, %v918
      %v920 = vpop.f32.mrf.mxu0
      %v921 = vadd.f32 0.0, %v920
      %922 = vmatmul.bf16.gmra.mxu0 %v901
      %v923 = vpop.f32.mrf.mxu0
      %v924 = vadd.f32 0.0, %v923
      %v925 = vpop.f32.mrf.mxu0
      %v926 = vadd.f32 0.0, %v925
      %927 = vmatmul.bf16.gmra.mxu0 %v904
      %v928 = vpop.f32.mrf.mxu0
      %v929 = vadd.f32 0.0, %v928
      %v930 = vpop.f32.mrf.mxu0
      %v931 = vadd.f32 0.0, %v930
      %932 = vmatmul.bf16.gmra.mxu0 %v907
      %v933 = vpop.f32.mrf.mxu0
      %v934 = vadd.f32 0.0, %v933
      %v935 = vpop.f32.mrf.mxu0
      %v936 = vadd.f32 0.0, %v935
      %937 = vdwg.mxu0
      %v938 = vadd.f32 %v870, %v919
      %v939 = vadd.f32 %v871, %v921
      %v940 = vadd.f32 %v872, %v924
      %v941 = vadd.f32 %v873, %v926
      %v942 = vadd.f32 %v874, %v929
      %v943 = vadd.f32 %v875, %v931
      %v944 = vadd.f32 %v876, %v934
      %v945 = vadd.f32 %v877, %v936
      %v946 = vld [vmem:[%s2] sm:$0x1]
      %v947 = vld [vmem:[%s3] sm:$0x1]
      %vm948 = vcmask 261120
      %v949 = vsel %vm948, %v938, 0.0
      %v950 = vsel %vm948, %v939, 0.0
      %v951 = vadd.f32 %v949, %v950
      %v952 = vsel %vm948, %v940, 0.0
      %v953 = vadd.f32 %v951, %v952
      %v954 = vsel %vm948, %v941, 0.0
      %v955 = vadd.f32 %v953, %v954
      %v956 = vsel %vm948, %v942, 0.0
      %v957 = vadd.f32 %v955, %v956
      %v958 = vsel %vm948, %v943, 0.0
      %v959 = vadd.f32 %v957, %v958
      %v960 = vsel %vm948, %v944, 0.0
      %v961 = vadd.f32 %v959, %v960
      %v962 = vsel %vm948, %v945, 0.0
      %v963 = vadd.f32 %v961, %v962
      %v964 = vrot.slane %v963, 4
      %v965 = vadd.f32 %v963, %v964
      %v966 = vrot.slane %v965, 2
      %v967 = vadd.f32 %v965, %v966
      %v968 = vrot.slane %v967, 1
      %v969 = vadd.f32 %v967, %v968
      %v970 = vmul.f32 %v938, %v938
      %v971 = vmul.f32 %v939, %v939
      %v972 = vmul.f32 %v940, %v940
      %v973 = vmul.f32 %v941, %v941
      %v974 = vmul.f32 %v942, %v942
      %v975 = vmul.f32 %v943, %v943
      %v976 = vmul.f32 %v944, %v944
      %v977 = vmul.f32 %v945, %v945
      %v978 = vsel %vm948, %v970, 0.0
      %v979 = vsel %vm948, %v971, 0.0
      %v980 = vadd.f32 %v978, %v979
      %v981 = vsel %vm948, %v972, 0.0
      %v982 = vadd.f32 %v980, %v981
      %v983 = vsel %vm948, %v973, 0.0
      %v984 = vadd.f32 %v982, %v983
      %v985 = vsel %vm948, %v974, 0.0
      %v986 = vadd.f32 %v984, %v985
      %v987 = vsel %vm948, %v975, 0.0
      %v988 = vadd.f32 %v986, %v987
      %v989 = vsel %vm948, %v976, 0.0
      %v990 = vadd.f32 %v988, %v989
      %v991 = vsel %vm948, %v977, 0.0
      %v992 = vadd.f32 %v990, %v991
      %v993 = vrot.slane %v992, 4
      %v994 = vadd.f32 %v992, %v993
      %v995 = vrot.slane %v994, 2
      %v996 = vadd.f32 %v994, %v995
      %v997 = vrot.slane %v996, 1
      %v998 = vadd.f32 %v996, %v997
      %v999 = vmul.f32 %v969, 0.015625
      %v1000 = vmul.f32 %v998, 0.015625
      %v1001 = vmul.f32 %v999, %v999
      %v1002 = vsub.f32 %v1000, %v1001
      %v1003 = vmax.f32 %v1002, 0.0
      %v1004 = vadd.f32 %v1003, 1e-05
      %v1005 = vrsqrt.pop %v1004
      %v1006 = vmul.f32 %v1005, %v1004
      %v1007 = vmul.f32 %v1006, %v1005
      %v1008 = vmul.f32 0.5, %v1007
      %v1009 = vsub.f32 1.5, %v1008
      %v1010 = vmul.f32 %v1005, %v1009
      %vm1011 = vweird.f32 %v1004
      %vm1012 = vweird.f32 %v1005
      %vm1013 = vmor %vm1011, %vm1012
      %v1014 = vsel %vm1013, %v1005, %v1010
      %v1015 = vsub.f32 %v938, %v999
      %v1016 = vsub.f32 %v939, %v999
      %v1017 = vsub.f32 %v940, %v999
      %v1018 = vsub.f32 %v941, %v999
      %v1019 = vsub.f32 %v942, %v999
      %v1020 = vsub.f32 %v943, %v999
      %v1021 = vsub.f32 %v944, %v999
      %v1022 = vsub.f32 %v945, %v999
      %v1023 = vmul.f32 %v1015, %v1014
      %v1024 = vmul.f32 %v1016, %v1014
      %v1025 = vmul.f32 %v1017, %v1014
      %v1026 = vmul.f32 %v1018, %v1014
      %v1027 = vmul.f32 %v1019, %v1014
      %v1028 = vmul.f32 %v1020, %v1014
      %v1029 = vmul.f32 %v1021, %v1014
      %v1030 = vmul.f32 %v1022, %v1014
      %v1032 = vperm.slane %v946, 0
      %v1034 = vmul.f32 %v1023, %v1032
      %v1035 = vmul.f32 %v1024, %v1032
      %v1036 = vmul.f32 %v1025, %v1032
      %v1037 = vmul.f32 %v1026, %v1032
      %v1038 = vmul.f32 %v1027, %v1032
      %v1039 = vmul.f32 %v1028, %v1032
      %v1040 = vmul.f32 %v1029, %v1032
      %v1041 = vmul.f32 %v1030, %v1032
      %v1043 = vperm.slane %v947, 0
      %v1045 = vadd.f32 %v1034, %v1043
      %v1046 = vadd.f32 %v1035, %v1043
      %v1047 = vadd.f32 %v1036, %v1043
      %v1048 = vadd.f32 %v1037, %v1043
      %v1049 = vadd.f32 %v1038, %v1043
      %v1050 = vadd.f32 %v1039, %v1043
      %v1051 = vadd.f32 %v1040, %v1043
      %v1052 = vadd.f32 %v1041, %v1043
      %v1053 = vmax.f32 %v1045, 0.0
      %v1054 = vmax.f32 %v1046, 0.0
      %v1055 = vmax.f32 %v1047, 0.0
      %v1056 = vmax.f32 %v1048, 0.0
      %v1057 = vmax.f32 %v1049, 0.0
      %v1058 = vmax.f32 %v1050, 0.0
      %v1059 = vmax.f32 %v1051, 0.0
      %v1060 = vmax.f32 %v1052, 0.0
      %v1061 = vpack.c.bf16 %v1053, %v1053
      %v1062 = vpack.c.bf16 %v1054, %v1054
      %v1063 = vpack.c.bf16 %v1055, %v1055
      %v1064 = vpack.c.bf16 %v1056, %v1056
      %v1065 = vpack.c.bf16 %v1057, %v1057
      %v1066 = vpack.c.bf16 %v1058, %v1058
      %v1067 = vpack.c.bf16 %v1059, %v1059
      %v1068 = vpack.c.bf16 %v1060, %v1060
      %vm1069 = vcmask 257024
      %1070 = vst.msk [vmem:[%s197] sm:$0xf] %vm1069, %v1061
      %1071 = vst.msk [vmem:[%s197 + $0x4] sm:$0xf] %vm1069, %v1062
      %1072 = vst.msk [vmem:[%s197 + $0x8] sm:$0xf] %vm1069, %v1063
      %1073 = vst.msk [vmem:[%s197 + $0xc] sm:$0xf] %vm1069, %v1064
      %1074 = vst.msk [vmem:[%s197 + $0x10] sm:$0xf] %vm1069, %v1065
      %1075 = vst.msk [vmem:[%s197 + $0x14] sm:$0xf] %vm1069, %v1066
      %1076 = vst.msk [vmem:[%s197 + $0x18] sm:$0xf] %vm1069, %v1067
      %1077 = vst.msk [vmem:[%s197 + $0x1c] sm:$0xf] %vm1069, %v1068
      %p1078 = scmp.lt.s32.totalorder %s15, 1
      %s1079 = scalar_select %p1078, %s15, 1
      %s1080 = smul.addr %s1079, 8
      %s1081 = smul.addr %s1080, 4
      %s1082 = scalar_lea.vmem %s4, %s1081
      // Predicated region
      $region37: #{forward.4} parent=35 // pred_check
        %p1083 = pneg %p122
      $region38: #{forward.4} parent=35 // pred_check_branch
        %1085 = sbr.rel (%p1083) target = $region40
      $region39: #{forward.4} parent=35 // pred_region
        _
      $region40: #{forward.4} parent=35 // pred_fallthru
        _
    $region36: #{forward.4} parent=5 // pred_fallthru
      _
    %p1086 = scmp.le.s32.totalorder 2, %s10
    // Predicated region
    $region41: #{forward.4} parent=5 // pred_check
      %p1087 = pneg %p1086
    $region42: #{forward.4} parent=5 // pred_check_branch
      %1089 = sbr.rel (%p1087) target = $region44
    $region43: #{forward.4} parent=5 // pred_region
      %s1090 = ssub.s32 %s10, 2
      // Predicated region
      $region45: #{forward.4} parent=43 // pred_check
        %p1091 = pneg %p128
      $region46: #{forward.4} parent=43 // pred_check_branch
        %1093 = sbr.rel (%p1091) target = $region48
      $region47: #{forward.4} parent=43 // pred_region
        %p1094 = scmp.lt.s32.totalorder %s16, 1
        %s1095 = scalar_select %p1094, %s16, 1
        %s1096 = smul.addr %s1095, 8
        %s1097 = smul.addr %s1096, 4
        %s1098 = scalar_lea.vmem %s4, %s1097
      $region48: #{forward.4} parent=43 // pred_fallthru
        _
    $region44: #{forward.4} parent=5 // pred_fallthru
      _
  $region6: #{forward.4} parent=0 // loop_footer
    %s14 = sadd.s32 1, %s10
  $region7: #{forward.4} parent=0 // loop_footer_branch
    %9 = sbr.rel target = $region3
  $region8: #{forward.4} parent=0 // loop_exit
    _

// kernel: forward.5
$region0: #{forward.5}
  #allocation0 [shape = 'u32[]', space=smem, size = 0x4, offset = 0x4, fixed_abs, tag = 'smem constant byte address 0x4 - core index']
  #allocation1 [shape = 'u32[72,128]{1,0:T(1,128)}', space=vmem, size = 0x9000, scoped, tag = 'internal scratch']
  %s0 = inlined_call_operand.vmem [shape: bf16[2,10,10,32], index: 0, kind: input, shape index: {}]
  %s1 = inlined_call_operand.vmem [shape: bf16[9,32,32], index: 1, kind: input, shape index: {}]
  %s2 = inlined_call_operand.vmem [shape: f32[1,32], index: 2, kind: input, shape index: {}]
  %s3 = inlined_call_operand.vmem [shape: f32[1,32], index: 3, kind: input, shape index: {}]
  %s4 = inlined_call_operand.vmem [shape: bf16[2,64,16], index: 4, kind: input, shape index: {}]
  %s5 = inlined_call_operand.vmem [shape: bf16[16,32], index: 5, kind: input, shape index: {}]
  %s6 = inlined_call_operand.vmem [shape: f32[1,32], index: 6, kind: input, shape index: {}]
  %s7 = inlined_call_operand.vmem [shape: f32[1,32], index: 7, kind: input, shape index: {}]
  %s8 = inlined_call_operand.vmem [shape: f32[2,64,32], index: 8, kind: output, shape index: {}]
  %s9 = sld [smem:[#allocation0]]
  $region65: #{forward.5} parent=0
    _
  %s11 = ssub.s32 1, %s9
  %s12 = scalar_select 0, %s11, %s9
  loop: start=0, step=1, limit=4
  $region2: #{forward.5} parent=0 // loop_pre_header
    _
  $region3: #{forward.5} parent=0 // loop_header
    %s14 = sphi 0, %s18
    %p15 = scmp.ge.s32.totalorder %s14, 4
    %s24 = sphi 0, %s26
    %s27 = sphi 0, %s24
    %s28 = sphi 0, %s27
    %s44 = sphi 0, %s28
    %s48 = sphi 0, %s48
    %s50 = sphi 0, %s48
    %s51 = sphi 0, %s50
    %s65 = sphi 0, %s51
    %s69 = sphi 0, %s69
    %s71 = sphi 0, %s69
    %s72 = sphi 0, %s71
    %s86 = sphi 0, %s72
    %s90 = sphi 0, %s90
    %s92 = sphi 0, %s90
    %s93 = sphi 0, %s92
    %s107 = sphi 0, %s93
    %s113 = sphi 0, %s115
    %s116 = sphi 0, %s113
    %s117 = sphi 0, %s116
    %s133 = sphi 0, %s117
    %s137 = sphi 0, %s137
    %s139 = sphi 0, %s137
    %s140 = sphi 0, %s139
    %s154 = sphi 0, %s140
    %s158 = sphi 0, %s158
    %s160 = sphi 0, %s158
    %s161 = sphi 0, %s160
    %s175 = sphi 0, %s161
    %s179 = sphi 0, %s179
    %s181 = sphi 0, %s179
    %s182 = sphi 0, %s181
    %s196 = sphi 0, %s182
    %s202 = sphi 0, %s204
    %s205 = sphi 0, %s202
    %s206 = sphi 0, %s205
    %s222 = sphi 0, %s206
  $region4: #{forward.5} parent=0 // loop_header_branch
    %17 = sbr.rel (%p15) target = $region8
  $region5: #{forward.5} parent=0 // loop_body
    %s19 = ssub.s32 %s14, 1
    %s20 = ssub.s32 %s14, 2
    %s21 = sadd.s32 %s14, 1
    %s22 = ssub.s32 %s14, %s21
    %p23 = scmp.eq.s32.totalorder %s22, 0
    %s25 = sadd.s32 %s24, 1
    %s26 = scalar_select %p23, %s24, %s25
    %p29 = pneg %p23
    %p30 = scmp.eq.s32.totalorder %s14, 1
    %p31 = por %p29, %p30
    %p32 = scmp.ne.s32.totalorder %s24, %s27
    %p33 = scmp.eq.s32.totalorder %s14, 0
    %p34 = por %p32, %p33
    %p35 = scmp.ne.s32.totalorder %s24, %s27
    %p36 = scmp.eq.s32.totalorder %s19, 1
    %p37 = por %p35, %p36
    %p38 = scmp.ne.s32.totalorder %s27, %s28
    %p39 = scmp.eq.s32.totalorder %s19, 0
    %p40 = por %p38, %p39
    %p41 = scmp.ne.s32.totalorder %s27, %s28
    %p42 = scmp.eq.s32.totalorder %s20, 1
    %p43 = por %p41, %p42
    %p45 = scmp.ne.s32.totalorder %s28, %s44
    %p46 = scmp.eq.s32.totalorder %s20, 0
    %p47 = por %p45, %p46
    %s49 = sadd.s32 %s48, 1
    %p52 = scmp.eq.s32.totalorder %s14, 1
    %p53 = scmp.ne.s32.totalorder %s48, %s50
    %p54 = scmp.eq.s32.totalorder %s14, 0
    %p55 = por %p53, %p54
    %p56 = scmp.ne.s32.totalorder %s48, %s50
    %p57 = scmp.eq.s32.totalorder %s19, 1
    %p58 = por %p56, %p57
    %p59 = scmp.ne.s32.totalorder %s50, %s51
    %p60 = scmp.eq.s32.totalorder %s19, 0
    %p61 = por %p59, %p60
    %p62 = scmp.ne.s32.totalorder %s50, %s51
    %p63 = scmp.eq.s32.totalorder %s20, 1
    %p64 = por %p62, %p63
    %p66 = scmp.ne.s32.totalorder %s51, %s65
    %p67 = scmp.eq.s32.totalorder %s20, 0
    %p68 = por %p66, %p67
    %s70 = sadd.s32 %s69, 1
    %p73 = scmp.eq.s32.totalorder %s14, 1
    %p74 = scmp.ne.s32.totalorder %s69, %s71
    %p75 = scmp.eq.s32.totalorder %s14, 0
    %p76 = por %p74, %p75
    %p77 = scmp.ne.s32.totalorder %s69, %s71
    %p78 = scmp.eq.s32.totalorder %s19, 1
    %p79 = por %p77, %p78
    %p80 = scmp.ne.s32.totalorder %s71, %s72
    %p81 = scmp.eq.s32.totalorder %s19, 0
    %p82 = por %p80, %p81
    %p83 = scmp.ne.s32.totalorder %s71, %s72
    %p84 = scmp.eq.s32.totalorder %s20, 1
    %p85 = por %p83, %p84
    %p87 = scmp.ne.s32.totalorder %s72, %s86
    %p88 = scmp.eq.s32.totalorder %s20, 0
    %p89 = por %p87, %p88
    %s91 = sadd.s32 %s90, 1
    %p94 = scmp.eq.s32.totalorder %s14, 1
    %p95 = scmp.ne.s32.totalorder %s90, %s92
    %p96 = scmp.eq.s32.totalorder %s14, 0
    %p97 = por %p95, %p96
    %p98 = scmp.ne.s32.totalorder %s90, %s92
    %p99 = scmp.eq.s32.totalorder %s19, 1
    %p100 = por %p98, %p99
    %p101 = scmp.ne.s32.totalorder %s92, %s93
    %p102 = scmp.eq.s32.totalorder %s19, 0
    %p103 = por %p101, %p102
    %p104 = scmp.ne.s32.totalorder %s92, %s93
    %p105 = scmp.eq.s32.totalorder %s20, 1
    %p106 = por %p104, %p105
    %p108 = scmp.ne.s32.totalorder %s93, %s107
    %p109 = scmp.eq.s32.totalorder %s20, 0
    %p110 = por %p108, %p109
    %s111 = ssub.s32 %s14, %s21
    %p112 = scmp.eq.s32.totalorder %s111, 0
    %s114 = sadd.s32 %s113, 1
    %s115 = scalar_select %p112, %s113, %s114
    %p118 = pneg %p112
    %p119 = scmp.eq.s32.totalorder %s14, 1
    %p120 = por %p118, %p119
    %p121 = scmp.ne.s32.totalorder %s113, %s116
    %p122 = scmp.eq.s32.totalorder %s14, 0
    %p123 = por %p121, %p122
    %p124 = scmp.ne.s32.totalorder %s113, %s116
    %p125 = scmp.eq.s32.totalorder %s19, 1
    %p126 = por %p124, %p125
    %p127 = scmp.ne.s32.totalorder %s116, %s117
    %p128 = scmp.eq.s32.totalorder %s19, 0
    %p129 = por %p127, %p128
    %p130 = scmp.ne.s32.totalorder %s116, %s117
    %p131 = scmp.eq.s32.totalorder %s20, 1
    %p132 = por %p130, %p131
    %p134 = scmp.ne.s32.totalorder %s117, %s133
    %p135 = scmp.eq.s32.totalorder %s20, 0
    %p136 = por %p134, %p135
    %s138 = sadd.s32 %s137, 1
    %p141 = scmp.eq.s32.totalorder %s14, 1
    %p142 = scmp.ne.s32.totalorder %s137, %s139
    %p143 = scmp.eq.s32.totalorder %s14, 0
    %p144 = por %p142, %p143
    %p145 = scmp.ne.s32.totalorder %s137, %s139
    %p146 = scmp.eq.s32.totalorder %s19, 1
    %p147 = por %p145, %p146
    %p148 = scmp.ne.s32.totalorder %s139, %s140
    %p149 = scmp.eq.s32.totalorder %s19, 0
    %p150 = por %p148, %p149
    %p151 = scmp.ne.s32.totalorder %s139, %s140
    %p152 = scmp.eq.s32.totalorder %s20, 1
    %p153 = por %p151, %p152
    %p155 = scmp.ne.s32.totalorder %s140, %s154
    %p156 = scmp.eq.s32.totalorder %s20, 0
    %p157 = por %p155, %p156
    %s159 = sadd.s32 %s158, 1
    %p162 = scmp.eq.s32.totalorder %s14, 1
    %p163 = scmp.ne.s32.totalorder %s158, %s160
    %p164 = scmp.eq.s32.totalorder %s14, 0
    %p165 = por %p163, %p164
    %p166 = scmp.ne.s32.totalorder %s158, %s160
    %p167 = scmp.eq.s32.totalorder %s19, 1
    %p168 = por %p166, %p167
    %p169 = scmp.ne.s32.totalorder %s160, %s161
    %p170 = scmp.eq.s32.totalorder %s19, 0
    %p171 = por %p169, %p170
    %p172 = scmp.ne.s32.totalorder %s160, %s161
    %p173 = scmp.eq.s32.totalorder %s20, 1
    %p174 = por %p172, %p173
    %p176 = scmp.ne.s32.totalorder %s161, %s175
    %p177 = scmp.eq.s32.totalorder %s20, 0
    %p178 = por %p176, %p177
    %s180 = sadd.s32 %s179, 1
    %p183 = scmp.eq.s32.totalorder %s14, 1
    %p184 = scmp.ne.s32.totalorder %s179, %s181
    %p185 = scmp.eq.s32.totalorder %s14, 0
    %p186 = por %p184, %p185
    %p187 = scmp.ne.s32.totalorder %s179, %s181
    %p188 = scmp.eq.s32.totalorder %s19, 1
    %p189 = por %p187, %p188
    %p190 = scmp.ne.s32.totalorder %s181, %s182
    %p191 = scmp.eq.s32.totalorder %s19, 0
    %p192 = por %p190, %p191
    %p193 = scmp.ne.s32.totalorder %s181, %s182
    %p194 = scmp.eq.s32.totalorder %s20, 1
    %p195 = por %p193, %p194
    %p197 = scmp.ne.s32.totalorder %s182, %s196
    %p198 = scmp.eq.s32.totalorder %s20, 0
    %p199 = por %p197, %p198
    %s200 = ssub.s32 %s14, %s21
    %p201 = scmp.eq.s32.totalorder %s200, 0
    %s203 = sadd.s32 %s202, 1
    %s204 = scalar_select %p201, %s202, %s203
    %p207 = pneg %p201
    %p208 = scmp.eq.s32.totalorder %s14, 1
    %p209 = por %p207, %p208
    %p210 = scmp.ne.s32.totalorder %s202, %s205
    %p211 = scmp.eq.s32.totalorder %s14, 0
    %p212 = por %p210, %p211
    %p213 = scmp.ne.s32.totalorder %s202, %s205
    %p214 = scmp.eq.s32.totalorder %s19, 1
    %p215 = por %p213, %p214
    %p216 = scmp.ne.s32.totalorder %s205, %s206
    %p217 = scmp.eq.s32.totalorder %s19, 0
    %p218 = por %p216, %p217
    %p219 = scmp.ne.s32.totalorder %s205, %s206
    %p220 = scmp.eq.s32.totalorder %s20, 1
    %p221 = por %p219, %p220
    %p223 = scmp.ne.s32.totalorder %s206, %s222
    %p224 = scmp.eq.s32.totalorder %s20, 0
    %p225 = por %p223, %p224
    %p226 = scmp.le.s32.totalorder 1, %s14
    %p227 = scmp.lt.s32.totalorder %s14, 3
    %p228 = pnand %p226, %p227
    %p229 = pneg %p228
    // Predicated region
    $region9: #{forward.5} parent=5 // pred_check
      _
    $region10: #{forward.5} parent=5 // pred_check_branch
      %231 = sbr.rel (%p228) target = $region12
    $region11: #{forward.5} parent=5 // pred_region
      %s232 = ssub.s32 %s14, 1
      // Predicated region
      $region13: #{forward.5} parent=11 // pred_check
        %p233 = pneg %p61
      $region14: #{forward.5} parent=11 // pred_check_branch
        %235 = sbr.rel (%p233) target = $region16
      $region15: #{forward.5} parent=11 // pred_region
        _
      $region16: #{forward.5} parent=11 // pred_fallthru
        _
      // Predicated region
      $region17: #{forward.5} parent=11 // pred_check
        %p236 = pneg %p82
      $region18: #{forward.5} parent=11 // pred_check_branch
        %238 = sbr.rel (%p236) target = $region20
      $region19: #{forward.5} parent=11 // pred_region
        _
      $region20: #{forward.5} parent=11 // pred_fallthru
        _
      // Predicated region
      $region21: #{forward.5} parent=11 // pred_check
        %p239 = pneg %p103
      $region22: #{forward.5} parent=11 // pred_check_branch
        %241 = sbr.rel (%p239) target = $region24
      $region23: #{forward.5} parent=11 // pred_region
        _
      $region24: #{forward.5} parent=11 // pred_fallthru
        _
      // Predicated region
      $region25: #{forward.5} parent=11 // pred_check
        %p242 = pneg %p150
      $region26: #{forward.5} parent=11 // pred_check_branch
        %244 = sbr.rel (%p242) target = $region28
      $region27: #{forward.5} parent=11 // pred_region
        _
      $region28: #{forward.5} parent=11 // pred_fallthru
        _
      // Predicated region
      $region29: #{forward.5} parent=11 // pred_check
        %p245 = pneg %p171
      $region30: #{forward.5} parent=11 // pred_check_branch
        %247 = sbr.rel (%p245) target = $region32
      $region31: #{forward.5} parent=11 // pred_region
        _
      $region32: #{forward.5} parent=11 // pred_fallthru
        _
      // Predicated region
      $region33: #{forward.5} parent=11 // pred_check
        %p248 = pneg %p192
      $region34: #{forward.5} parent=11 // pred_check_branch
        %250 = sbr.rel (%p248) target = $region36
      $region35: #{forward.5} parent=11 // pred_region
        _
      $region36: #{forward.5} parent=11 // pred_fallthru
        _
    $region12: #{forward.5} parent=5 // pred_fallthru
      _
    %p251 = scmp.lt.s32.totalorder %s14, 2
    // Predicated region
    $region37: #{forward.5} parent=5 // pred_check
      %p252 = pneg %p251
    $region38: #{forward.5} parent=5 // pred_check_branch
      %254 = sbr.rel (%p252) target = $region40
    $region39: #{forward.5} parent=5 // pred_region
      // Predicated region
      $region41: #{forward.5} parent=39 // pred_check
        %p255 = pneg %p34
      $region42: #{forward.5} parent=39 // pred_check_branch
        %257 = sbr.rel (%p255) target = $region44
      $region43: #{forward.5} parent=39 // pred_region
        %p258 = scmp.lt.s32.totalorder %s14, 1
        %s259 = scalar_select %p258, %s14, 1
        %s260 = smul.addr %s259, 20
        %s261 = smul.addr %s260, 4
        %s262 = scalar_lea.vmem %s0, %s261
      $region44: #{forward.5} parent=39 // pred_fallthru
        _
      // Predicated region
      $region45: #{forward.5} parent=39 // pred_check
        %p263 = pneg %p123
      $region46: #{forward.5} parent=39 // pred_check_branch
        %265 = sbr.rel (%p263) target = $region48
      $region47: #{forward.5} parent=39 // pred_region
        %p266 = scmp.lt.s32.totalorder %s14, 1
        %s267 = scalar_select %p266, %s14, 1
        %s268 = smul.addr %s267, 8
        %s269 = smul.addr %s268, 4
        %s270 = scalar_lea.vmem %s4, %s269
      $region48: #{forward.5} parent=39 // pred_fallthru
        _
    $region40: #{forward.5} parent=5 // pred_fallthru
      _
    %p271 = scmp.le.s32.totalorder 1, %s14
    %p272 = scmp.lt.s32.totalorder %s14, 3
    %p273 = pnand %p271, %p272
    %p274 = pneg %p273
    // Predicated region
    $region49: #{forward.5} parent=5 // pred_check
      _
    $region50: #{forward.5} parent=5 // pred_check_branch
      %276 = sbr.rel (%p273) target = $region52
    $region51: #{forward.5} parent=5 // pred_region
      %s277 = ssub.s32 %s14, 1
      %p278 = scmp.lt.s32.totalorder %s19, 1
      %s279 = scalar_select %p278, %s19, 1
      %s280 = smul.addr %s279, 20
      %s281 = smul.addr %s280, 4
      %s282 = scalar_lea.vmem %s0, %s281
      %p283 = pneg %p40
      %p284 = pneg %p37
      %p285 = pneg %p61
      %p286 = pneg %p58
      %p287 = pneg %p82
      %p288 = pneg %p79
      %p289 = pneg %p103
      %p290 = pneg %p100
      %p291 = scmp.lt.s32.totalorder %s19, 1
      %s292 = scalar_select %p291, %s19, 1
      %s293 = smul.addr %s292, 8
      %s294 = smul.addr %s293, 4
      %s295 = scalar_lea.vmem %s4, %s294
      %p296 = pneg %p129
      %p297 = pneg %p126
      %p298 = pneg %p150
      %p299 = pneg %p147
      %p300 = pneg %p171
      %p301 = pneg %p168
      %p302 = pneg %p192
      %p303 = pneg %p189
      %p304 = pneg %p218
      %p305 = pneg %p215
      %p306 = scmp.lt.s32.totalorder %s19, 1
      %s307 = scalar_select %p306, %s19, 1
      %s308 = smul.addr %s307, 8
      %s309 = smul.addr %s308, 8
      %s310 = scalar_lea.vmem %s8, %s309
      %p311 = scmp.lt.s32.totalorder %s19, 1
      %s312 = scalar_select %p311, %s19, 1
      %s313 = smul.addr %s312, 20
      %s314 = smul.addr %s313, 4
      %s315 = scalar_lea.vmem %s0, %s314
      %p316 = scmp.lt.s32.totalorder %s19, 1
      %s317 = scalar_select %p316, %s19, 1
      %s318 = smul.addr %s317, 8
      %s319 = smul.addr %s318, 4
      %s320 = scalar_lea.vmem %s4, %s319
      %p321 = scmp.lt.s32.totalorder %s19, 1
      %s322 = scalar_select %p321, %s19, 1
      %s323 = smul.addr %s322, 8
      %s324 = smul.addr %s323, 8
      %s325 = scalar_lea.vmem %s8, %s324
      %v327 = vld [vmem:[%s315] sm:$0xf]
      %v328 = vld [vmem:[%s315 + $0x4] sm:$0x1]
      %v329 = vld [vmem:[%s315 + $0x8] sm:$0xf]
      %v330 = vld [vmem:[%s315 + $0xc] sm:$0x1]
      %v331 = vld [vmem:[%s315 + $0x10] sm:$0xf]
      %v332 = vld [vmem:[%s315 + $0x14] sm:$0x1]
      %v333 = vld [vmem:[%s315 + $0x18] sm:$0xf]
      %v334 = vld [vmem:[%s315 + $0x1c] sm:$0x1]
      %v335 = vld [vmem:[%s315 + $0x20] sm:$0xf]
      %v336 = vld [vmem:[%s315 + $0x24] sm:$0x1]
      %v337 = vld [vmem:[%s315 + $0x28] sm:$0xf]
      %v338 = vld [vmem:[%s315 + $0x2c] sm:$0x1]
      %v339 = vld [vmem:[%s315 + $0x30] sm:$0xf]
      %v340 = vld [vmem:[%s315 + $0x34] sm:$0x1]
      %v341 = vld [vmem:[%s315 + $0x38] sm:$0xf]
      %v342 = vld [vmem:[%s315 + $0x3c] sm:$0x1]
      %v343 = vld [vmem:[%s315 + $0x40] sm:$0xf]
      %v344 = vld [vmem:[%s315 + $0x44] sm:$0x1]
      %v345 = vld [vmem:[%s315 + $0x48] sm:$0xf]
      %v346 = vld [vmem:[%s315 + $0x4c] sm:$0x1]
      %v347 = vunpack.c.l.bf16 %v327
      %v348 = vunpack.c.l.bf16 %v328
      %v349 = vunpack.c.l.bf16 %v329
      %v350 = vunpack.c.l.bf16 %v330
      %v351 = vunpack.c.l.bf16 %v331
      %v352 = vunpack.c.l.bf16 %v332
      %v353 = vunpack.c.l.bf16 %v333
      %v354 = vunpack.c.l.bf16 %v334
      %v355 = vunpack.c.l.bf16 %v335
      %v356 = vunpack.c.l.bf16 %v336
      %v357 = vunpack.c.l.bf16 %v337
      %v358 = vunpack.c.l.bf16 %v338
      %v359 = vunpack.c.l.bf16 %v339
      %v360 = vunpack.c.l.bf16 %v340
      %v361 = vunpack.c.l.bf16 %v341
      %v362 = vunpack.c.l.bf16 %v342
      %v363 = vunpack.c.l.bf16 %v343
      %v364 = vunpack.c.l.bf16 %v344
      %v365 = vunpack.c.l.bf16 %v345
      %v366 = vunpack.c.l.bf16 %v346
      %v367 = vpack.c.bf16 %v349, %v347
      %v368 = vpack.c.bf16 %v353, %v351
      %v369 = vpack.c.bf16 %v357, %v355
      %v370 = vpack.c.bf16 %v361, %v359
      %v371 = vld [vmem:[%s1] sm:$0xf]
      %v372 = vld [vmem:[%s1 + $0x4] sm:$0xf]
      %v373 = vld [vmem:[%s1 + $0x8] sm:$0xf]
      %v374 = vld [vmem:[%s1 + $0xc] sm:$0xf]
      %vm391 = vcmask 1046528
      %v392 = vrot.slane %v347, 1
      %v393 = vrot.slane %v348, 1
      %v394 = vsel %vm391, %v392, %v393
      %v395 = vrot.slane %v349, 1
      %v396 = vrot.slane %v350, 1
      %v397 = vsel %vm391, %v395, %v396
      %v398 = vrot.slane %v351, 1
      %v399 = vrot.slane %v352, 1
      %v400 = vsel %vm391, %v398, %v399
      %v401 = vrot.slane %v353, 1
      %v402 = vrot.slane %v354, 1
      %v403 = vsel %vm391, %v401, %v402
      %v404 = vrot.slane %v355, 1
      %v405 = vrot.slane %v356, 1
      %v406 = vsel %vm391, %v404, %v405
      %v407 = vrot.slane %v357, 1
      %v408 = vrot.slane %v358, 1
      %v409 = vsel %vm391, %v407, %v408
      %v410 = vrot.slane %v359, 1
      %v411 = vrot.slane %v360, 1
      %v412 = vsel %vm391, %v410, %v411
      %v413 = vrot.slane %v361, 1
      %v414 = vrot.slane %v362, 1
      %v415 = vsel %vm391, %v413, %v414
      %v424 = vpack.c.bf16 %v397, %v394
      %v425 = vpack.c.bf16 %v403, %v400
      %v426 = vpack.c.bf16 %v409, %v406
      %v427 = vpack.c.bf16 %v415, %v412
      %s428 = scalar_lea.vmem %s1, 16
      %v429 = vld [vmem:[%s428] sm:$0xf]
      %v430 = vld [vmem:[%s428 + $0x4] sm:$0xf]
      %v431 = vld [vmem:[%s428 + $0x8] sm:$0xf]
      %v432 = vld [vmem:[%s428 + $0xc] sm:$0xf]
      %v437 = vunpack.c.l.b16 %v429
      %v438 = vunpack.c.l.b16 %v430
      %v439 = vunpack.c.l.b16 %v431
      %v440 = vunpack.c.l.b16 %v432
      %v441 = vpack.c.b16 %v438, %v437
      %v442 = vpack.c.b16 %v440, %v439
      %vm445 = vcmask 261120
      %v447 = vsel %vm445, %v424, 0
      %v450 = vsel %vm445, %v425, 0
      %v453 = vsel %vm445, %v426, 0
      %v456 = vsel %vm445, %v427, 0
      %458 = vmatpush.bf16.msra.mxu0 0
      %459 = vmatpush.bf16.msra.mxu0 0
      %460 = vmatpush.bf16.msra.mxu0 0
      %461 = vmatpush.bf16.msra.mxu0 0
      %462 = vmatpush.bf16.msra.mxu0 0
      %463 = vmatpush.bf16.msra.mxu0 0
      %464 = vmatpush.bf16.msra.mxu0 %v442
      %465 = vmatpush.bf16.msra.mxu0 %v441
      %466 = vmatmul.bf16.gmra.mxu0 %v447
      %v467 = vpop.f32.mrf.mxu0
      %v468 = vadd.f32 0.0, %v467
      %v469 = vpop.f32.mrf.mxu0
      %v470 = vadd.f32 0.0, %v469
      %471 = vmatmul.bf16.gmra.mxu0 %v450
      %v472 = vpop.f32.mrf.mxu0
      %v473 = vadd.f32 0.0, %v472
      %v474 = vpop.f32.mrf.mxu0
      %v475 = vadd.f32 0.0, %v474
      %476 = vmatmul.bf16.gmra.mxu0 %v453
      %v477 = vpop.f32.mrf.mxu0
      %v478 = vadd.f32 0.0, %v477
      %v479 = vpop.f32.mrf.mxu0
      %v480 = vadd.f32 0.0, %v479
      %481 = vmatmul.bf16.gmra.mxu0 %v456
      %v482 = vpop.f32.mrf.mxu0
      %v483 = vadd.f32 0.0, %v482
      %v484 = vpop.f32.mrf.mxu0
      %v485 = vadd.f32 0.0, %v484
      %486 = vdwg.mxu0
      %v491 = vunpack.c.l.b16 %v371
      %v492 = vunpack.c.l.b16 %v372
      %v493 = vunpack.c.l.b16 %v373
      %v494 = vunpack.c.l.b16 %v374
      %v495 = vpack.c.b16 %v492, %v491
      %v496 = vpack.c.b16 %v494, %v493
      %v500 = vsel %vm445, %v367, 0
      %v503 = vsel %vm445, %v368, 0
      %v506 = vsel %vm445, %v369, 0
      %v509 = vsel %vm445, %v370, 0
      %511 = vmatpush.bf16.msra.mxu0 0
      %512 = vmatpush.bf16.msra.mxu0 0
      %513 = vmatpush.bf16.msra.mxu0 0
      %514 = vmatpush.bf16.msra.mxu0 0
      %515 = vmatpush.bf16.msra.mxu0 0
      %516 = vmatpush.bf16.msra.mxu0 0
      %517 = vmatpush.bf16.msra.mxu0 %v496
      %518 = vmatpush.bf16.msra.mxu0 %v495
      %519 = vmatmul.bf16.gmra.mxu0 %v500
      %v520 = vpop.f32.mrf.mxu0
      %v521 = vadd.f32 %v468, %v520
      %v522 = vpop.f32.mrf.mxu0
      %v523 = vadd.f32 %v470, %v522
      %524 = vmatmul.bf16.gmra.mxu0 %v503
      %v525 = vpop.f32.mrf.mxu0
      %v526 = vadd.f32 %v473, %v525
      %v527 = vpop.f32.mrf.mxu0
      %v528 = vadd.f32 %v475, %v527
      %529 = vmatmul.bf16.gmra.mxu0 %v506
      %v530 = vpop.f32.mrf.mxu0
      %v531 = vadd.f32 %v478, %v530
      %v532 = vpop.f32.mrf.mxu0
      %v533 = vadd.f32 %v480, %v532
      %534 = vmatmul.bf16.gmra.mxu0 %v509
      %v535 = vpop.f32.mrf.mxu0
      %v536 = vadd.f32 %v483, %v535
      %v537 = vpop.f32.mrf.mxu0
      %v538 = vadd.f32 %v485, %v537
      %539 = vdwg.mxu0
      %vm540 = vcmask 1045504
      %v541 = vrot.slane %v347, 2
      %v542 = vrot.slane %v348, 2
      %v543 = vsel %vm540, %v541, %v542
      %v544 = vrot.slane %v349, 2
      %v545 = vrot.slane %v350, 2
      %v546 = vsel %vm540, %v544, %v545
      %v547 = vrot.slane %v351, 2
      %v548 = vrot.slane %v352, 2
      %v549 = vsel %vm540, %v547, %v548
      %v550 = vrot.slane %v353, 2
      %v551 = vrot.slane %v354, 2
      %v552 = vsel %vm540, %v550, %v551
      %v553 = vrot.slane %v355, 2
      %v554 = vrot.slane %v356, 2
      %v555 = vsel %vm540, %v553, %v554
      %v556 = vrot.slane %v357, 2
      %v557 = vrot.slane %v358, 2
      %v558 = vsel %vm540, %v556, %v557
      %v559 = vrot.slane %v359, 2
      %v560 = vrot.slane %v360, 2
      %v561 = vsel %vm540, %v559, %v560
      %v562 = vrot.slane %v361, 2
      %v563 = vrot.slane %v362, 2
      %v564 = vsel %vm540, %v562, %v563
      %v573 = vpack.c.bf16 %v546, %v543
      %v574 = vpack.c.bf16 %v552, %v549
      %v575 = vpack.c.bf16 %v558, %v555
      %v576 = vpack.c.bf16 %v564, %v561
      %s577 = scalar_lea.vmem %s1, 32
      %v578 = vld [vmem:[%s577] sm:$0xf]
      %v579 = vld [vmem:[%s577 + $0x4] sm:$0xf]
      %v580 = vld [vmem:[%s577 + $0x8] sm:$0xf]
      %v581 = vld [vmem:[%s577 + $0xc] sm:$0xf]
      %v586 = vunpack.c.l.b16 %v578
      %v587 = vunpack.c.l.b16 %v579
      %v588 = vunpack.c.l.b16 %v580
      %v589 = vunpack.c.l.b16 %v581
      %v590 = vpack.c.b16 %v587, %v586
      %v591 = vpack.c.b16 %v589, %v588
      %v595 = vsel %vm445, %v573, 0
      %v598 = vsel %vm445, %v574, 0
      %v601 = vsel %vm445, %v575, 0
      %v604 = vsel %vm445, %v576, 0
      %606 = vmatpush.bf16.msra.mxu0 0
      %607 = vmatpush.bf16.msra.mxu0 0
      %608 = vmatpush.bf16.msra.mxu0 0
      %609 = vmatpush.bf16.msra.mxu0 0
      %610 = vmatpush.bf16.msra.mxu0 0
      %611 = vmatpush.bf16.msra.mxu0 0
      %612 = vmatpush.bf16.msra.mxu0 %v591
      %613 = vmatpush.bf16.msra.mxu0 %v590
      %614 = vmatmul.bf16.gmra.mxu0 %v595
      %v615 = vpop.f32.mrf.mxu0
      %v616 = vadd.f32 0.0, %v615
      %v617 = vpop.f32.mrf.mxu0
      %v618 = vadd.f32 0.0, %v617
      %619 = vmatmul.bf16.gmra.mxu0 %v598
      %v620 = vpop.f32.mrf.mxu0
      %v621 = vadd.f32 0.0, %v620
      %v622 = vpop.f32.mrf.mxu0
      %v623 = vadd.f32 0.0, %v622
      %624 = vmatmul.bf16.gmra.mxu0 %v601
      %v625 = vpop.f32.mrf.mxu0
      %v626 = vadd.f32 0.0, %v625
      %v627 = vpop.f32.mrf.mxu0
      %v628 = vadd.f32 0.0, %v627
      %629 = vmatmul.bf16.gmra.mxu0 %v604
      %v630 = vpop.f32.mrf.mxu0
      %v631 = vadd.f32 0.0, %v630
      %v632 = vpop.f32.mrf.mxu0
      %v633 = vadd.f32 0.0, %v632
      %634 = vdwg.mxu0
      %v635 = vadd.f32 %v521, %v616
      %v636 = vadd.f32 %v523, %v618
      %v637 = vadd.f32 %v526, %v621
      %v638 = vadd.f32 %v528, %v623
      %v639 = vadd.f32 %v531, %v626
      %v640 = vadd.f32 %v533, %v628
      %v641 = vadd.f32 %v536, %v631
      %v642 = vadd.f32 %v538, %v633
      %v643 = vpack.c.bf16 %v351, %v349
      %v644 = vpack.c.bf16 %v355, %v353
      %v645 = vpack.c.bf16 %v359, %v357
      %v646 = vpack.c.bf16 %v363, %v361
      %s647 = scalar_lea.vmem %s1, 48
      %v648 = vld [vmem:[%s647] sm:$0xf]
      %v649 = vld [vmem:[%s647 + $0x4] sm:$0xf]
      %v650 = vld [vmem:[%s647 + $0x8] sm:$0xf]
      %v651 = vld [vmem:[%s647 + $0xc] sm:$0xf]
      %v656 = vunpack.c.l.b16 %v648
      %v657 = vunpack.c.l.b16 %v649
      %v658 = vunpack.c.l.b16 %v650
      %v659 = vunpack.c.l.b16 %v651
      %v660 = vpack.c.b16 %v657, %v656
      %v661 = vpack.c.b16 %v659, %v658
      %v665 = vsel %vm445, %v643, 0
      %v668 = vsel %vm445, %v644, 0
      %v671 = vsel %vm445, %v645, 0
      %v674 = vsel %vm445, %v646, 0
      %676 = vmatpush.bf16.msra.mxu0 0
      %677 = vmatpush.bf16.msra.mxu0 0
      %678 = vmatpush.bf16.msra.mxu0 0
      %679 = vmatpush.bf16.msra.mxu0 0
      %680 = vmatpush.bf16.msra.mxu0 0
      %681 = vmatpush.bf16.msra.mxu0 0
      %682 = vmatpush.bf16.msra.mxu0 %v661
      %683 = vmatpush.bf16.msra.mxu0 %v660
      %684 = vmatmul.bf16.gmra.mxu0 %v665
      %v685 = vpop.f32.mrf.mxu0
      %v686 = vadd.f32 0.0, %v685
      %v687 = vpop.f32.mrf.mxu0
      %v688 = vadd.f32 0.0, %v687
      %689 = vmatmul.bf16.gmra.mxu0 %v668
      %v690 = vpop.f32.mrf.mxu0
      %v691 = vadd.f32 0.0, %v690
      %v692 = vpop.f32.mrf.mxu0
      %v693 = vadd.f32 0.0, %v692
      %694 = vmatmul.bf16.gmra.mxu0 %v671
      %v695 = vpop.f32.mrf.mxu0
      %v696 = vadd.f32 0.0, %v695
      %v697 = vpop.f32.mrf.mxu0
      %v698 = vadd.f32 0.0, %v697
      %699 = vmatmul.bf16.gmra.mxu0 %v674
      %v700 = vpop.f32.mrf.mxu0
      %v701 = vadd.f32 0.0, %v700
      %v702 = vpop.f32.mrf.mxu0
      %v703 = vadd.f32 0.0, %v702
      %704 = vdwg.mxu0
      %v705 = vadd.f32 %v635, %v686
      %v706 = vadd.f32 %v636, %v688
      %v707 = vadd.f32 %v637, %v691
      %v708 = vadd.f32 %v638, %v693
      %v709 = vadd.f32 %v639, %v696
      %v710 = vadd.f32 %v640, %v698
      %v711 = vadd.f32 %v641, %v701
      %v712 = vadd.f32 %v642, %v703
      %v715 = vrot.slane %v363, 1
      %v716 = vrot.slane %v364, 1
      %v717 = vsel %vm391, %v715, %v716
      %v719 = vpack.c.bf16 %v400, %v397
      %v720 = vpack.c.bf16 %v406, %v403
      %v721 = vpack.c.bf16 %v412, %v409
      %v722 = vpack.c.bf16 %v717, %v415
      %s723 = scalar_lea.vmem %s1, 64
      %v724 = vld [vmem:[%s723] sm:$0xf]
      %v725 = vld [vmem:[%s723 + $0x4] sm:$0xf]
      %v726 = vld [vmem:[%s723 + $0x8] sm:$0xf]
      %v727 = vld [vmem:[%s723 + $0xc] sm:$0xf]
      %v732 = vunpack.c.l.b16 %v724
      %v733 = vunpack.c.l.b16 %v725
      %v734 = vunpack.c.l.b16 %v726
      %v735 = vunpack.c.l.b16 %v727
      %v736 = vpack.c.b16 %v733, %v732
      %v737 = vpack.c.b16 %v735, %v734
      %v741 = vsel %vm445, %v719, 0
      %v744 = vsel %vm445, %v720, 0
      %v747 = vsel %vm445, %v721, 0
      %v750 = vsel %vm445, %v722, 0
      %752 = vmatpush.bf16.msra.mxu0 0
      %753 = vmatpush.bf16.msra.mxu0 0
      %754 = vmatpush.bf16.msra.mxu0 0
      %755 = vmatpush.bf16.msra.mxu0 0
      %756 = vmatpush.bf16.msra.mxu0 0
      %757 = vmatpush.bf16.msra.mxu0 0
      %758 = vmatpush.bf16.msra.mxu0 %v737
      %759 = vmatpush.bf16.msra.mxu0 %v736
      %760 = vmatmul.bf16.gmra.mxu0 %v741
      %v761 = vpop.f32.mrf.mxu0
      %v762 = vadd.f32 0.0, %v761
      %v763 = vpop.f32.mrf.mxu0
      %v764 = vadd.f32 0.0, %v763
      %765 = vmatmul.bf16.gmra.mxu0 %v744
      %v766 = vpop.f32.mrf.mxu0
      %v767 = vadd.f32 0.0, %v766
      %v768 = vpop.f32.mrf.mxu0
      %v769 = vadd.f32 0.0, %v768
      %770 = vmatmul.bf16.gmra.mxu0 %v747
      %v771 = vpop.f32.mrf.mxu0
      %v772 = vadd.f32 0.0, %v771
      %v773 = vpop.f32.mrf.mxu0
      %v774 = vadd.f32 0.0, %v773
      %775 = vmatmul.bf16.gmra.mxu0 %v750
      %v776 = vpop.f32.mrf.mxu0
      %v777 = vadd.f32 0.0, %v776
      %v778 = vpop.f32.mrf.mxu0
      %v779 = vadd.f32 0.0, %v778
      %780 = vdwg.mxu0
      %v781 = vadd.f32 %v705, %v762
      %v782 = vadd.f32 %v706, %v764
      %v783 = vadd.f32 %v707, %v767
      %v784 = vadd.f32 %v708, %v769
      %v785 = vadd.f32 %v709, %v772
      %v786 = vadd.f32 %v710, %v774
      %v787 = vadd.f32 %v711, %v777
      %v788 = vadd.f32 %v712, %v779
      %v789 = vrot.slane %v363, 2
      %v790 = vrot.slane %v364, 2
      %v791 = vsel %vm540, %v789, %v790
      %v793 = vpack.c.bf16 %v549, %v546
      %v794 = vpack.c.bf16 %v555, %v552
      %v795 = vpack.c.bf16 %v561, %v558
      %v796 = vpack.c.bf16 %v791, %v564
      %s797 = scalar_lea.vmem %s1, 80
      %v798 = vld [vmem:[%s797] sm:$0xf]
      %v799 = vld [vmem:[%s797 + $0x4] sm:$0xf]
      %v800 = vld [vmem:[%s797 + $0x8] sm:$0xf]
      %v801 = vld [vmem:[%s797 + $0xc] sm:$0xf]
      %v806 = vunpack.c.l.b16 %v798
      %v807 = vunpack.c.l.b16 %v799
      %v808 = vunpack.c.l.b16 %v800
      %v809 = vunpack.c.l.b16 %v801
      %v810 = vpack.c.b16 %v807, %v806
      %v811 = vpack.c.b16 %v809, %v808
      %v815 = vsel %vm445, %v793, 0
      %v818 = vsel %vm445, %v794, 0
      %v821 = vsel %vm445, %v795, 0
      %v824 = vsel %vm445, %v796, 0
      %826 = vmatpush.bf16.msra.mxu0 0
      %827 = vmatpush.bf16.msra.mxu0 0
      %828 = vmatpush.bf16.msra.mxu0 0
      %829 = vmatpush.bf16.msra.mxu0 0
      %830 = vmatpush.bf16.msra.mxu0 0
      %831 = vmatpush.bf16.msra.mxu0 0
      %832 = vmatpush.bf16.msra.mxu0 %v811
      %833 = vmatpush.bf16.msra.mxu0 %v810
      %834 = vmatmul.bf16.gmra.mxu0 %v815
      %v835 = vpop.f32.mrf.mxu0
      %v836 = vadd.f32 0.0, %v835
      %v837 = vpop.f32.mrf.mxu0
      %v838 = vadd.f32 0.0, %v837
      %839 = vmatmul.bf16.gmra.mxu0 %v818
      %v840 = vpop.f32.mrf.mxu0
      %v841 = vadd.f32 0.0, %v840
      %v842 = vpop.f32.mrf.mxu0
      %v843 = vadd.f32 0.0, %v842
      %844 = vmatmul.bf16.gmra.mxu0 %v821
      %v845 = vpop.f32.mrf.mxu0
      %v846 = vadd.f32 0.0, %v845
      %v847 = vpop.f32.mrf.mxu0
      %v848 = vadd.f32 0.0, %v847
      %849 = vmatmul.bf16.gmra.mxu0 %v824
      %v850 = vpop.f32.mrf.mxu0
      %v851 = vadd.f32 0.0, %v850
      %v852 = vpop.f32.mrf.mxu0
      %v853 = vadd.f32 0.0, %v852
      %854 = vdwg.mxu0
      %v855 = vadd.f32 %v781, %v836
      %v856 = vadd.f32 %v782, %v838
      %v857 = vadd.f32 %v783, %v841
      %v858 = vadd.f32 %v784, %v843
      %v859 = vadd.f32 %v785, %v846
      %v860 = vadd.f32 %v786, %v848
      %v861 = vadd.f32 %v787, %v851
      %v862 = vadd.f32 %v788, %v853
      %v863 = vpack.c.bf16 %v365, %v363
      %s864 = scalar_lea.vmem %s1, 96
      %v865 = vld [vmem:[%s864] sm:$0xf]
      %v866 = vld [vmem:[%s864 + $0x4] sm:$0xf]
      %v867 = vld [vmem:[%s864 + $0x8] sm:$0xf]
      %v868 = vld [vmem:[%s864 + $0xc] sm:$0xf]
      %v873 = vunpack.c.l.b16 %v865
      %v874 = vunpack.c.l.b16 %v866
      %v875 = vunpack.c.l.b16 %v867
      %v876 = vunpack.c.l.b16 %v868
      %v877 = vpack.c.b16 %v874, %v873
      %v878 = vpack.c.b16 %v876, %v875
      %v882 = vsel %vm445, %v863, 0
      %884 = vmatpush.bf16.msra.mxu0 0
      %885 = vmatpush.bf16.msra.mxu0 0
      %886 = vmatpush.bf16.msra.mxu0 0
      %887 = vmatpush.bf16.msra.mxu0 0
      %888 = vmatpush.bf16.msra.mxu0 0
      %889 = vmatpush.bf16.msra.mxu0 0
      %890 = vmatpush.bf16.msra.mxu0 %v878
      %891 = vmatpush.bf16.msra.mxu0 %v877
      %892 = vmatmul.bf16.gmra.mxu0 %v503
      %v893 = vpop.f32.mrf.mxu0
      %v894 = vadd.f32 0.0, %v893
      %v895 = vpop.f32.mrf.mxu0
      %v896 = vadd.f32 0.0, %v895
      %897 = vmatmul.bf16.gmra.mxu0 %v506
      %v898 = vpop.f32.mrf.mxu0
      %v899 = vadd.f32 0.0, %v898
      %v900 = vpop.f32.mrf.mxu0
      %v901 = vadd.f32 0.0, %v900
      %902 = vmatmul.bf16.gmra.mxu0 %v509
      %v903 = vpop.f32.mrf.mxu0
      %v904 = vadd.f32 0.0, %v903
      %v905 = vpop.f32.mrf.mxu0
      %v906 = vadd.f32 0.0, %v905
      %907 = vmatmul.bf16.gmra.mxu0 %v882
      %v908 = vpop.f32.mrf.mxu0
      %v909 = vadd.f32 0.0, %v908
      %v910 = vpop.f32.mrf.mxu0
      %v911 = vadd.f32 0.0, %v910
      %912 = vdwg.mxu0
      %v913 = vadd.f32 %v855, %v894
      %v914 = vadd.f32 %v856, %v896
      %v915 = vadd.f32 %v857, %v899
      %v916 = vadd.f32 %v858, %v901
      %v917 = vadd.f32 %v859, %v904
      %v918 = vadd.f32 %v860, %v906
      %v919 = vadd.f32 %v861, %v909
      %v920 = vadd.f32 %v862, %v911
      %v923 = vrot.slane %v365, 1
      %v924 = vrot.slane %v366, 1
      %v925 = vsel %vm391, %v923, %v924
      %v927 = vpack.c.bf16 %v925, %v717
      %s928 = scalar_lea.vmem %s1, 112
      %v929 = vld [vmem:[%s928] sm:$0xf]
      %v930 = vld [vmem:[%s928 + $0x4] sm:$0xf]
      %v931 = vld [vmem:[%s928 + $0x8] sm:$0xf]
      %v932 = vld [vmem:[%s928 + $0xc] sm:$0xf]
      %v937 = vunpack.c.l.b16 %v929
      %v938 = vunpack.c.l.b16 %v930
      %v939 = vunpack.c.l.b16 %v931
      %v940 = vunpack.c.l.b16 %v932
      %v941 = vpack.c.b16 %v938, %v937
      %v942 = vpack.c.b16 %v940, %v939
      %v946 = vsel %vm445, %v927, 0
      %948 = vmatpush.bf16.msra.mxu0 0
      %949 = vmatpush.bf16.msra.mxu0 0
      %950 = vmatpush.bf16.msra.mxu0 0
      %951 = vmatpush.bf16.msra.mxu0 0
      %952 = vmatpush.bf16.msra.mxu0 0
      %953 = vmatpush.bf16.msra.mxu0 0
      %954 = vmatpush.bf16.msra.mxu0 %v942
      %955 = vmatpush.bf16.msra.mxu0 %v941
      %956 = vmatmul.bf16.gmra.mxu0 %v450
      %v957 = vpop.f32.mrf.mxu0
      %v958 = vadd.f32 0.0, %v957
      %v959 = vpop.f32.mrf.mxu0
      %v960 = vadd.f32 0.0, %v959
      %961 = vmatmul.bf16.gmra.mxu0 %v453
      %v962 = vpop.f32.mrf.mxu0
      %v963 = vadd.f32 0.0, %v962
      %v964 = vpop.f32.mrf.mxu0
      %v965 = vadd.f32 0.0, %v964
      %966 = vmatmul.bf16.gmra.mxu0 %v456
      %v967 = vpop.f32.mrf.mxu0
      %v968 = vadd.f32 0.0, %v967
      %v969 = vpop.f32.mrf.mxu0
      %v970 = vadd.f32 0.0, %v969
      %971 = vmatmul.bf16.gmra.mxu0 %v946
      %v972 = vpop.f32.mrf.mxu0
      %v973 = vadd.f32 0.0, %v972
      %v974 = vpop.f32.mrf.mxu0
      %v975 = vadd.f32 0.0, %v974
      %976 = vdwg.mxu0
      %v977 = vadd.f32 %v913, %v958
      %v978 = vadd.f32 %v914, %v960
      %v979 = vadd.f32 %v915, %v963
      %v980 = vadd.f32 %v916, %v965
      %v981 = vadd.f32 %v917, %v968
      %v982 = vadd.f32 %v918, %v970
      %v983 = vadd.f32 %v919, %v973
      %v984 = vadd.f32 %v920, %v975
      %v985 = vrot.slane %v365, 2
      %v986 = vrot.slane %v366, 2
      %v987 = vsel %vm540, %v985, %v986
      %v989 = vpack.c.bf16 %v987, %v791
      %s990 = scalar_lea.vmem %s1, 128
      %v991 = vld [vmem:[%s990] sm:$0xf]
      %v992 = vld [vmem:[%s990 + $0x4] sm:$0xf]
      %v993 = vld [vmem:[%s990 + $0x8] sm:$0xf]
      %v994 = vld [vmem:[%s990 + $0xc] sm:$0xf]
      %v999 = vunpack.c.l.b16 %v991
      %v1000 = vunpack.c.l.b16 %v992
      %v1001 = vunpack.c.l.b16 %v993
      %v1002 = vunpack.c.l.b16 %v994
      %v1003 = vpack.c.b16 %v1000, %v999
      %v1004 = vpack.c.b16 %v1002, %v1001
      %v1008 = vsel %vm445, %v989, 0
      %1010 = vmatpush.bf16.msra.mxu0 0
      %1011 = vmatpush.bf16.msra.mxu0 0
      %1012 = vmatpush.bf16.msra.mxu0 0
      %1013 = vmatpush.bf16.msra.mxu0 0
      %1014 = vmatpush.bf16.msra.mxu0 0
      %1015 = vmatpush.bf16.msra.mxu0 0
      %1016 = vmatpush.bf16.msra.mxu0 %v1004
      %1017 = vmatpush.bf16.msra.mxu0 %v1003
      %1018 = vmatmul.bf16.gmra.mxu0 %v598
      %v1019 = vpop.f32.mrf.mxu0
      %v1020 = vadd.f32 0.0, %v1019
      %v1021 = vpop.f32.mrf.mxu0
      %v1022 = vadd.f32 0.0, %v1021
      %1023 = vmatmul.bf16.gmra.mxu0 %v601
      %v1024 = vpop.f32.mrf.mxu0
      %v1025 = vadd.f32 0.0, %v1024
      %v1026 = vpop.f32.mrf.mxu0
      %v1027 = vadd.f32 0.0, %v1026
      %1028 = vmatmul.bf16.gmra.mxu0 %v604
      %v1029 = vpop.f32.mrf.mxu0
      %v1030 = vadd.f32 0.0, %v1029
      %v1031 = vpop.f32.mrf.mxu0
      %v1032 = vadd.f32 0.0, %v1031
      %1033 = vmatmul.bf16.gmra.mxu0 %v1008
      %v1034 = vpop.f32.mrf.mxu0
      %v1035 = vadd.f32 0.0, %v1034
      %v1036 = vpop.f32.mrf.mxu0
      %v1037 = vadd.f32 0.0, %v1036
      %1038 = vdwg.mxu0
      %v1039 = vadd.f32 %v977, %v1020
      %v1040 = vadd.f32 %v978, %v1022
      %v1041 = vadd.f32 %v979, %v1025
      %v1042 = vadd.f32 %v980, %v1027
      %v1043 = vadd.f32 %v981, %v1030
      %v1044 = vadd.f32 %v982, %v1032
      %v1045 = vadd.f32 %v983, %v1035
      %v1046 = vadd.f32 %v984, %v1037
      %v1047 = vld [vmem:[%s2] sm:$0x1]
      %v1048 = vld [vmem:[%s3] sm:$0x1]
      %v1049 = vsel %vm445, %v1039, 0.0
      %v1050 = vsel %vm445, %v1040, 0.0
      %v1051 = vadd.f32 %v1049, %v1050
      %v1052 = vsel %vm445, %v1041, 0.0
      %v1053 = vadd.f32 %v1051, %v1052
      %v1054 = vsel %vm445, %v1042, 0.0
      %v1055 = vadd.f32 %v1053, %v1054
      %v1056 = vsel %vm445, %v1043, 0.0
      %v1057 = vadd.f32 %v1055, %v1056
      %v1058 = vsel %vm445, %v1044, 0.0
      %v1059 = vadd.f32 %v1057, %v1058
      %v1060 = vsel %vm445, %v1045, 0.0
      %v1061 = vadd.f32 %v1059, %v1060
      %v1062 = vsel %vm445, %v1046, 0.0
      %v1063 = vadd.f32 %v1061, %v1062
      %v1064 = vrot.slane %v1063, 4
      %v1065 = vadd.f32 %v1063, %v1064
      %v1066 = vrot.slane %v1065, 2
      %v1067 = vadd.f32 %v1065, %v1066
      %v1068 = vrot.slane %v1067, 1
      %v1069 = vadd.f32 %v1067, %v1068
      %v1070 = vmul.f32 %v1039, %v1039
      %v1071 = vmul.f32 %v1040, %v1040
      %v1072 = vmul.f32 %v1041, %v1041
      %v1073 = vmul.f32 %v1042, %v1042
      %v1074 = vmul.f32 %v1043, %v1043
      %v1075 = vmul.f32 %v1044, %v1044
      %v1076 = vmul.f32 %v1045, %v1045
      %v1077 = vmul.f32 %v1046, %v1046
      %v1078 = vsel %vm445, %v1070, 0.0
      %v1079 = vsel %vm445, %v1071, 0.0
      %v1080 = vadd.f32 %v1078, %v1079
      %v1081 = vsel %vm445, %v1072, 0.0
      %v1082 = vadd.f32 %v1080, %v1081
      %v1083 = vsel %vm445, %v1073, 0.0
      %v1084 = vadd.f32 %v1082, %v1083
      %v1085 = vsel %vm445, %v1074, 0.0
      %v1086 = vadd.f32 %v1084, %v1085
      %v1087 = vsel %vm445, %v1075, 0.0
      %v1088 = vadd.f32 %v1086, %v1087
      %v1089 = vsel %vm445, %v1076, 0.0
      %v1090 = vadd.f32 %v1088, %v1089
      %v1091 = vsel %vm445, %v1077, 0.0
      %v1092 = vadd.f32 %v1090, %v1091
      %v1093 = vrot.slane %v1092, 4
      %v1094 = vadd.f32 %v1092, %v1093
      %v1095 = vrot.slane %v1094, 2
      %v1096 = vadd.f32 %v1094, %v1095
      %v1097 = vrot.slane %v1096, 1
      %v1098 = vadd.f32 %v1096, %v1097
      %v1099 = vmul.f32 %v1069, 0.015625
      %v1100 = vmul.f32 %v1098, 0.015625
      %v1101 = vmul.f32 %v1099, %v1099
      %v1102 = vsub.f32 %v1100, %v1101
      %v1103 = vmax.f32 %v1102, 0.0
      %v1104 = vadd.f32 %v1103, 1e-05
      %v1105 = vrsqrt.pop %v1104
      %v1106 = vmul.f32 %v1105, %v1104
      %v1107 = vmul.f32 %v1106, %v1105
      %v1108 = vmul.f32 0.5, %v1107
      %v1109 = vsub.f32 1.5, %v1108
      %v1110 = vmul.f32 %v1105, %v1109
      %vm1111 = vweird.f32 %v1104
      %vm1112 = vweird.f32 %v1105
      %vm1113 = vmor %vm1111, %vm1112
      %v1114 = vsel %vm1113, %v1105, %v1110
      %v1115 = vsub.f32 %v1039, %v1099
      %v1116 = vsub.f32 %v1040, %v1099
      %v1117 = vsub.f32 %v1041, %v1099
      %v1118 = vsub.f32 %v1042, %v1099
      %v1119 = vsub.f32 %v1043, %v1099
      %v1120 = vsub.f32 %v1044, %v1099
      %v1121 = vsub.f32 %v1045, %v1099
      %v1122 = vsub.f32 %v1046, %v1099
      %v1123 = vmul.f32 %v1115, %v1114
      %v1124 = vmul.f32 %v1116, %v1114
      %v1125 = vmul.f32 %v1117, %v1114
      %v1126 = vmul.f32 %v1118, %v1114
      %v1127 = vmul.f32 %v1119, %v1114
      %v1128 = vmul.f32 %v1120, %v1114
      %v1129 = vmul.f32 %v1121, %v1114
      %v1130 = vmul.f32 %v1122, %v1114
      %v1132 = vperm.slane %v1047, 0
      %v1134 = vmul.f32 %v1123, %v1132
      %v1135 = vmul.f32 %v1124, %v1132
      %v1136 = vmul.f32 %v1125, %v1132
      %v1137 = vmul.f32 %v1126, %v1132
      %v1138 = vmul.f32 %v1127, %v1132
      %v1139 = vmul.f32 %v1128, %v1132
      %v1140 = vmul.f32 %v1129, %v1132
      %v1141 = vmul.f32 %v1130, %v1132
      %v1143 = vperm.slane %v1048, 0
      %v1145 = vadd.f32 %v1134, %v1143
      %v1146 = vadd.f32 %v1135, %v1143
      %v1147 = vadd.f32 %v1136, %v1143
      %v1148 = vadd.f32 %v1137, %v1143
      %v1149 = vadd.f32 %v1138, %v1143
      %v1150 = vadd.f32 %v1139, %v1143
      %v1151 = vadd.f32 %v1140, %v1143
      %v1152 = vadd.f32 %v1141, %v1143
      %v1153 = vld [vmem:[%s320] sm:$0xf]
      %v1154 = vld [vmem:[%s320 + $0x4] sm:$0xf]
      %v1155 = vld [vmem:[%s320 + $0x8] sm:$0xf]
      %v1156 = vld [vmem:[%s320 + $0xc] sm:$0xf]
      %v1157 = vld [vmem:[%s320 + $0x10] sm:$0xf]
      %v1158 = vld [vmem:[%s320 + $0x14] sm:$0xf]
      %v1159 = vld [vmem:[%s320 + $0x18] sm:$0xf]
      %v1160 = vld [vmem:[%s320 + $0x1c] sm:$0xf]
      %v1161 = vld [vmem:[%s5] sm:$0xf]
      %v1162 = vld [vmem:[%s5 + $0x4] sm:$0xf]
      %v1171 = vunpack.c.l.b16 %v1153
      %v1172 = vunpack.c.l.b16 %v1154
      %v1173 = vunpack.c.l.b16 %v1155
      %v1174 = vunpack.c.l.b16 %v1156
      %v1175 = vunpack.c.l.b16 %v1157
      %v1176 = vunpack.c.l.b16 %v1158
      %v1177 = vunpack.c.l.b16 %v1159
      %v1178 = vunpack.c.l.b16 %v1160
      %v1179 = vpack.c.b16 %v1172, %v1171
      %v1180 = vpack.c.b16 %v1174, %v1173
      %v1181 = vpack.c.b16 %v1176, %v1175
      %v1182 = vpack.c.b16 %v1178, %v1177
      %v1185 = vunpack.c.l.b16 %v1161
      %v1186 = vunpack.c.l.b16 %v1162
      %v1187 = vpack.c.b16 %v1186, %v1185
      %vm1189 = vcmask 130048
      %v1191 = vsel %vm1189, %v1179, 0
      %v1194 = vsel %vm1189, %v1180, 0
      %v1197 = vsel %vm1189, %v1181, 0
      %v1200 = vsel %vm1189, %v1182, 0
      %1202 = vmatpush.bf16.msra.mxu0 0
      %1203 = vmatpush.bf16.msra.mxu0 0
      %1204 = vmatpush.bf16.msra.mxu0 0
      %1205 = vmatpush.bf16.msra.mxu0 0
      %1206 = vmatpush.bf16.msra.mxu0 0
      %1207 = vmatpush.bf16.msra.mxu0 0
      %1208 = vmatpush.bf16.msra.mxu0 0
      %1209 = vmatpush.bf16.msra.mxu0 %v1187
      %1210 = vmatmul.bf16.gmra.mxu0 %v1191
      %v1211 = vpop.f32.mrf.mxu0
      %v1212 = vadd.f32 0.0, %v1211
      %v1213 = vpop.f32.mrf.mxu0
      %v1214 = vadd.f32 0.0, %v1213
      %1215 = vmatmul.bf16.gmra.mxu0 %v1194
      %v1216 = vpop.f32.mrf.mxu0
      %v1217 = vadd.f32 0.0, %v1216
      %v1218 = vpop.f32.mrf.mxu0
      %v1219 = vadd.f32 0.0, %v1218
      %1220 = vmatmul.bf16.gmra.mxu0 %v1197
      %v1221 = vpop.f32.mrf.mxu0
      %v1222 = vadd.f32 0.0, %v1221
      %v1223 = vpop.f32.mrf.mxu0
      %v1224 = vadd.f32 0.0, %v1223
      %1225 = vmatmul.bf16.gmra.mxu0 %v1200
      %v1226 = vpop.f32.mrf.mxu0
      %v1227 = vadd.f32 0.0, %v1226
      %v1228 = vpop.f32.mrf.mxu0
      %v1229 = vadd.f32 0.0, %v1228
      %1230 = vdwg.mxu0
      %v1231 = vld [vmem:[%s6] sm:$0x1]
      %v1232 = vld [vmem:[%s7] sm:$0x1]
      %v1233 = vsel %vm445, %v1212, 0.0
      %v1234 = vsel %vm445, %v1214, 0.0
      %v1235 = vadd.f32 %v1233, %v1234
      %v1236 = vsel %vm445, %v1217, 0.0
      %v1237 = vadd.f32 %v1235, %v1236
      %v1238 = vsel %vm445, %v1219, 0.0
      %v1239 = vadd.f32 %v1237, %v1238
      %v1240 = vsel %vm445, %v1222, 0.0
      %v1241 = vadd.f32 %v1239, %v1240
      %v1242 = vsel %vm445, %v1224, 0.0
      %v1243 = vadd.f32 %v1241, %v1242
      %v1244 = vsel %vm445, %v1227, 0.0
      %v1245 = vadd.f32 %v1243, %v1244
      %v1246 = vsel %vm445, %v1229, 0.0
      %v1247 = vadd.f32 %v1245, %v1246
      %v1248 = vrot.slane %v1247, 4
      %v1249 = vadd.f32 %v1247, %v1248
      %v1250 = vrot.slane %v1249, 2
      %v1251 = vadd.f32 %v1249, %v1250
      %v1252 = vrot.slane %v1251, 1
      %v1253 = vadd.f32 %v1251, %v1252
      %v1254 = vmul.f32 %v1212, %v1212
      %v1255 = vmul.f32 %v1214, %v1214
      %v1256 = vmul.f32 %v1217, %v1217
      %v1257 = vmul.f32 %v1219, %v1219
      %v1258 = vmul.f32 %v1222, %v1222
      %v1259 = vmul.f32 %v1224, %v1224
      %v1260 = vmul.f32 %v1227, %v1227
      %v1261 = vmul.f32 %v1229, %v1229
      %v1262 = vsel %vm445, %v1254, 0.0
      %v1263 = vsel %vm445, %v1255, 0.0
      %v1264 = vadd.f32 %v1262, %v1263
      %v1265 = vsel %vm445, %v1256, 0.0
      %v1266 = vadd.f32 %v1264, %v1265
      %v1267 = vsel %vm445, %v1257, 0.0
      %v1268 = vadd.f32 %v1266, %v1267
      %v1269 = vsel %vm445, %v1258, 0.0
      %v1270 = vadd.f32 %v1268, %v1269
      %v1271 = vsel %vm445, %v1259, 0.0
      %v1272 = vadd.f32 %v1270, %v1271
      %v1273 = vsel %vm445, %v1260, 0.0
      %v1274 = vadd.f32 %v1272, %v1273
      %v1275 = vsel %vm445, %v1261, 0.0
      %v1276 = vadd.f32 %v1274, %v1275
      %v1277 = vrot.slane %v1276, 4
      %v1278 = vadd.f32 %v1276, %v1277
      %v1279 = vrot.slane %v1278, 2
      %v1280 = vadd.f32 %v1278, %v1279
      %v1281 = vrot.slane %v1280, 1
      %v1282 = vadd.f32 %v1280, %v1281
      %v1283 = vmul.f32 %v1253, 0.015625
      %v1284 = vmul.f32 %v1282, 0.015625
      %v1285 = vmul.f32 %v1283, %v1283
      %v1286 = vsub.f32 %v1284, %v1285
      %v1287 = vmax.f32 %v1286, 0.0
      %v1288 = vadd.f32 %v1287, 1e-05
      %v1289 = vrsqrt.pop %v1288
      %v1290 = vmul.f32 %v1289, %v1288
      %v1291 = vmul.f32 %v1290, %v1289
      %v1292 = vmul.f32 0.5, %v1291
      %v1293 = vsub.f32 1.5, %v1292
      %v1294 = vmul.f32 %v1289, %v1293
      %vm1295 = vweird.f32 %v1288
      %vm1296 = vweird.f32 %v1289
      %vm1297 = vmor %vm1295, %vm1296
      %v1298 = vsel %vm1297, %v1289, %v1294
      %v1299 = vsub.f32 %v1212, %v1283
      %v1300 = vsub.f32 %v1214, %v1283
      %v1301 = vsub.f32 %v1217, %v1283
      %v1302 = vsub.f32 %v1219, %v1283
      %v1303 = vsub.f32 %v1222, %v1283
      %v1304 = vsub.f32 %v1224, %v1283
      %v1305 = vsub.f32 %v1227, %v1283
      %v1306 = vsub.f32 %v1229, %v1283
      %v1307 = vmul.f32 %v1299, %v1298
      %v1308 = vmul.f32 %v1300, %v1298
      %v1309 = vmul.f32 %v1301, %v1298
      %v1310 = vmul.f32 %v1302, %v1298
      %v1311 = vmul.f32 %v1303, %v1298
      %v1312 = vmul.f32 %v1304, %v1298
      %v1313 = vmul.f32 %v1305, %v1298
      %v1314 = vmul.f32 %v1306, %v1298
      %v1316 = vperm.slane %v1231, 0
      %v1318 = vmul.f32 %v1307, %v1316
      %v1319 = vmul.f32 %v1308, %v1316
      %v1320 = vmul.f32 %v1309, %v1316
      %v1321 = vmul.f32 %v1310, %v1316
      %v1322 = vmul.f32 %v1311, %v1316
      %v1323 = vmul.f32 %v1312, %v1316
      %v1324 = vmul.f32 %v1313, %v1316
      %v1325 = vmul.f32 %v1314, %v1316
      %v1327 = vperm.slane %v1232, 0
      %v1329 = vadd.f32 %v1318, %v1327
      %v1330 = vadd.f32 %v1319, %v1327
      %v1331 = vadd.f32 %v1320, %v1327
      %v1332 = vadd.f32 %v1321, %v1327
      %v1333 = vadd.f32 %v1322, %v1327
      %v1334 = vadd.f32 %v1323, %v1327
      %v1335 = vadd.f32 %v1324, %v1327
      %v1336 = vadd.f32 %v1325, %v1327
      %v1337 = vadd.f32 %v1145, %v1329
      %v1338 = vadd.f32 %v1146, %v1330
      %v1339 = vadd.f32 %v1147, %v1331
      %v1340 = vadd.f32 %v1148, %v1332
      %v1341 = vadd.f32 %v1149, %v1333
      %v1342 = vadd.f32 %v1150, %v1334
      %v1343 = vadd.f32 %v1151, %v1335
      %v1344 = vadd.f32 %v1152, %v1336
      %v1345 = vmax.f32 %v1337, 0.0
      %v1346 = vmax.f32 %v1338, 0.0
      %v1347 = vmax.f32 %v1339, 0.0
      %v1348 = vmax.f32 %v1340, 0.0
      %v1349 = vmax.f32 %v1341, 0.0
      %v1350 = vmax.f32 %v1342, 0.0
      %v1351 = vmax.f32 %v1343, 0.0
      %v1352 = vmax.f32 %v1344, 0.0
      %1353 = vst.msk [vmem:[%s325] sm:$0xff] %vm445, %v1345
      %1354 = vst.msk [vmem:[%s325 + $0x8] sm:$0xff] %vm445, %v1346
      %1355 = vst.msk [vmem:[%s325 + $0x10] sm:$0xff] %vm445, %v1347
      %1356 = vst.msk [vmem:[%s325 + $0x18] sm:$0xff] %vm445, %v1348
      %1357 = vst.msk [vmem:[%s325 + $0x20] sm:$0xff] %vm445, %v1349
      %1358 = vst.msk [vmem:[%s325 + $0x28] sm:$0xff] %vm445, %v1350
      %1359 = vst.msk [vmem:[%s325 + $0x30] sm:$0xff] %vm445, %v1351
      %1360 = vst.msk [vmem:[%s325 + $0x38] sm:$0xff] %vm445, %v1352
      %p1361 = scmp.lt.s32.totalorder %s19, 1
      %s1362 = scalar_select %p1361, %s19, 1
      %s1363 = smul.addr %s1362, 8
      %s1364 = smul.addr %s1363, 8
      %s1365 = scalar_lea.vmem %s8, %s1364
      // Predicated region
      $region53: #{forward.5} parent=51 // pred_check
        %p1366 = pneg %p215
      $region54: #{forward.5} parent=51 // pred_check_branch
        %1368 = sbr.rel (%p1366) target = $region56
      $region55: #{forward.5} parent=51 // pred_region
        _
      $region56: #{forward.5} parent=51 // pred_fallthru
        _
    $region52: #{forward.5} parent=5 // pred_fallthru
      _
    %p1369 = scmp.le.s32.totalorder 2, %s14
    // Predicated region
    $region57: #{forward.5} parent=5 // pred_check
      %p1370 = pneg %p1369
    $region58: #{forward.5} parent=5 // pred_check_branch
      %1372 = sbr.rel (%p1370) target = $region60
    $region59: #{forward.5} parent=5 // pred_region
      %s1373 = ssub.s32 %s14, 2
      // Predicated region
      $region61: #{forward.5} parent=59 // pred_check
        %p1374 = pneg %p221
      $region62: #{forward.5} parent=59 // pred_check_branch
        %1376 = sbr.rel (%p1374) target = $region64
      $region63: #{forward.5} parent=59 // pred_region
        %p1377 = scmp.lt.s32.totalorder %s20, 1
        %s1378 = scalar_select %p1377, %s20, 1
        %s1379 = smul.addr %s1378, 8
        %s1380 = smul.addr %s1379, 8
        %s1381 = scalar_lea.vmem %s8, %s1380
      $region64: #{forward.5} parent=59 // pred_fallthru
        _
    $region60: #{forward.5} parent=5 // pred_fallthru
      _
  $region6: #{forward.5} parent=0 // loop_footer
    %s18 = sadd.s32 1, %s14
  $region7: #{forward.5} parent=0 // loop_footer_branch
    %13 = sbr.rel target = $region3
  $region8: #{forward.5} parent=0 // loop_exit
    _

// kernel: forward.6
$region0: #{forward.6}
  #allocation0 [shape = 'u32[]', space=smem, size = 0x4, offset = 0x4, fixed_abs, tag = 'smem constant byte address 0x4 - core index']
  #allocation1 [shape = 'u32[72,128]{1,0:T(1,128)}', space=vmem, size = 0x9000, scoped, tag = 'internal scratch']
  %s0 = inlined_call_operand.vmem [shape: bf16[2,10,10,32], index: 0, kind: input, shape index: {}]
  %s1 = inlined_call_operand.vmem [shape: bf16[9,32,32], index: 1, kind: input, shape index: {}]
  %s2 = inlined_call_operand.vmem [shape: f32[1,32], index: 2, kind: input, shape index: {}]
  %s3 = inlined_call_operand.vmem [shape: f32[1,32], index: 3, kind: input, shape index: {}]
  %s4 = inlined_call_operand.vmem [shape: bf16[2,64,32], index: 4, kind: output, shape index: {}]
  %s5 = sld [smem:[#allocation0]]
  $region49: #{forward.6} parent=0
    _
  %s7 = ssub.s32 1, %s5
  %s8 = scalar_select 0, %s7, %s5
  loop: start=0, step=1, limit=4
  $region2: #{forward.6} parent=0 // loop_pre_header
    _
  $region3: #{forward.6} parent=0 // loop_header
    %s10 = sphi 0, %s14
    %p11 = scmp.ge.s32.totalorder %s10, 4
    %s20 = sphi 0, %s22
    %s23 = sphi 0, %s20
    %s24 = sphi 0, %s23
    %s40 = sphi 0, %s24
    %s44 = sphi 0, %s44
    %s46 = sphi 0, %s44
    %s47 = sphi 0, %s46
    %s61 = sphi 0, %s47
    %s65 = sphi 0, %s65
    %s67 = sphi 0, %s65
    %s68 = sphi 0, %s67
    %s82 = sphi 0, %s68
    %s86 = sphi 0, %s86
    %s88 = sphi 0, %s86
    %s89 = sphi 0, %s88
    %s103 = sphi 0, %s89
    %s109 = sphi 0, %s111
    %s112 = sphi 0, %s109
    %s113 = sphi 0, %s112
    %s129 = sphi 0, %s113
  $region4: #{forward.6} parent=0 // loop_header_branch
    %13 = sbr.rel (%p11) target = $region8
  $region5: #{forward.6} parent=0 // loop_body
    %s15 = ssub.s32 %s10, 1
    %s16 = ssub.s32 %s10, 2
    %s17 = sadd.s32 %s10, 1
    %s18 = ssub.s32 %s10, %s17
    %p19 = scmp.eq.s32.totalorder %s18, 0
    %s21 = sadd.s32 %s20, 1
    %s22 = scalar_select %p19, %s20, %s21
    %p25 = pneg %p19
    %p26 = scmp.eq.s32.totalorder %s10, 1
    %p27 = por %p25, %p26
    %p28 = scmp.ne.s32.totalorder %s20, %s23
    %p29 = scmp.eq.s32.totalorder %s10, 0
    %p30 = por %p28, %p29
    %p31 = scmp.ne.s32.totalorder %s20, %s23
    %p32 = scmp.eq.s32.totalorder %s15, 1
    %p33 = por %p31, %p32
    %p34 = scmp.ne.s32.totalorder %s23, %s24
    %p35 = scmp.eq.s32.totalorder %s15, 0
    %p36 = por %p34, %p35
    %p37 = scmp.ne.s32.totalorder %s23, %s24
    %p38 = scmp.eq.s32.totalorder %s16, 1
    %p39 = por %p37, %p38
    %p41 = scmp.ne.s32.totalorder %s24, %s40
    %p42 = scmp.eq.s32.totalorder %s16, 0
    %p43 = por %p41, %p42
    %s45 = sadd.s32 %s44, 1
    %p48 = scmp.eq.s32.totalorder %s10, 1
    %p49 = scmp.ne.s32.totalorder %s44, %s46
    %p50 = scmp.eq.s32.totalorder %s10, 0
    %p51 = por %p49, %p50
    %p52 = scmp.ne.s32.totalorder %s44, %s46
    %p53 = scmp.eq.s32.totalorder %s15, 1
    %p54 = por %p52, %p53
    %p55 = scmp.ne.s32.totalorder %s46, %s47
    %p56 = scmp.eq.s32.totalorder %s15, 0
    %p57 = por %p55, %p56
    %p58 = scmp.ne.s32.totalorder %s46, %s47
    %p59 = scmp.eq.s32.totalorder %s16, 1
    %p60 = por %p58, %p59
    %p62 = scmp.ne.s32.totalorder %s47, %s61
    %p63 = scmp.eq.s32.totalorder %s16, 0
    %p64 = por %p62, %p63
    %s66 = sadd.s32 %s65, 1
    %p69 = scmp.eq.s32.totalorder %s10, 1
    %p70 = scmp.ne.s32.totalorder %s65, %s67
    %p71 = scmp.eq.s32.totalorder %s10, 0
    %p72 = por %p70, %p71
    %p73 = scmp.ne.s32.totalorder %s65, %s67
    %p74 = scmp.eq.s32.totalorder %s15, 1
    %p75 = por %p73, %p74
    %p76 = scmp.ne.s32.totalorder %s67, %s68
    %p77 = scmp.eq.s32.totalorder %s15, 0
    %p78 = por %p76, %p77
    %p79 = scmp.ne.s32.totalorder %s67, %s68
    %p80 = scmp.eq.s32.totalorder %s16, 1
    %p81 = por %p79, %p80
    %p83 = scmp.ne.s32.totalorder %s68, %s82
    %p84 = scmp.eq.s32.totalorder %s16, 0
    %p85 = por %p83, %p84
    %s87 = sadd.s32 %s86, 1
    %p90 = scmp.eq.s32.totalorder %s10, 1
    %p91 = scmp.ne.s32.totalorder %s86, %s88
    %p92 = scmp.eq.s32.totalorder %s10, 0
    %p93 = por %p91, %p92
    %p94 = scmp.ne.s32.totalorder %s86, %s88
    %p95 = scmp.eq.s32.totalorder %s15, 1
    %p96 = por %p94, %p95
    %p97 = scmp.ne.s32.totalorder %s88, %s89
    %p98 = scmp.eq.s32.totalorder %s15, 0
    %p99 = por %p97, %p98
    %p100 = scmp.ne.s32.totalorder %s88, %s89
    %p101 = scmp.eq.s32.totalorder %s16, 1
    %p102 = por %p100, %p101
    %p104 = scmp.ne.s32.totalorder %s89, %s103
    %p105 = scmp.eq.s32.totalorder %s16, 0
    %p106 = por %p104, %p105
    %s107 = ssub.s32 %s10, %s17
    %p108 = scmp.eq.s32.totalorder %s107, 0
    %s110 = sadd.s32 %s109, 1
    %s111 = scalar_select %p108, %s109, %s110
    %p114 = pneg %p108
    %p115 = scmp.eq.s32.totalorder %s10, 1
    %p116 = por %p114, %p115
    %p117 = scmp.ne.s32.totalorder %s109, %s112
    %p118 = scmp.eq.s32.totalorder %s10, 0
    %p119 = por %p117, %p118
    %p120 = scmp.ne.s32.totalorder %s109, %s112
    %p121 = scmp.eq.s32.totalorder %s15, 1
    %p122 = por %p120, %p121
    %p123 = scmp.ne.s32.totalorder %s112, %s113
    %p124 = scmp.eq.s32.totalorder %s15, 0
    %p125 = por %p123, %p124
    %p126 = scmp.ne.s32.totalorder %s112, %s113
    %p127 = scmp.eq.s32.totalorder %s16, 1
    %p128 = por %p126, %p127
    %p130 = scmp.ne.s32.totalorder %s113, %s129
    %p131 = scmp.eq.s32.totalorder %s16, 0
    %p132 = por %p130, %p131
    %p133 = scmp.le.s32.totalorder 1, %s10
    %p134 = scmp.lt.s32.totalorder %s10, 3
    %p135 = pnand %p133, %p134
    %p136 = pneg %p135
    // Predicated region
    $region9: #{forward.6} parent=5 // pred_check
      _
    $region10: #{forward.6} parent=5 // pred_check_branch
      %138 = sbr.rel (%p135) target = $region12
    $region11: #{forward.6} parent=5 // pred_region
      %s139 = ssub.s32 %s10, 1
      // Predicated region
      $region13: #{forward.6} parent=11 // pred_check
        %p140 = pneg %p57
      $region14: #{forward.6} parent=11 // pred_check_branch
        %142 = sbr.rel (%p140) target = $region16
      $region15: #{forward.6} parent=11 // pred_region
        _
      $region16: #{forward.6} parent=11 // pred_fallthru
        _
      // Predicated region
      $region17: #{forward.6} parent=11 // pred_check
        %p143 = pneg %p78
      $region18: #{forward.6} parent=11 // pred_check_branch
        %145 = sbr.rel (%p143) target = $region20
      $region19: #{forward.6} parent=11 // pred_region
        _
      $region20: #{forward.6} parent=11 // pred_fallthru
        _
      // Predicated region
      $region21: #{forward.6} parent=11 // pred_check
        %p146 = pneg %p99
      $region22: #{forward.6} parent=11 // pred_check_branch
        %148 = sbr.rel (%p146) target = $region24
      $region23: #{forward.6} parent=11 // pred_region
        _
      $region24: #{forward.6} parent=11 // pred_fallthru
        _
    $region12: #{forward.6} parent=5 // pred_fallthru
      _
    %p149 = scmp.lt.s32.totalorder %s10, 2
    // Predicated region
    $region25: #{forward.6} parent=5 // pred_check
      %p150 = pneg %p149
    $region26: #{forward.6} parent=5 // pred_check_branch
      %152 = sbr.rel (%p150) target = $region28
    $region27: #{forward.6} parent=5 // pred_region
      // Predicated region
      $region29: #{forward.6} parent=27 // pred_check
        %p153 = pneg %p30
      $region30: #{forward.6} parent=27 // pred_check_branch
        %155 = sbr.rel (%p153) target = $region32
      $region31: #{forward.6} parent=27 // pred_region
        %p156 = scmp.lt.s32.totalorder %s10, 1
        %s157 = scalar_select %p156, %s10, 1
        %s158 = smul.addr %s157, 20
        %s159 = smul.addr %s158, 4
        %s160 = scalar_lea.vmem %s0, %s159
      $region32: #{forward.6} parent=27 // pred_fallthru
        _
    $region28: #{forward.6} parent=5 // pred_fallthru
      _
    %p161 = scmp.le.s32.totalorder 1, %s10
    %p162 = scmp.lt.s32.totalorder %s10, 3
    %p163 = pnand %p161, %p162
    %p164 = pneg %p163
    // Predicated region
    $region33: #{forward.6} parent=5 // pred_check
      _
    $region34: #{forward.6} parent=5 // pred_check_branch
      %166 = sbr.rel (%p163) target = $region36
    $region35: #{forward.6} parent=5 // pred_region
      %s167 = ssub.s32 %s10, 1
      %p168 = scmp.lt.s32.totalorder %s15, 1
      %s169 = scalar_select %p168, %s15, 1
      %s170 = smul.addr %s169, 20
      %s171 = smul.addr %s170, 4
      %s172 = scalar_lea.vmem %s0, %s171
      %p173 = pneg %p36
      %p174 = pneg %p33
      %p175 = pneg %p57
      %p176 = pneg %p54
      %p177 = pneg %p78
      %p178 = pneg %p75
      %p179 = pneg %p99
      %p180 = pneg %p96
      %p181 = pneg %p125
      %p182 = pneg %p122
      %p183 = scmp.lt.s32.totalorder %s15, 1
      %s184 = scalar_select %p183, %s15, 1
      %s185 = smul.addr %s184, 8
      %s186 = smul.addr %s185, 4
      %s187 = scalar_lea.vmem %s4, %s186
      %p188 = scmp.lt.s32.totalorder %s15, 1
      %s189 = scalar_select %p188, %s15, 1
      %s190 = smul.addr %s189, 20
      %s191 = smul.addr %s190, 4
      %s192 = scalar_lea.vmem %s0, %s191
      %p193 = scmp.lt.s32.totalorder %s15, 1
      %s194 = scalar_select %p193, %s15, 1
      %s195 = smul.addr %s194, 8
      %s196 = smul.addr %s195, 4
      %s197 = scalar_lea.vmem %s4, %s196
      %v199 = vld [vmem:[%s192] sm:$0xf]
      %v200 = vld [vmem:[%s192 + $0x4] sm:$0x1]
      %v201 = vld [vmem:[%s192 + $0x8] sm:$0xf]
      %v202 = vld [vmem:[%s192 + $0xc] sm:$0x1]
      %v203 = vld [vmem:[%s192 + $0x10] sm:$0xf]
      %v204 = vld [vmem:[%s192 + $0x14] sm:$0x1]
      %v205 = vld [vmem:[%s192 + $0x18] sm:$0xf]
      %v206 = vld [vmem:[%s192 + $0x1c] sm:$0x1]
      %v207 = vld [vmem:[%s192 + $0x20] sm:$0xf]
      %v208 = vld [vmem:[%s192 + $0x24] sm:$0x1]
      %v209 = vld [vmem:[%s192 + $0x28] sm:$0xf]
      %v210 = vld [vmem:[%s192 + $0x2c] sm:$0x1]
      %v211 = vld [vmem:[%s192 + $0x30] sm:$0xf]
      %v212 = vld [vmem:[%s192 + $0x34] sm:$0x1]
      %v213 = vld [vmem:[%s192 + $0x38] sm:$0xf]
      %v214 = vld [vmem:[%s192 + $0x3c] sm:$0x1]
      %v215 = vld [vmem:[%s192 + $0x40] sm:$0xf]
      %v216 = vld [vmem:[%s192 + $0x44] sm:$0x1]
      %v217 = vld [vmem:[%s192 + $0x48] sm:$0xf]
      %v218 = vld [vmem:[%s192 + $0x4c] sm:$0x1]
      %v219 = vunpack.c.l.bf16 %v199
      %v220 = vunpack.c.l.bf16 %v200
      %v221 = vunpack.c.l.bf16 %v201
      %v222 = vunpack.c.l.bf16 %v202
      %v223 = vunpack.c.l.bf16 %v203
      %v224 = vunpack.c.l.bf16 %v204
      %v225 = vunpack.c.l.bf16 %v205
      %v226 = vunpack.c.l.bf16 %v206
      %v227 = vunpack.c.l.bf16 %v207
      %v228 = vunpack.c.l.bf16 %v208
      %v229 = vunpack.c.l.bf16 %v209
      %v230 = vunpack.c.l.bf16 %v210
      %v231 = vunpack.c.l.bf16 %v211
      %v232 = vunpack.c.l.bf16 %v212
      %v233 = vunpack.c.l.bf16 %v213
      %v234 = vunpack.c.l.bf16 %v214
      %v235 = vunpack.c.l.bf16 %v215
      %v236 = vunpack.c.l.bf16 %v216
      %v237 = vunpack.c.l.bf16 %v217
      %v238 = vunpack.c.l.bf16 %v218
      %v239 = vpack.c.bf16 %v221, %v219
      %v240 = vpack.c.bf16 %v225, %v223
      %v241 = vpack.c.bf16 %v229, %v227
      %v242 = vpack.c.bf16 %v233, %v231
      %v243 = vld [vmem:[%s1] sm:$0xf]
      %v244 = vld [vmem:[%s1 + $0x4] sm:$0xf]
      %v245 = vld [vmem:[%s1 + $0x8] sm:$0xf]
      %v246 = vld [vmem:[%s1 + $0xc] sm:$0xf]
      %vm263 = vcmask 1046528
      %v264 = vrot.slane %v219, 1
      %v265 = vrot.slane %v220, 1
      %v266 = vsel %vm263, %v264, %v265
      %v267 = vrot.slane %v221, 1
      %v268 = vrot.slane %v222, 1
      %v269 = vsel %vm263, %v267, %v268
      %v270 = vrot.slane %v223, 1
      %v271 = vrot.slane %v224, 1
      %v272 = vsel %vm263, %v270, %v271
      %v273 = vrot.slane %v225, 1
      %v274 = vrot.slane %v226, 1
      %v275 = vsel %vm263, %v273, %v274
      %v276 = vrot.slane %v227, 1
      %v277 = vrot.slane %v228, 1
      %v278 = vsel %vm263, %v276, %v277
      %v279 = vrot.slane %v229, 1
      %v280 = vrot.slane %v230, 1
      %v281 = vsel %vm263, %v279, %v280
      %v282 = vrot.slane %v231, 1
      %v283 = vrot.slane %v232, 1
      %v284 = vsel %vm263, %v282, %v283
      %v285 = vrot.slane %v233, 1
      %v286 = vrot.slane %v234, 1
      %v287 = vsel %vm263, %v285, %v286
      %v296 = vpack.c.bf16 %v269, %v266
      %v297 = vpack.c.bf16 %v275, %v272
      %v298 = vpack.c.bf16 %v281, %v278
      %v299 = vpack.c.bf16 %v287, %v284
      %s300 = scalar_lea.vmem %s1, 16
      %v301 = vld [vmem:[%s300] sm:$0xf]
      %v302 = vld [vmem:[%s300 + $0x4] sm:$0xf]
      %v303 = vld [vmem:[%s300 + $0x8] sm:$0xf]
      %v304 = vld [vmem:[%s300 + $0xc] sm:$0xf]
      %v309 = vunpack.c.l.b16 %v301
      %v310 = vunpack.c.l.b16 %v302
      %v311 = vunpack.c.l.b16 %v303
      %v312 = vunpack.c.l.b16 %v304
      %v313 = vpack.c.b16 %v310, %v309
      %v314 = vpack.c.b16 %v312, %v311
      %vm317 = vcmask 261120
      %v319 = vsel %vm317, %v296, 0
      %v322 = vsel %vm317, %v297, 0
      %v325 = vsel %vm317, %v298, 0
      %v328 = vsel %vm317, %v299, 0
      %330 = vmatpush.bf16.msra.mxu0 0
      %331 = vmatpush.bf16.msra.mxu0 0
      %332 = vmatpush.bf16.msra.mxu0 0
      %333 = vmatpush.bf16.msra.mxu0 0
      %334 = vmatpush.bf16.msra.mxu0 0
      %335 = vmatpush.bf16.msra.mxu0 0
      %336 = vmatpush.bf16.msra.mxu0 %v314
      %337 = vmatpush.bf16.msra.mxu0 %v313
      %338 = vmatmul.bf16.gmra.mxu0 %v319
      %v339 = vpop.f32.mrf.mxu0
      %v340 = vadd.f32 0.0, %v339
      %v341 = vpop.f32.mrf.mxu0
      %v342 = vadd.f32 0.0, %v341
      %343 = vmatmul.bf16.gmra.mxu0 %v322
      %v344 = vpop.f32.mrf.mxu0
      %v345 = vadd.f32 0.0, %v344
      %v346 = vpop.f32.mrf.mxu0
      %v347 = vadd.f32 0.0, %v346
      %348 = vmatmul.bf16.gmra.mxu0 %v325
      %v349 = vpop.f32.mrf.mxu0
      %v350 = vadd.f32 0.0, %v349
      %v351 = vpop.f32.mrf.mxu0
      %v352 = vadd.f32 0.0, %v351
      %353 = vmatmul.bf16.gmra.mxu0 %v328
      %v354 = vpop.f32.mrf.mxu0
      %v355 = vadd.f32 0.0, %v354
      %v356 = vpop.f32.mrf.mxu0
      %v357 = vadd.f32 0.0, %v356
      %358 = vdwg.mxu0
      %v363 = vunpack.c.l.b16 %v243
      %v364 = vunpack.c.l.b16 %v244
      %v365 = vunpack.c.l.b16 %v245
      %v366 = vunpack.c.l.b16 %v246
      %v367 = vpack.c.b16 %v364, %v363
      %v368 = vpack.c.b16 %v366, %v365
      %v372 = vsel %vm317, %v239, 0
      %v375 = vsel %vm317, %v240, 0
      %v378 = vsel %vm317, %v241, 0
      %v381 = vsel %vm317, %v242, 0
      %383 = vmatpush.bf16.msra.mxu0 0
      %384 = vmatpush.bf16.msra.mxu0 0
      %385 = vmatpush.bf16.msra.mxu0 0
      %386 = vmatpush.bf16.msra.mxu0 0
      %387 = vmatpush.bf16.msra.mxu0 0
      %388 = vmatpush.bf16.msra.mxu0 0
      %389 = vmatpush.bf16.msra.mxu0 %v368
      %390 = vmatpush.bf16.msra.mxu0 %v367
      %391 = vmatmul.bf16.gmra.mxu0 %v372
      %v392 = vpop.f32.mrf.mxu0
      %v393 = vadd.f32 %v340, %v392
      %v394 = vpop.f32.mrf.mxu0
      %v395 = vadd.f32 %v342, %v394
      %396 = vmatmul.bf16.gmra.mxu0 %v375
      %v397 = vpop.f32.mrf.mxu0
      %v398 = vadd.f32 %v345, %v397
      %v399 = vpop.f32.mrf.mxu0
      %v400 = vadd.f32 %v347, %v399
      %401 = vmatmul.bf16.gmra.mxu0 %v378
      %v402 = vpop.f32.mrf.mxu0
      %v403 = vadd.f32 %v350, %v402
      %v404 = vpop.f32.mrf.mxu0
      %v405 = vadd.f32 %v352, %v404
      %406 = vmatmul.bf16.gmra.mxu0 %v381
      %v407 = vpop.f32.mrf.mxu0
      %v408 = vadd.f32 %v355, %v407
      %v409 = vpop.f32.mrf.mxu0
      %v410 = vadd.f32 %v357, %v409
      %411 = vdwg.mxu0
      %vm412 = vcmask 1045504
      %v413 = vrot.slane %v219, 2
      %v414 = vrot.slane %v220, 2
      %v415 = vsel %vm412, %v413, %v414
      %v416 = vrot.slane %v221, 2
      %v417 = vrot.slane %v222, 2
      %v418 = vsel %vm412, %v416, %v417
      %v419 = vrot.slane %v223, 2
      %v420 = vrot.slane %v224, 2
      %v421 = vsel %vm412, %v419, %v420
      %v422 = vrot.slane %v225, 2
      %v423 = vrot.slane %v226, 2
      %v424 = vsel %vm412, %v422, %v423
      %v425 = vrot.slane %v227, 2
      %v426 = vrot.slane %v228, 2
      %v427 = vsel %vm412, %v425, %v426
      %v428 = vrot.slane %v229, 2
      %v429 = vrot.slane %v230, 2
      %v430 = vsel %vm412, %v428, %v429
      %v431 = vrot.slane %v231, 2
      %v432 = vrot.slane %v232, 2
      %v433 = vsel %vm412, %v431, %v432
      %v434 = vrot.slane %v233, 2
      %v435 = vrot.slane %v234, 2
      %v436 = vsel %vm412, %v434, %v435
      %v445 = vpack.c.bf16 %v418, %v415
      %v446 = vpack.c.bf16 %v424, %v421
      %v447 = vpack.c.bf16 %v430, %v427
      %v448 = vpack.c.bf16 %v436, %v433
      %s449 = scalar_lea.vmem %s1, 32
      %v450 = vld [vmem:[%s449] sm:$0xf]
      %v451 = vld [vmem:[%s449 + $0x4] sm:$0xf]
      %v452 = vld [vmem:[%s449 + $0x8] sm:$0xf]
      %v453 = vld [vmem:[%s449 + $0xc] sm:$0xf]
      %v458 = vunpack.c.l.b16 %v450
      %v459 = vunpack.c.l.b16 %v451
      %v460 = vunpack.c.l.b16 %v452
      %v461 = vunpack.c.l.b16 %v453
      %v462 = vpack.c.b16 %v459, %v458
      %v463 = vpack.c.b16 %v461, %v460
      %v467 = vsel %vm317, %v445, 0
      %v470 = vsel %vm317, %v446, 0
      %v473 = vsel %vm317, %v447, 0
      %v476 = vsel %vm317, %v448, 0
      %478 = vmatpush.bf16.msra.mxu0 0
      %479 = vmatpush.bf16.msra.mxu0 0
      %480 = vmatpush.bf16.msra.mxu0 0
      %481 = vmatpush.bf16.msra.mxu0 0
      %482 = vmatpush.bf16.msra.mxu0 0
      %483 = vmatpush.bf16.msra.mxu0 0
      %484 = vmatpush.bf16.msra.mxu0 %v463
      %485 = vmatpush.bf16.msra.mxu0 %v462
      %486 = vmatmul.bf16.gmra.mxu0 %v467
      %v487 = vpop.f32.mrf.mxu0
      %v488 = vadd.f32 0.0, %v487
      %v489 = vpop.f32.mrf.mxu0
      %v490 = vadd.f32 0.0, %v489
      %491 = vmatmul.bf16.gmra.mxu0 %v470
      %v492 = vpop.f32.mrf.mxu0
      %v493 = vadd.f32 0.0, %v492
      %v494 = vpop.f32.mrf.mxu0
      %v495 = vadd.f32 0.0, %v494
      %496 = vmatmul.bf16.gmra.mxu0 %v473
      %v497 = vpop.f32.mrf.mxu0
      %v498 = vadd.f32 0.0, %v497
      %v499 = vpop.f32.mrf.mxu0
      %v500 = vadd.f32 0.0, %v499
      %501 = vmatmul.bf16.gmra.mxu0 %v476
      %v502 = vpop.f32.mrf.mxu0
      %v503 = vadd.f32 0.0, %v502
      %v504 = vpop.f32.mrf.mxu0
      %v505 = vadd.f32 0.0, %v504
      %506 = vdwg.mxu0
      %v507 = vadd.f32 %v393, %v488
      %v508 = vadd.f32 %v395, %v490
      %v509 = vadd.f32 %v398, %v493
      %v510 = vadd.f32 %v400, %v495
      %v511 = vadd.f32 %v403, %v498
      %v512 = vadd.f32 %v405, %v500
      %v513 = vadd.f32 %v408, %v503
      %v514 = vadd.f32 %v410, %v505
      %v515 = vpack.c.bf16 %v223, %v221
      %v516 = vpack.c.bf16 %v227, %v225
      %v517 = vpack.c.bf16 %v231, %v229
      %v518 = vpack.c.bf16 %v235, %v233
      %s519 = scalar_lea.vmem %s1, 48
      %v520 = vld [vmem:[%s519] sm:$0xf]
      %v521 = vld [vmem:[%s519 + $0x4] sm:$0xf]
      %v522 = vld [vmem:[%s519 + $0x8] sm:$0xf]
      %v523 = vld [vmem:[%s519 + $0xc] sm:$0xf]
      %v528 = vunpack.c.l.b16 %v520
      %v529 = vunpack.c.l.b16 %v521
      %v530 = vunpack.c.l.b16 %v522
      %v531 = vunpack.c.l.b16 %v523
      %v532 = vpack.c.b16 %v529, %v528
      %v533 = vpack.c.b16 %v531, %v530
      %v537 = vsel %vm317, %v515, 0
      %v540 = vsel %vm317, %v516, 0
      %v543 = vsel %vm317, %v517, 0
      %v546 = vsel %vm317, %v518, 0
      %548 = vmatpush.bf16.msra.mxu0 0
      %549 = vmatpush.bf16.msra.mxu0 0
      %550 = vmatpush.bf16.msra.mxu0 0
      %551 = vmatpush.bf16.msra.mxu0 0
      %552 = vmatpush.bf16.msra.mxu0 0
      %553 = vmatpush.bf16.msra.mxu0 0
      %554 = vmatpush.bf16.msra.mxu0 %v533
      %555 = vmatpush.bf16.msra.mxu0 %v532
      %556 = vmatmul.bf16.gmra.mxu0 %v537
      %v557 = vpop.f32.mrf.mxu0
      %v558 = vadd.f32 0.0, %v557
      %v559 = vpop.f32.mrf.mxu0
      %v560 = vadd.f32 0.0, %v559
      %561 = vmatmul.bf16.gmra.mxu0 %v540
      %v562 = vpop.f32.mrf.mxu0
      %v563 = vadd.f32 0.0, %v562
      %v564 = vpop.f32.mrf.mxu0
      %v565 = vadd.f32 0.0, %v564
      %566 = vmatmul.bf16.gmra.mxu0 %v543
      %v567 = vpop.f32.mrf.mxu0
      %v568 = vadd.f32 0.0, %v567
      %v569 = vpop.f32.mrf.mxu0
      %v570 = vadd.f32 0.0, %v569
      %571 = vmatmul.bf16.gmra.mxu0 %v546
      %v572 = vpop.f32.mrf.mxu0
      %v573 = vadd.f32 0.0, %v572
      %v574 = vpop.f32.mrf.mxu0
      %v575 = vadd.f32 0.0, %v574
      %576 = vdwg.mxu0
      %v577 = vadd.f32 %v507, %v558
      %v578 = vadd.f32 %v508, %v560
      %v579 = vadd.f32 %v509, %v563
      %v580 = vadd.f32 %v510, %v565
      %v581 = vadd.f32 %v511, %v568
      %v582 = vadd.f32 %v512, %v570
      %v583 = vadd.f32 %v513, %v573
      %v584 = vadd.f32 %v514, %v575
      %v587 = vrot.slane %v235, 1
      %v588 = vrot.slane %v236, 1
      %v589 = vsel %vm263, %v587, %v588
      %v591 = vpack.c.bf16 %v272, %v269
      %v592 = vpack.c.bf16 %v278, %v275
      %v593 = vpack.c.bf16 %v284, %v281
      %v594 = vpack.c.bf16 %v589, %v287
      %s595 = scalar_lea.vmem %s1, 64
      %v596 = vld [vmem:[%s595] sm:$0xf]
      %v597 = vld [vmem:[%s595 + $0x4] sm:$0xf]
      %v598 = vld [vmem:[%s595 + $0x8] sm:$0xf]
      %v599 = vld [vmem:[%s595 + $0xc] sm:$0xf]
      %v604 = vunpack.c.l.b16 %v596
      %v605 = vunpack.c.l.b16 %v597
      %v606 = vunpack.c.l.b16 %v598
      %v607 = vunpack.c.l.b16 %v599
      %v608 = vpack.c.b16 %v605, %v604
      %v609 = vpack.c.b16 %v607, %v606
      %v613 = vsel %vm317, %v591, 0
      %v616 = vsel %vm317, %v592, 0
      %v619 = vsel %vm317, %v593, 0
      %v622 = vsel %vm317, %v594, 0
      %624 = vmatpush.bf16.msra.mxu0 0
      %625 = vmatpush.bf16.msra.mxu0 0
      %626 = vmatpush.bf16.msra.mxu0 0
      %627 = vmatpush.bf16.msra.mxu0 0
      %628 = vmatpush.bf16.msra.mxu0 0
      %629 = vmatpush.bf16.msra.mxu0 0
      %630 = vmatpush.bf16.msra.mxu0 %v609
      %631 = vmatpush.bf16.msra.mxu0 %v608
      %632 = vmatmul.bf16.gmra.mxu0 %v613
      %v633 = vpop.f32.mrf.mxu0
      %v634 = vadd.f32 0.0, %v633
      %v635 = vpop.f32.mrf.mxu0
      %v636 = vadd.f32 0.0, %v635
      %637 = vmatmul.bf16.gmra.mxu0 %v616
      %v638 = vpop.f32.mrf.mxu0
      %v639 = vadd.f32 0.0, %v638
      %v640 = vpop.f32.mrf.mxu0
      %v641 = vadd.f32 0.0, %v640
      %642 = vmatmul.bf16.gmra.mxu0 %v619
      %v643 = vpop.f32.mrf.mxu0
      %v644 = vadd.f32 0.0, %v643
      %v645 = vpop.f32.mrf.mxu0
      %v646 = vadd.f32 0.0, %v645
      %647 = vmatmul.bf16.gmra.mxu0 %v622
      %v648 = vpop.f32.mrf.mxu0
      %v649 = vadd.f32 0.0, %v648
      %v650 = vpop.f32.mrf.mxu0
      %v651 = vadd.f32 0.0, %v650
      %652 = vdwg.mxu0
      %v653 = vadd.f32 %v577, %v634
      %v654 = vadd.f32 %v578, %v636
      %v655 = vadd.f32 %v579, %v639
      %v656 = vadd.f32 %v580, %v641
      %v657 = vadd.f32 %v581, %v644
      %v658 = vadd.f32 %v582, %v646
      %v659 = vadd.f32 %v583, %v649
      %v660 = vadd.f32 %v584, %v651
      %v661 = vrot.slane %v235, 2
      %v662 = vrot.slane %v236, 2
      %v663 = vsel %vm412, %v661, %v662
      %v665 = vpack.c.bf16 %v421, %v418
      %v666 = vpack.c.bf16 %v427, %v424
      %v667 = vpack.c.bf16 %v433, %v430
      %v668 = vpack.c.bf16 %v663, %v436
      %s669 = scalar_lea.vmem %s1, 80
      %v670 = vld [vmem:[%s669] sm:$0xf]
      %v671 = vld [vmem:[%s669 + $0x4] sm:$0xf]
      %v672 = vld [vmem:[%s669 + $0x8] sm:$0xf]
      %v673 = vld [vmem:[%s669 + $0xc] sm:$0xf]
      %v678 = vunpack.c.l.b16 %v670
      %v679 = vunpack.c.l.b16 %v671
      %v680 = vunpack.c.l.b16 %v672
      %v681 = vunpack.c.l.b16 %v673
      %v682 = vpack.c.b16 %v679, %v678
      %v683 = vpack.c.b16 %v681, %v680
      %v687 = vsel %vm317, %v665, 0
      %v690 = vsel %vm317, %v666, 0
      %v693 = vsel %vm317, %v667, 0
      %v696 = vsel %vm317, %v668, 0
      %698 = vmatpush.bf16.msra.mxu0 0
      %699 = vmatpush.bf16.msra.mxu0 0
      %700 = vmatpush.bf16.msra.mxu0 0
      %701 = vmatpush.bf16.msra.mxu0 0
      %702 = vmatpush.bf16.msra.mxu0 0
      %703 = vmatpush.bf16.msra.mxu0 0
      %704 = vmatpush.bf16.msra.mxu0 %v683
      %705 = vmatpush.bf16.msra.mxu0 %v682
      %706 = vmatmul.bf16.gmra.mxu0 %v687
      %v707 = vpop.f32.mrf.mxu0
      %v708 = vadd.f32 0.0, %v707
      %v709 = vpop.f32.mrf.mxu0
      %v710 = vadd.f32 0.0, %v709
      %711 = vmatmul.bf16.gmra.mxu0 %v690
      %v712 = vpop.f32.mrf.mxu0
      %v713 = vadd.f32 0.0, %v712
      %v714 = vpop.f32.mrf.mxu0
      %v715 = vadd.f32 0.0, %v714
      %716 = vmatmul.bf16.gmra.mxu0 %v693
      %v717 = vpop.f32.mrf.mxu0
      %v718 = vadd.f32 0.0, %v717
      %v719 = vpop.f32.mrf.mxu0
      %v720 = vadd.f32 0.0, %v719
      %721 = vmatmul.bf16.gmra.mxu0 %v696
      %v722 = vpop.f32.mrf.mxu0
      %v723 = vadd.f32 0.0, %v722
      %v724 = vpop.f32.mrf.mxu0
      %v725 = vadd.f32 0.0, %v724
      %726 = vdwg.mxu0
      %v727 = vadd.f32 %v653, %v708
      %v728 = vadd.f32 %v654, %v710
      %v729 = vadd.f32 %v655, %v713
      %v730 = vadd.f32 %v656, %v715
      %v731 = vadd.f32 %v657, %v718
      %v732 = vadd.f32 %v658, %v720
      %v733 = vadd.f32 %v659, %v723
      %v734 = vadd.f32 %v660, %v725
      %v735 = vpack.c.bf16 %v237, %v235
      %s736 = scalar_lea.vmem %s1, 96
      %v737 = vld [vmem:[%s736] sm:$0xf]
      %v738 = vld [vmem:[%s736 + $0x4] sm:$0xf]
      %v739 = vld [vmem:[%s736 + $0x8] sm:$0xf]
      %v740 = vld [vmem:[%s736 + $0xc] sm:$0xf]
      %v745 = vunpack.c.l.b16 %v737
      %v746 = vunpack.c.l.b16 %v738
      %v747 = vunpack.c.l.b16 %v739
      %v748 = vunpack.c.l.b16 %v740
      %v749 = vpack.c.b16 %v746, %v745
      %v750 = vpack.c.b16 %v748, %v747
      %v754 = vsel %vm317, %v735, 0
      %756 = vmatpush.bf16.msra.mxu0 0
      %757 = vmatpush.bf16.msra.mxu0 0
      %758 = vmatpush.bf16.msra.mxu0 0
      %759 = vmatpush.bf16.msra.mxu0 0
      %760 = vmatpush.bf16.msra.mxu0 0
      %761 = vmatpush.bf16.msra.mxu0 0
      %762 = vmatpush.bf16.msra.mxu0 %v750
      %763 = vmatpush.bf16.msra.mxu0 %v749
      %764 = vmatmul.bf16.gmra.mxu0 %v375
      %v765 = vpop.f32.mrf.mxu0
      %v766 = vadd.f32 0.0, %v765
      %v767 = vpop.f32.mrf.mxu0
      %v768 = vadd.f32 0.0, %v767
      %769 = vmatmul.bf16.gmra.mxu0 %v378
      %v770 = vpop.f32.mrf.mxu0
      %v771 = vadd.f32 0.0, %v770
      %v772 = vpop.f32.mrf.mxu0
      %v773 = vadd.f32 0.0, %v772
      %774 = vmatmul.bf16.gmra.mxu0 %v381
      %v775 = vpop.f32.mrf.mxu0
      %v776 = vadd.f32 0.0, %v775
      %v777 = vpop.f32.mrf.mxu0
      %v778 = vadd.f32 0.0, %v777
      %779 = vmatmul.bf16.gmra.mxu0 %v754
      %v780 = vpop.f32.mrf.mxu0
      %v781 = vadd.f32 0.0, %v780
      %v782 = vpop.f32.mrf.mxu0
      %v783 = vadd.f32 0.0, %v782
      %784 = vdwg.mxu0
      %v785 = vadd.f32 %v727, %v766
      %v786 = vadd.f32 %v728, %v768
      %v787 = vadd.f32 %v729, %v771
      %v788 = vadd.f32 %v730, %v773
      %v789 = vadd.f32 %v731, %v776
      %v790 = vadd.f32 %v732, %v778
      %v791 = vadd.f32 %v733, %v781
      %v792 = vadd.f32 %v734, %v783
      %v795 = vrot.slane %v237, 1
      %v796 = vrot.slane %v238, 1
      %v797 = vsel %vm263, %v795, %v796
      %v799 = vpack.c.bf16 %v797, %v589
      %s800 = scalar_lea.vmem %s1, 112
      %v801 = vld [vmem:[%s800] sm:$0xf]
      %v802 = vld [vmem:[%s800 + $0x4] sm:$0xf]
      %v803 = vld [vmem:[%s800 + $0x8] sm:$0xf]
      %v804 = vld [vmem:[%s800 + $0xc] sm:$0xf]
      %v809 = vunpack.c.l.b16 %v801
      %v810 = vunpack.c.l.b16 %v802
      %v811 = vunpack.c.l.b16 %v803
      %v812 = vunpack.c.l.b16 %v804
      %v813 = vpack.c.b16 %v810, %v809
      %v814 = vpack.c.b16 %v812, %v811
      %v818 = vsel %vm317, %v799, 0
      %820 = vmatpush.bf16.msra.mxu0 0
      %821 = vmatpush.bf16.msra.mxu0 0
      %822 = vmatpush.bf16.msra.mxu0 0
      %823 = vmatpush.bf16.msra.mxu0 0
      %824 = vmatpush.bf16.msra.mxu0 0
      %825 = vmatpush.bf16.msra.mxu0 0
      %826 = vmatpush.bf16.msra.mxu0 %v814
      %827 = vmatpush.bf16.msra.mxu0 %v813
      %828 = vmatmul.bf16.gmra.mxu0 %v322
      %v829 = vpop.f32.mrf.mxu0
      %v830 = vadd.f32 0.0, %v829
      %v831 = vpop.f32.mrf.mxu0
      %v832 = vadd.f32 0.0, %v831
      %833 = vmatmul.bf16.gmra.mxu0 %v325
      %v834 = vpop.f32.mrf.mxu0
      %v835 = vadd.f32 0.0, %v834
      %v836 = vpop.f32.mrf.mxu0
      %v837 = vadd.f32 0.0, %v836
      %838 = vmatmul.bf16.gmra.mxu0 %v328
      %v839 = vpop.f32.mrf.mxu0
      %v840 = vadd.f32 0.0, %v839
      %v841 = vpop.f32.mrf.mxu0
      %v842 = vadd.f32 0.0, %v841
      %843 = vmatmul.bf16.gmra.mxu0 %v818
      %v844 = vpop.f32.mrf.mxu0
      %v845 = vadd.f32 0.0, %v844
      %v846 = vpop.f32.mrf.mxu0
      %v847 = vadd.f32 0.0, %v846
      %848 = vdwg.mxu0
      %v849 = vadd.f32 %v785, %v830
      %v850 = vadd.f32 %v786, %v832
      %v851 = vadd.f32 %v787, %v835
      %v852 = vadd.f32 %v788, %v837
      %v853 = vadd.f32 %v789, %v840
      %v854 = vadd.f32 %v790, %v842
      %v855 = vadd.f32 %v791, %v845
      %v856 = vadd.f32 %v792, %v847
      %v857 = vrot.slane %v237, 2
      %v858 = vrot.slane %v238, 2
      %v859 = vsel %vm412, %v857, %v858
      %v861 = vpack.c.bf16 %v859, %v663
      %s862 = scalar_lea.vmem %s1, 128
      %v863 = vld [vmem:[%s862] sm:$0xf]
      %v864 = vld [vmem:[%s862 + $0x4] sm:$0xf]
      %v865 = vld [vmem:[%s862 + $0x8] sm:$0xf]
      %v866 = vld [vmem:[%s862 + $0xc] sm:$0xf]
      %v871 = vunpack.c.l.b16 %v863
      %v872 = vunpack.c.l.b16 %v864
      %v873 = vunpack.c.l.b16 %v865
      %v874 = vunpack.c.l.b16 %v866
      %v875 = vpack.c.b16 %v872, %v871
      %v876 = vpack.c.b16 %v874, %v873
      %v880 = vsel %vm317, %v861, 0
      %882 = vmatpush.bf16.msra.mxu0 0
      %883 = vmatpush.bf16.msra.mxu0 0
      %884 = vmatpush.bf16.msra.mxu0 0
      %885 = vmatpush.bf16.msra.mxu0 0
      %886 = vmatpush.bf16.msra.mxu0 0
      %887 = vmatpush.bf16.msra.mxu0 0
      %888 = vmatpush.bf16.msra.mxu0 %v876
      %889 = vmatpush.bf16.msra.mxu0 %v875
      %890 = vmatmul.bf16.gmra.mxu0 %v470
      %v891 = vpop.f32.mrf.mxu0
      %v892 = vadd.f32 0.0, %v891
      %v893 = vpop.f32.mrf.mxu0
      %v894 = vadd.f32 0.0, %v893
      %895 = vmatmul.bf16.gmra.mxu0 %v473
      %v896 = vpop.f32.mrf.mxu0
      %v897 = vadd.f32 0.0, %v896
      %v898 = vpop.f32.mrf.mxu0
      %v899 = vadd.f32 0.0, %v898
      %900 = vmatmul.bf16.gmra.mxu0 %v476
      %v901 = vpop.f32.mrf.mxu0
      %v902 = vadd.f32 0.0, %v901
      %v903 = vpop.f32.mrf.mxu0
      %v904 = vadd.f32 0.0, %v903
      %905 = vmatmul.bf16.gmra.mxu0 %v880
      %v906 = vpop.f32.mrf.mxu0
      %v907 = vadd.f32 0.0, %v906
      %v908 = vpop.f32.mrf.mxu0
      %v909 = vadd.f32 0.0, %v908
      %910 = vdwg.mxu0
      %v911 = vadd.f32 %v849, %v892
      %v912 = vadd.f32 %v850, %v894
      %v913 = vadd.f32 %v851, %v897
      %v914 = vadd.f32 %v852, %v899
      %v915 = vadd.f32 %v853, %v902
      %v916 = vadd.f32 %v854, %v904
      %v917 = vadd.f32 %v855, %v907
      %v918 = vadd.f32 %v856, %v909
      %v919 = vld [vmem:[%s2] sm:$0x1]
      %v920 = vld [vmem:[%s3] sm:$0x1]
      %v921 = vsel %vm317, %v911, 0.0
      %v922 = vsel %vm317, %v912, 0.0
      %v923 = vadd.f32 %v921, %v922
      %v924 = vsel %vm317, %v913, 0.0
      %v925 = vadd.f32 %v923, %v924
      %v926 = vsel %vm317, %v914, 0.0
      %v927 = vadd.f32 %v925, %v926
      %v928 = vsel %vm317, %v915, 0.0
      %v929 = vadd.f32 %v927, %v928
      %v930 = vsel %vm317, %v916, 0.0
      %v931 = vadd.f32 %v929, %v930
      %v932 = vsel %vm317, %v917, 0.0
      %v933 = vadd.f32 %v931, %v932
      %v934 = vsel %vm317, %v918, 0.0
      %v935 = vadd.f32 %v933, %v934
      %v936 = vrot.slane %v935, 4
      %v937 = vadd.f32 %v935, %v936
      %v938 = vrot.slane %v937, 2
      %v939 = vadd.f32 %v937, %v938
      %v940 = vrot.slane %v939, 1
      %v941 = vadd.f32 %v939, %v940
      %v942 = vmul.f32 %v911, %v911
      %v943 = vmul.f32 %v912, %v912
      %v944 = vmul.f32 %v913, %v913
      %v945 = vmul.f32 %v914, %v914
      %v946 = vmul.f32 %v915, %v915
      %v947 = vmul.f32 %v916, %v916
      %v948 = vmul.f32 %v917, %v917
      %v949 = vmul.f32 %v918, %v918
      %v950 = vsel %vm317, %v942, 0.0
      %v951 = vsel %vm317, %v943, 0.0
      %v952 = vadd.f32 %v950, %v951
      %v953 = vsel %vm317, %v944, 0.0
      %v954 = vadd.f32 %v952, %v953
      %v955 = vsel %vm317, %v945, 0.0
      %v956 = vadd.f32 %v954, %v955
      %v957 = vsel %vm317, %v946, 0.0
      %v958 = vadd.f32 %v956, %v957
      %v959 = vsel %vm317, %v947, 0.0
      %v960 = vadd.f32 %v958, %v959
      %v961 = vsel %vm317, %v948, 0.0
      %v962 = vadd.f32 %v960, %v961
      %v963 = vsel %vm317, %v949, 0.0
      %v964 = vadd.f32 %v962, %v963
      %v965 = vrot.slane %v964, 4
      %v966 = vadd.f32 %v964, %v965
      %v967 = vrot.slane %v966, 2
      %v968 = vadd.f32 %v966, %v967
      %v969 = vrot.slane %v968, 1
      %v970 = vadd.f32 %v968, %v969
      %v971 = vmul.f32 %v941, 0.015625
      %v972 = vmul.f32 %v970, 0.015625
      %v973 = vmul.f32 %v971, %v971
      %v974 = vsub.f32 %v972, %v973
      %v975 = vmax.f32 %v974, 0.0
      %v976 = vadd.f32 %v975, 1e-05
      %v977 = vrsqrt.pop %v976
      %v978 = vmul.f32 %v977, %v976
      %v979 = vmul.f32 %v978, %v977
      %v980 = vmul.f32 0.5, %v979
      %v981 = vsub.f32 1.5, %v980
      %v982 = vmul.f32 %v977, %v981
      %vm983 = vweird.f32 %v976
      %vm984 = vweird.f32 %v977
      %vm985 = vmor %vm983, %vm984
      %v986 = vsel %vm985, %v977, %v982
      %v987 = vsub.f32 %v911, %v971
      %v988 = vsub.f32 %v912, %v971
      %v989 = vsub.f32 %v913, %v971
      %v990 = vsub.f32 %v914, %v971
      %v991 = vsub.f32 %v915, %v971
      %v992 = vsub.f32 %v916, %v971
      %v993 = vsub.f32 %v917, %v971
      %v994 = vsub.f32 %v918, %v971
      %v995 = vmul.f32 %v987, %v986
      %v996 = vmul.f32 %v988, %v986
      %v997 = vmul.f32 %v989, %v986
      %v998 = vmul.f32 %v990, %v986
      %v999 = vmul.f32 %v991, %v986
      %v1000 = vmul.f32 %v992, %v986
      %v1001 = vmul.f32 %v993, %v986
      %v1002 = vmul.f32 %v994, %v986
      %v1004 = vperm.slane %v919, 0
      %v1006 = vmul.f32 %v995, %v1004
      %v1007 = vmul.f32 %v996, %v1004
      %v1008 = vmul.f32 %v997, %v1004
      %v1009 = vmul.f32 %v998, %v1004
      %v1010 = vmul.f32 %v999, %v1004
      %v1011 = vmul.f32 %v1000, %v1004
      %v1012 = vmul.f32 %v1001, %v1004
      %v1013 = vmul.f32 %v1002, %v1004
      %v1015 = vperm.slane %v920, 0
      %v1017 = vadd.f32 %v1006, %v1015
      %v1018 = vadd.f32 %v1007, %v1015
      %v1019 = vadd.f32 %v1008, %v1015
      %v1020 = vadd.f32 %v1009, %v1015
      %v1021 = vadd.f32 %v1010, %v1015
      %v1022 = vadd.f32 %v1011, %v1015
      %v1023 = vadd.f32 %v1012, %v1015
      %v1024 = vadd.f32 %v1013, %v1015
      %v1025 = vmax.f32 %v1017, 0.0
      %v1026 = vmax.f32 %v1018, 0.0
      %v1027 = vmax.f32 %v1019, 0.0
      %v1028 = vmax.f32 %v1020, 0.0
      %v1029 = vmax.f32 %v1021, 0.0
      %v1030 = vmax.f32 %v1022, 0.0
      %v1031 = vmax.f32 %v1023, 0.0
      %v1032 = vmax.f32 %v1024, 0.0
      %v1033 = vpack.c.bf16 %v1025, %v1025
      %v1034 = vpack.c.bf16 %v1026, %v1026
      %v1035 = vpack.c.bf16 %v1027, %v1027
      %v1036 = vpack.c.bf16 %v1028, %v1028
      %v1037 = vpack.c.bf16 %v1029, %v1029
      %v1038 = vpack.c.bf16 %v1030, %v1030
      %v1039 = vpack.c.bf16 %v1031, %v1031
      %v1040 = vpack.c.bf16 %v1032, %v1032
      %vm1041 = vcmask 257024
      %1042 = vst.msk [vmem:[%s197] sm:$0xf] %vm1041, %v1033
      %1043 = vst.msk [vmem:[%s197 + $0x4] sm:$0xf] %vm1041, %v1034
      %1044 = vst.msk [vmem:[%s197 + $0x8] sm:$0xf] %vm1041, %v1035
      %1045 = vst.msk [vmem:[%s197 + $0xc] sm:$0xf] %vm1041, %v1036
      %1046 = vst.msk [vmem:[%s197 + $0x10] sm:$0xf] %vm1041, %v1037
      %1047 = vst.msk [vmem:[%s197 + $0x14] sm:$0xf] %vm1041, %v1038
      %1048 = vst.msk [vmem:[%s197 + $0x18] sm:$0xf] %vm1041, %v1039
      %1049 = vst.msk [vmem:[%s197 + $0x1c] sm:$0xf] %vm1041, %v1040
      %p1050 = scmp.lt.s32.totalorder %s15, 1
      %s1051 = scalar_select %p1050, %s15, 1
      %s1052 = smul.addr %s1051, 8
      %s1053 = smul.addr %s1052, 4
      %s1054 = scalar_lea.vmem %s4, %s1053
      // Predicated region
      $region37: #{forward.6} parent=35 // pred_check
        %p1055 = pneg %p122
      $region38: #{forward.6} parent=35 // pred_check_branch
        %1057 = sbr.rel (%p1055) target = $region40
      $region39: #{forward.6} parent=35 // pred_region
        _
      $region40: #{forward.6} parent=35 // pred_fallthru
        _
    $region36: #{forward.6} parent=5 // pred_fallthru
      _
    %p1058 = scmp.le.s32.totalorder 2, %s10
    // Predicated region
    $region41: #{forward.6} parent=5 // pred_check
      %p1059 = pneg %p1058
    $region42: #{forward.6} parent=5 // pred_check_branch
      %1061 = sbr.rel (%p1059) target = $region44
    $region43: #{forward.6} parent=5 // pred_region
      %s1062 = ssub.s32 %s10, 2
      // Predicated region
      $region45: #{forward.6} parent=43 // pred_check
        %p1063 = pneg %p128
      $region46: #{forward.6} parent=43 // pred_check_branch
        %1065 = sbr.rel (%p1063) target = $region48
      $region47: #{forward.6} parent=43 // pred_region
        %p1066 = scmp.lt.s32.totalorder %s16, 1
        %s1067 = scalar_select %p1066, %s16, 1
        %s1068 = smul.addr %s1067, 8
        %s1069 = smul.addr %s1068, 4
        %s1070 = scalar_lea.vmem %s4, %s1069
      $region48: #{forward.6} parent=43 // pred_fallthru
        _
    $region44: #{forward.6} parent=5 // pred_fallthru
      _
  $region6: #{forward.6} parent=0 // loop_footer
    %s14 = sadd.s32 1, %s10
  $region7: #{forward.6} parent=0 // loop_footer_branch
    %9 = sbr.rel target = $region3
  $region8: #{forward.6} parent=0 // loop_exit
    _

// kernel: forward.7
$region0: #{forward.7}
  #allocation0 [shape = 'u32[]', space=smem, size = 0x4, offset = 0x4, fixed_abs, tag = 'smem constant byte address 0x4 - core index']
  #allocation1 [shape = 'u32[72,128]{1,0:T(1,128)}', space=vmem, size = 0x9000, scoped, tag = 'internal scratch']
  %s0 = inlined_call_operand.vmem [shape: bf16[2,10,10,32], index: 0, kind: input, shape index: {}]
  %s1 = inlined_call_operand.vmem [shape: bf16[9,32,32], index: 1, kind: input, shape index: {}]
  %s2 = inlined_call_operand.vmem [shape: f32[1,32], index: 2, kind: input, shape index: {}]
  %s3 = inlined_call_operand.vmem [shape: f32[1,32], index: 3, kind: input, shape index: {}]
  %s4 = inlined_call_operand.vmem [shape: f32[2,64,32], index: 4, kind: input, shape index: {}]
  %s5 = inlined_call_operand.hbm [shape: f32[2,64,32], index: 5, kind: output, shape index: {}]
  %s6 = sld [smem:[#allocation0]]
  $region53: #{forward.7} parent=0
    _
  %s8 = ssub.s32 1, %s6
  %s9 = scalar_select 0, %s8, %s6
  $region1: #{forward.7} parent=0
    #allocation2 [shape = 'u8[65536]{0}', space=vmem, size = 0x10000, scoped, tag = 'output window, operand 0']
    #allocation3 [shape = 's32[2]{0}', space=sflag, size = 0x8, scoped, tag = 'scoped memory for forward.7']
    %10 = vsyncpa [#allocation3], 0
    %s11 = scalar_lea.sflag [#allocation3], 1
    %12 = vsyncpa %s11, 0
    loop: start=0, step=1, limit=4
    $region2: #{forward.7} parent=1 // loop_pre_header
      _
    $region3: #{forward.7} parent=1 // loop_header
      %s14 = sphi 0, %s18
      %p15 = scmp.ge.s32.totalorder %s14, 4
      %s24 = sphi 0, %s26
      %s27 = sphi 0, %s24
      %s28 = sphi 0, %s27
      %s44 = sphi 0, %s28
      %s48 = sphi 0, %s48
      %s50 = sphi 0, %s48
      %s51 = sphi 0, %s50
      %s65 = sphi 0, %s51
      %s69 = sphi 0, %s69
      %s71 = sphi 0, %s69
      %s72 = sphi 0, %s71
      %s86 = sphi 0, %s72
      %s90 = sphi 0, %s90
      %s92 = sphi 0, %s90
      %s93 = sphi 0, %s92
      %s107 = sphi 0, %s93
      %s113 = sphi 0, %s115
      %s116 = sphi 0, %s113
      %s117 = sphi 0, %s116
      %s133 = sphi 0, %s117
      %s139 = sphi 0, %s141
      %s142 = sphi 0, %s139
      %s143 = sphi 0, %s142
      %s159 = sphi 0, %s143
    $region4: #{forward.7} parent=1 // loop_header_branch
      %17 = sbr.rel (%p15) target = $region8
    $region5: #{forward.7} parent=1 // loop_body
      %s19 = ssub.s32 %s14, 1
      %s20 = ssub.s32 %s14, 2
      %s21 = sadd.s32 %s14, 1
      %s22 = ssub.s32 %s14, %s21
      %p23 = scmp.eq.s32.totalorder %s22, 0
      %s25 = sadd.s32 %s24, 1
      %s26 = scalar_select %p23, %s24, %s25
      %p29 = pneg %p23
      %p30 = scmp.eq.s32.totalorder %s14, 1
      %p31 = por %p29, %p30
      %p32 = scmp.ne.s32.totalorder %s24, %s27
      %p33 = scmp.eq.s32.totalorder %s14, 0
      %p34 = por %p32, %p33
      %p35 = scmp.ne.s32.totalorder %s24, %s27
      %p36 = scmp.eq.s32.totalorder %s19, 1
      %p37 = por %p35, %p36
      %p38 = scmp.ne.s32.totalorder %s27, %s28
      %p39 = scmp.eq.s32.totalorder %s19, 0
      %p40 = por %p38, %p39
      %p41 = scmp.ne.s32.totalorder %s27, %s28
      %p42 = scmp.eq.s32.totalorder %s20, 1
      %p43 = por %p41, %p42
      %p45 = scmp.ne.s32.totalorder %s28, %s44
      %p46 = scmp.eq.s32.totalorder %s20, 0
      %p47 = por %p45, %p46
      %s49 = sadd.s32 %s48, 1
      %p52 = scmp.eq.s32.totalorder %s14, 1
      %p53 = scmp.ne.s32.totalorder %s48, %s50
      %p54 = scmp.eq.s32.totalorder %s14, 0
      %p55 = por %p53, %p54
      %p56 = scmp.ne.s32.totalorder %s48, %s50
      %p57 = scmp.eq.s32.totalorder %s19, 1
      %p58 = por %p56, %p57
      %p59 = scmp.ne.s32.totalorder %s50, %s51
      %p60 = scmp.eq.s32.totalorder %s19, 0
      %p61 = por %p59, %p60
      %p62 = scmp.ne.s32.totalorder %s50, %s51
      %p63 = scmp.eq.s32.totalorder %s20, 1
      %p64 = por %p62, %p63
      %p66 = scmp.ne.s32.totalorder %s51, %s65
      %p67 = scmp.eq.s32.totalorder %s20, 0
      %p68 = por %p66, %p67
      %s70 = sadd.s32 %s69, 1
      %p73 = scmp.eq.s32.totalorder %s14, 1
      %p74 = scmp.ne.s32.totalorder %s69, %s71
      %p75 = scmp.eq.s32.totalorder %s14, 0
      %p76 = por %p74, %p75
      %p77 = scmp.ne.s32.totalorder %s69, %s71
      %p78 = scmp.eq.s32.totalorder %s19, 1
      %p79 = por %p77, %p78
      %p80 = scmp.ne.s32.totalorder %s71, %s72
      %p81 = scmp.eq.s32.totalorder %s19, 0
      %p82 = por %p80, %p81
      %p83 = scmp.ne.s32.totalorder %s71, %s72
      %p84 = scmp.eq.s32.totalorder %s20, 1
      %p85 = por %p83, %p84
      %p87 = scmp.ne.s32.totalorder %s72, %s86
      %p88 = scmp.eq.s32.totalorder %s20, 0
      %p89 = por %p87, %p88
      %s91 = sadd.s32 %s90, 1
      %p94 = scmp.eq.s32.totalorder %s14, 1
      %p95 = scmp.ne.s32.totalorder %s90, %s92
      %p96 = scmp.eq.s32.totalorder %s14, 0
      %p97 = por %p95, %p96
      %p98 = scmp.ne.s32.totalorder %s90, %s92
      %p99 = scmp.eq.s32.totalorder %s19, 1
      %p100 = por %p98, %p99
      %p101 = scmp.ne.s32.totalorder %s92, %s93
      %p102 = scmp.eq.s32.totalorder %s19, 0
      %p103 = por %p101, %p102
      %p104 = scmp.ne.s32.totalorder %s92, %s93
      %p105 = scmp.eq.s32.totalorder %s20, 1
      %p106 = por %p104, %p105
      %p108 = scmp.ne.s32.totalorder %s93, %s107
      %p109 = scmp.eq.s32.totalorder %s20, 0
      %p110 = por %p108, %p109
      %s111 = ssub.s32 %s14, %s21
      %p112 = scmp.eq.s32.totalorder %s111, 0
      %s114 = sadd.s32 %s113, 1
      %s115 = scalar_select %p112, %s113, %s114
      %p118 = pneg %p112
      %p119 = scmp.eq.s32.totalorder %s14, 1
      %p120 = por %p118, %p119
      %p121 = scmp.ne.s32.totalorder %s113, %s116
      %p122 = scmp.eq.s32.totalorder %s14, 0
      %p123 = por %p121, %p122
      %p124 = scmp.ne.s32.totalorder %s113, %s116
      %p125 = scmp.eq.s32.totalorder %s19, 1
      %p126 = por %p124, %p125
      %p127 = scmp.ne.s32.totalorder %s116, %s117
      %p128 = scmp.eq.s32.totalorder %s19, 0
      %p129 = por %p127, %p128
      %p130 = scmp.ne.s32.totalorder %s116, %s117
      %p131 = scmp.eq.s32.totalorder %s20, 1
      %p132 = por %p130, %p131
      %p134 = scmp.ne.s32.totalorder %s117, %s133
      %p135 = scmp.eq.s32.totalorder %s20, 0
      %p136 = por %p134, %p135
      %s137 = ssub.s32 %s14, %s21
      %p138 = scmp.eq.s32.totalorder %s137, 0
      %s140 = sadd.s32 %s139, 1
      %s141 = scalar_select %p138, %s139, %s140
      %p144 = pneg %p138
      %p145 = scmp.eq.s32.totalorder %s14, 1
      %p146 = por %p144, %p145
      %p147 = scmp.ne.s32.totalorder %s139, %s142
      %p148 = scmp.eq.s32.totalorder %s14, 0
      %p149 = por %p147, %p148
      %p150 = scmp.ne.s32.totalorder %s139, %s142
      %p151 = scmp.eq.s32.totalorder %s19, 1
      %p152 = por %p150, %p151
      %p153 = scmp.ne.s32.totalorder %s142, %s143
      %p154 = scmp.eq.s32.totalorder %s19, 0
      %p155 = por %p153, %p154
      %p156 = scmp.ne.s32.totalorder %s142, %s143
      %p157 = scmp.eq.s32.totalorder %s20, 1
      %p158 = por %p156, %p157
      %p160 = scmp.ne.s32.totalorder %s143, %s159
      %p161 = scmp.eq.s32.totalorder %s20, 0
      %p162 = por %p160, %p161
      %p163 = scmp.le.s32.totalorder 1, %s14
      %p164 = scmp.lt.s32.totalorder %s14, 3
      %p165 = pnand %p163, %p164
      %p166 = pneg %p165
      // Predicated region
      $region9: #{forward.7} parent=5 // pred_check
        _
      $region10: #{forward.7} parent=5 // pred_check_branch
        %168 = sbr.rel (%p165) target = $region12
      $region11: #{forward.7} parent=5 // pred_region
        %s169 = ssub.s32 %s14, 1
        // Predicated region
        $region13: #{forward.7} parent=11 // pred_check
          %p170 = pneg %p61
        $region14: #{forward.7} parent=11 // pred_check_branch
          %172 = sbr.rel (%p170) target = $region16
        $region15: #{forward.7} parent=11 // pred_region
          _
        $region16: #{forward.7} parent=11 // pred_fallthru
          _
        // Predicated region
        $region17: #{forward.7} parent=11 // pred_check
          %p173 = pneg %p82
        $region18: #{forward.7} parent=11 // pred_check_branch
          %175 = sbr.rel (%p173) target = $region20
        $region19: #{forward.7} parent=11 // pred_region
          _
        $region20: #{forward.7} parent=11 // pred_fallthru
          _
        // Predicated region
        $region21: #{forward.7} parent=11 // pred_check
          %p176 = pneg %p103
        $region22: #{forward.7} parent=11 // pred_check_branch
          %178 = sbr.rel (%p176) target = $region24
        $region23: #{forward.7} parent=11 // pred_region
          _
        $region24: #{forward.7} parent=11 // pred_fallthru
          _
      $region12: #{forward.7} parent=5 // pred_fallthru
        _
      %p179 = scmp.lt.s32.totalorder %s14, 2
      // Predicated region
      $region25: #{forward.7} parent=5 // pred_check
        %p180 = pneg %p179
      $region26: #{forward.7} parent=5 // pred_check_branch
        %182 = sbr.rel (%p180) target = $region28
      $region27: #{forward.7} parent=5 // pred_region
        // Predicated region
        $region29: #{forward.7} parent=27 // pred_check
          %p183 = pneg %p34
        $region30: #{forward.7} parent=27 // pred_check_branch
          %185 = sbr.rel (%p183) target = $region32
        $region31: #{forward.7} parent=27 // pred_region
          %p186 = scmp.lt.s32.totalorder %s14, 1
          %s187 = scalar_select %p186, %s14, 1
          %s188 = smul.addr %s187, 20
          %s189 = smul.addr %s188, 4
          %s190 = scalar_lea.vmem %s0, %s189
        $region32: #{forward.7} parent=27 // pred_fallthru
          _
        // Predicated region
        $region33: #{forward.7} parent=27 // pred_check
          %p191 = pneg %p123
        $region34: #{forward.7} parent=27 // pred_check_branch
          %193 = sbr.rel (%p191) target = $region36
        $region35: #{forward.7} parent=27 // pred_region
          %p194 = scmp.lt.s32.totalorder %s14, 1
          %s195 = scalar_select %p194, %s14, 1
          %s196 = smul.addr %s195, 8
          %s197 = smul.addr %s196, 8
          %s198 = scalar_lea.vmem %s4, %s197
        $region36: #{forward.7} parent=27 // pred_fallthru
          _
      $region28: #{forward.7} parent=5 // pred_fallthru
        _
      %p199 = scmp.le.s32.totalorder 1, %s14
      %p200 = scmp.lt.s32.totalorder %s14, 3
      %p201 = pnand %p199, %p200
      %p202 = pneg %p201
      // Predicated region
      $region37: #{forward.7} parent=5 // pred_check
        _
      $region38: #{forward.7} parent=5 // pred_check_branch
        %204 = sbr.rel (%p201) target = $region40
      $region39: #{forward.7} parent=5 // pred_region
        %s205 = ssub.s32 %s14, 1
        %p206 = scmp.lt.s32.totalorder %s19, 1
        %s207 = scalar_select %p206, %s19, 1
        %s208 = smul.addr %s207, 20
        %s209 = smul.addr %s208, 4
        %s210 = scalar_lea.vmem %s0, %s209
        %p211 = pneg %p40
        %p212 = pneg %p37
        %p213 = pneg %p61
        %p214 = pneg %p58
        %p215 = pneg %p82
        %p216 = pneg %p79
        %p217 = pneg %p103
        %p218 = pneg %p100
        %p219 = scmp.lt.s32.totalorder %s19, 1
        %s220 = scalar_select %p219, %s19, 1
        %s221 = smul.addr %s220, 8
        %s222 = smul.addr %s221, 8
        %s223 = scalar_lea.vmem %s4, %s222
        %p224 = pneg %p129
        %p225 = pneg %p126
        %p226 = pneg %p155
        %p227 = pneg %p152
        %s228 = sand.u32 %s142, 1
        %s229 = scalar_lea.sflag [#allocation3], %s228
        %s230 = sand.u32 %s142, 1
        %s231 = smul.addr %s230, 64
        %s232 = scalar_lea.vmem [#allocation2], %s231
        %p233 = scmp.lt.s32.totalorder %s19, 1
        %s234 = scalar_select %p233, %s19, 1
        %s235 = smul.addr %s234, 20
        %s236 = smul.addr %s235, 4
        %s237 = scalar_lea.vmem %s0, %s236
        %p238 = scmp.lt.s32.totalorder %s19, 1
        %s239 = scalar_select %p238, %s19, 1
        %s240 = smul.addr %s239, 8
        %s241 = smul.addr %s240, 8
        %s242 = scalar_lea.vmem %s4, %s241
        %v244 = vld [vmem:[%s237] sm:$0xf]
        %v245 = vld [vmem:[%s237 + $0x4] sm:$0x1]
        %v246 = vld [vmem:[%s237 + $0x8] sm:$0xf]
        %v247 = vld [vmem:[%s237 + $0xc] sm:$0x1]
        %v248 = vld [vmem:[%s237 + $0x10] sm:$0xf]
        %v249 = vld [vmem:[%s237 + $0x14] sm:$0x1]
        %v250 = vld [vmem:[%s237 + $0x18] sm:$0xf]
        %v251 = vld [vmem:[%s237 + $0x1c] sm:$0x1]
        %v252 = vld [vmem:[%s237 + $0x20] sm:$0xf]
        %v253 = vld [vmem:[%s237 + $0x24] sm:$0x1]
        %v254 = vld [vmem:[%s237 + $0x28] sm:$0xf]
        %v255 = vld [vmem:[%s237 + $0x2c] sm:$0x1]
        %v256 = vld [vmem:[%s237 + $0x30] sm:$0xf]
        %v257 = vld [vmem:[%s237 + $0x34] sm:$0x1]
        %v258 = vld [vmem:[%s237 + $0x38] sm:$0xf]
        %v259 = vld [vmem:[%s237 + $0x3c] sm:$0x1]
        %v260 = vld [vmem:[%s237 + $0x40] sm:$0xf]
        %v261 = vld [vmem:[%s237 + $0x44] sm:$0x1]
        %v262 = vld [vmem:[%s237 + $0x48] sm:$0xf]
        %v263 = vld [vmem:[%s237 + $0x4c] sm:$0x1]
        %v264 = vunpack.c.l.bf16 %v244
        %v265 = vunpack.c.l.bf16 %v245
        %v266 = vunpack.c.l.bf16 %v246
        %v267 = vunpack.c.l.bf16 %v247
        %v268 = vunpack.c.l.bf16 %v248
        %v269 = vunpack.c.l.bf16 %v249
        %v270 = vunpack.c.l.bf16 %v250
        %v271 = vunpack.c.l.bf16 %v251
        %v272 = vunpack.c.l.bf16 %v252
        %v273 = vunpack.c.l.bf16 %v253
        %v274 = vunpack.c.l.bf16 %v254
        %v275 = vunpack.c.l.bf16 %v255
        %v276 = vunpack.c.l.bf16 %v256
        %v277 = vunpack.c.l.bf16 %v257
        %v278 = vunpack.c.l.bf16 %v258
        %v279 = vunpack.c.l.bf16 %v259
        %v280 = vunpack.c.l.bf16 %v260
        %v281 = vunpack.c.l.bf16 %v261
        %v282 = vunpack.c.l.bf16 %v262
        %v283 = vunpack.c.l.bf16 %v263
        %v284 = vpack.c.bf16 %v266, %v264
        %v285 = vpack.c.bf16 %v270, %v268
        %v286 = vpack.c.bf16 %v274, %v272
        %v287 = vpack.c.bf16 %v278, %v276
        %v288 = vld [vmem:[%s1] sm:$0xf]
        %v289 = vld [vmem:[%s1 + $0x4] sm:$0xf]
        %v290 = vld [vmem:[%s1 + $0x8] sm:$0xf]
        %v291 = vld [vmem:[%s1 + $0xc] sm:$0xf]
        %vm308 = vcmask 1046528
        %v309 = vrot.slane %v264, 1
        %v310 = vrot.slane %v265, 1
        %v311 = vsel %vm308, %v309, %v310
        %v312 = vrot.slane %v266, 1
        %v313 = vrot.slane %v267, 1
        %v314 = vsel %vm308, %v312, %v313
        %v315 = vrot.slane %v268, 1
        %v316 = vrot.slane %v269, 1
        %v317 = vsel %vm308, %v315, %v316
        %v318 = vrot.slane %v270, 1
        %v319 = vrot.slane %v271, 1
        %v320 = vsel %vm308, %v318, %v319
        %v321 = vrot.slane %v272, 1
        %v322 = vrot.slane %v273, 1
        %v323 = vsel %vm308, %v321, %v322
        %v324 = vrot.slane %v274, 1
        %v325 = vrot.slane %v275, 1
        %v326 = vsel %vm308, %v324, %v325
        %v327 = vrot.slane %v276, 1
        %v328 = vrot.slane %v277, 1
        %v329 = vsel %vm308, %v327, %v328
        %v330 = vrot.slane %v278, 1
        %v331 = vrot.slane %v279, 1
        %v332 = vsel %vm308, %v330, %v331
        %v341 = vpack.c.bf16 %v314, %v311
        %v342 = vpack.c.bf16 %v320, %v317
        %v343 = vpack.c.bf16 %v326, %v323
        %v344 = vpack.c.bf16 %v332, %v329
        %s345 = scalar_lea.vmem %s1, 16
        %v346 = vld [vmem:[%s345] sm:$0xf]
        %v347 = vld [vmem:[%s345 + $0x4] sm:$0xf]
        %v348 = vld [vmem:[%s345 + $0x8] sm:$0xf]
        %v349 = vld [vmem:[%s345 + $0xc] sm:$0xf]
        %v354 = vunpack.c.l.b16 %v346
        %v355 = vunpack.c.l.b16 %v347
        %v356 = vunpack.c.l.b16 %v348
        %v357 = vunpack.c.l.b16 %v349
        %v358 = vpack.c.b16 %v355, %v354
        %v359 = vpack.c.b16 %v357, %v356
        %vm362 = vcmask 261120
        %v364 = vsel %vm362, %v341, 0
        %v367 = vsel %vm362, %v342, 0
        %v370 = vsel %vm362, %v343, 0
        %v373 = vsel %vm362, %v344, 0
        %375 = vmatpush.bf16.msra.mxu0 0
        %376 = vmatpush.bf16.msra.mxu0 0
        %377 = vmatpush.bf16.msra.mxu0 0
        %378 = vmatpush.bf16.msra.mxu0 0
        %379 = vmatpush.bf16.msra.mxu0 0
        %380 = vmatpush.bf16.msra.mxu0 0
        %381 = vmatpush.bf16.msra.mxu0 %v359
        %382 = vmatpush.bf16.msra.mxu0 %v358
        %383 = vmatmul.bf16.gmra.mxu0 %v364
        %v384 = vpop.f32.mrf.mxu0
        %v385 = vadd.f32 0.0, %v384
        %v386 = vpop.f32.mrf.mxu0
        %v387 = vadd.f32 0.0, %v386
        %388 = vmatmul.bf16.gmra.mxu0 %v367
        %v389 = vpop.f32.mrf.mxu0
        %v390 = vadd.f32 0.0, %v389
        %v391 = vpop.f32.mrf.mxu0
        %v392 = vadd.f32 0.0, %v391
        %393 = vmatmul.bf16.gmra.mxu0 %v370
        %v394 = vpop.f32.mrf.mxu0
        %v395 = vadd.f32 0.0, %v394
        %v396 = vpop.f32.mrf.mxu0
        %v397 = vadd.f32 0.0, %v396
        %398 = vmatmul.bf16.gmra.mxu0 %v373
        %v399 = vpop.f32.mrf.mxu0
        %v400 = vadd.f32 0.0, %v399
        %v401 = vpop.f32.mrf.mxu0
        %v402 = vadd.f32 0.0, %v401
        %403 = vdwg.mxu0
        %v408 = vunpack.c.l.b16 %v288
        %v409 = vunpack.c.l.b16 %v289
        %v410 = vunpack.c.l.b16 %v290
        %v411 = vunpack.c.l.b16 %v291
        %v412 = vpack.c.b16 %v409, %v408
        %v413 = vpack.c.b16 %v411, %v410
        %v417 = vsel %vm362, %v284, 0
        %v420 = vsel %vm362, %v285, 0
        %v423 = vsel %vm362, %v286, 0
        %v426 = vsel %vm362, %v287, 0
        %428 = vmatpush.bf16.msra.mxu0 0
        %429 = vmatpush.bf16.msra.mxu0 0
        %430 = vmatpush.bf16.msra.mxu0 0
        %431 = vmatpush.bf16.msra.mxu0 0
        %432 = vmatpush.bf16.msra.mxu0 0
        %433 = vmatpush.bf16.msra.mxu0 0
        %434 = vmatpush.bf16.msra.mxu0 %v413
        %435 = vmatpush.bf16.msra.mxu0 %v412
        %436 = vmatmul.bf16.gmra.mxu0 %v417
        %v437 = vpop.f32.mrf.mxu0
        %v438 = vadd.f32 %v385, %v437
        %v439 = vpop.f32.mrf.mxu0
        %v440 = vadd.f32 %v387, %v439
        %441 = vmatmul.bf16.gmra.mxu0 %v420
        %v442 = vpop.f32.mrf.mxu0
        %v443 = vadd.f32 %v390, %v442
        %v444 = vpop.f32.mrf.mxu0
        %v445 = vadd.f32 %v392, %v444
        %446 = vmatmul.bf16.gmra.mxu0 %v423
        %v447 = vpop.f32.mrf.mxu0
        %v448 = vadd.f32 %v395, %v447
        %v449 = vpop.f32.mrf.mxu0
        %v450 = vadd.f32 %v397, %v449
        %451 = vmatmul.bf16.gmra.mxu0 %v426
        %v452 = vpop.f32.mrf.mxu0
        %v453 = vadd.f32 %v400, %v452
        %v454 = vpop.f32.mrf.mxu0
        %v455 = vadd.f32 %v402, %v454
        %456 = vdwg.mxu0
        %vm457 = vcmask 1045504
        %v458 = vrot.slane %v264, 2
        %v459 = vrot.slane %v265, 2
        %v460 = vsel %vm457, %v458, %v459
        %v461 = vrot.slane %v266, 2
        %v462 = vrot.slane %v267, 2
        %v463 = vsel %vm457, %v461, %v462
        %v464 = vrot.slane %v268, 2
        %v465 = vrot.slane %v269, 2
        %v466 = vsel %vm457, %v464, %v465
        %v467 = vrot.slane %v270, 2
        %v468 = vrot.slane %v271, 2
        %v469 = vsel %vm457, %v467, %v468
        %v470 = vrot.slane %v272, 2
        %v471 = vrot.slane %v273, 2
        %v472 = vsel %vm457, %v470, %v471
        %v473 = vrot.slane %v274, 2
        %v474 = vrot.slane %v275, 2
        %v475 = vsel %vm457, %v473, %v474
        %v476 = vrot.slane %v276, 2
        %v477 = vrot.slane %v277, 2
        %v478 = vsel %vm457, %v476, %v477
        %v479 = vrot.slane %v278, 2
        %v480 = vrot.slane %v279, 2
        %v481 = vsel %vm457, %v479, %v480
        %v490 = vpack.c.bf16 %v463, %v460
        %v491 = vpack.c.bf16 %v469, %v466
        %v492 = vpack.c.bf16 %v475, %v472
        %v493 = vpack.c.bf16 %v481, %v478
        %s494 = scalar_lea.vmem %s1, 32
        %v495 = vld [vmem:[%s494] sm:$0xf]
        %v496 = vld [vmem:[%s494 + $0x4] sm:$0xf]
        %v497 = vld [vmem:[%s494 + $0x8] sm:$0xf]
        %v498 = vld [vmem:[%s494 + $0xc] sm:$0xf]
        %v503 = vunpack.c.l.b16 %v495
        %v504 = vunpack.c.l.b16 %v496
        %v505 = vunpack.c.l.b16 %v497
        %v506 = vunpack.c.l.b16 %v498
        %v507 = vpack.c.b16 %v504, %v503
        %v508 = vpack.c.b16 %v506, %v505
        %v512 = vsel %vm362, %v490, 0
        %v515 = vsel %vm362, %v491, 0
        %v518 = vsel %vm362, %v492, 0
        %v521 = vsel %vm362, %v493, 0
        %523 = vmatpush.bf16.msra.mxu0 0
        %524 = vmatpush.bf16.msra.mxu0 0
        %525 = vmatpush.bf16.msra.mxu0 0
        %526 = vmatpush.bf16.msra.mxu0 0
        %527 = vmatpush.bf16.msra.mxu0 0
        %528 = vmatpush.bf16.msra.mxu0 0
        %529 = vmatpush.bf16.msra.mxu0 %v508
        %530 = vmatpush.bf16.msra.mxu0 %v507
        %531 = vmatmul.bf16.gmra.mxu0 %v512
        %v532 = vpop.f32.mrf.mxu0
        %v533 = vadd.f32 0.0, %v532
        %v534 = vpop.f32.mrf.mxu0
        %v535 = vadd.f32 0.0, %v534
        %536 = vmatmul.bf16.gmra.mxu0 %v515
        %v537 = vpop.f32.mrf.mxu0
        %v538 = vadd.f32 0.0, %v537
        %v539 = vpop.f32.mrf.mxu0
        %v540 = vadd.f32 0.0, %v539
        %541 = vmatmul.bf16.gmra.mxu0 %v518
        %v542 = vpop.f32.mrf.mxu0
        %v543 = vadd.f32 0.0, %v542
        %v544 = vpop.f32.mrf.mxu0
        %v545 = vadd.f32 0.0, %v544
        %546 = vmatmul.bf16.gmra.mxu0 %v521
        %v547 = vpop.f32.mrf.mxu0
        %v548 = vadd.f32 0.0, %v547
        %v549 = vpop.f32.mrf.mxu0
        %v550 = vadd.f32 0.0, %v549
        %551 = vdwg.mxu0
        %v552 = vadd.f32 %v438, %v533
        %v553 = vadd.f32 %v440, %v535
        %v554 = vadd.f32 %v443, %v538
        %v555 = vadd.f32 %v445, %v540
        %v556 = vadd.f32 %v448, %v543
        %v557 = vadd.f32 %v450, %v545
        %v558 = vadd.f32 %v453, %v548
        %v559 = vadd.f32 %v455, %v550
        %v560 = vpack.c.bf16 %v268, %v266
        %v561 = vpack.c.bf16 %v272, %v270
        %v562 = vpack.c.bf16 %v276, %v274
        %v563 = vpack.c.bf16 %v280, %v278
        %s564 = scalar_lea.vmem %s1, 48
        %v565 = vld [vmem:[%s564] sm:$0xf]
        %v566 = vld [vmem:[%s564 + $0x4] sm:$0xf]
        %v567 = vld [vmem:[%s564 + $0x8] sm:$0xf]
        %v568 = vld [vmem:[%s564 + $0xc] sm:$0xf]
        %v573 = vunpack.c.l.b16 %v565
        %v574 = vunpack.c.l.b16 %v566
        %v575 = vunpack.c.l.b16 %v567
        %v576 = vunpack.c.l.b16 %v568
        %v577 = vpack.c.b16 %v574, %v573
        %v578 = vpack.c.b16 %v576, %v575
        %v582 = vsel %vm362, %v560, 0
        %v585 = vsel %vm362, %v561, 0
        %v588 = vsel %vm362, %v562, 0
        %v591 = vsel %vm362, %v563, 0
        %593 = vmatpush.bf16.msra.mxu0 0
        %594 = vmatpush.bf16.msra.mxu0 0
        %595 = vmatpush.bf16.msra.mxu0 0
        %596 = vmatpush.bf16.msra.mxu0 0
        %597 = vmatpush.bf16.msra.mxu0 0
        %598 = vmatpush.bf16.msra.mxu0 0
        %599 = vmatpush.bf16.msra.mxu0 %v578
        %600 = vmatpush.bf16.msra.mxu0 %v577
        %601 = vmatmul.bf16.gmra.mxu0 %v582
        %v602 = vpop.f32.mrf.mxu0
        %v603 = vadd.f32 0.0, %v602
        %v604 = vpop.f32.mrf.mxu0
        %v605 = vadd.f32 0.0, %v604
        %606 = vmatmul.bf16.gmra.mxu0 %v585
        %v607 = vpop.f32.mrf.mxu0
        %v608 = vadd.f32 0.0, %v607
        %v609 = vpop.f32.mrf.mxu0
        %v610 = vadd.f32 0.0, %v609
        %611 = vmatmul.bf16.gmra.mxu0 %v588
        %v612 = vpop.f32.mrf.mxu0
        %v613 = vadd.f32 0.0, %v612
        %v614 = vpop.f32.mrf.mxu0
        %v615 = vadd.f32 0.0, %v614
        %616 = vmatmul.bf16.gmra.mxu0 %v591
        %v617 = vpop.f32.mrf.mxu0
        %v618 = vadd.f32 0.0, %v617
        %v619 = vpop.f32.mrf.mxu0
        %v620 = vadd.f32 0.0, %v619
        %621 = vdwg.mxu0
        %v622 = vadd.f32 %v552, %v603
        %v623 = vadd.f32 %v553, %v605
        %v624 = vadd.f32 %v554, %v608
        %v625 = vadd.f32 %v555, %v610
        %v626 = vadd.f32 %v556, %v613
        %v627 = vadd.f32 %v557, %v615
        %v628 = vadd.f32 %v558, %v618
        %v629 = vadd.f32 %v559, %v620
        %v632 = vrot.slane %v280, 1
        %v633 = vrot.slane %v281, 1
        %v634 = vsel %vm308, %v632, %v633
        %v636 = vpack.c.bf16 %v317, %v314
        %v637 = vpack.c.bf16 %v323, %v320
        %v638 = vpack.c.bf16 %v329, %v326
        %v639 = vpack.c.bf16 %v634, %v332
        %s640 = scalar_lea.vmem %s1, 64
        %v641 = vld [vmem:[%s640] sm:$0xf]
        %v642 = vld [vmem:[%s640 + $0x4] sm:$0xf]
        %v643 = vld [vmem:[%s640 + $0x8] sm:$0xf]
        %v644 = vld [vmem:[%s640 + $0xc] sm:$0xf]
        %v649 = vunpack.c.l.b16 %v641
        %v650 = vunpack.c.l.b16 %v642
        %v651 = vunpack.c.l.b16 %v643
        %v652 = vunpack.c.l.b16 %v644
        %v653 = vpack.c.b16 %v650, %v649
        %v654 = vpack.c.b16 %v652, %v651
        %v658 = vsel %vm362, %v636, 0
        %v661 = vsel %vm362, %v637, 0
        %v664 = vsel %vm362, %v638, 0
        %v667 = vsel %vm362, %v639, 0
        %669 = vmatpush.bf16.msra.mxu0 0
        %670 = vmatpush.bf16.msra.mxu0 0
        %671 = vmatpush.bf16.msra.mxu0 0
        %672 = vmatpush.bf16.msra.mxu0 0
        %673 = vmatpush.bf16.msra.mxu0 0
        %674 = vmatpush.bf16.msra.mxu0 0
        %675 = vmatpush.bf16.msra.mxu0 %v654
        %676 = vmatpush.bf16.msra.mxu0 %v653
        %677 = vmatmul.bf16.gmra.mxu0 %v658
        %v678 = vpop.f32.mrf.mxu0
        %v679 = vadd.f32 0.0, %v678
        %v680 = vpop.f32.mrf.mxu0
        %v681 = vadd.f32 0.0, %v680
        %682 = vmatmul.bf16.gmra.mxu0 %v661
        %v683 = vpop.f32.mrf.mxu0
        %v684 = vadd.f32 0.0, %v683
        %v685 = vpop.f32.mrf.mxu0
        %v686 = vadd.f32 0.0, %v685
        %687 = vmatmul.bf16.gmra.mxu0 %v664
        %v688 = vpop.f32.mrf.mxu0
        %v689 = vadd.f32 0.0, %v688
        %v690 = vpop.f32.mrf.mxu0
        %v691 = vadd.f32 0.0, %v690
        %692 = vmatmul.bf16.gmra.mxu0 %v667
        %v693 = vpop.f32.mrf.mxu0
        %v694 = vadd.f32 0.0, %v693
        %v695 = vpop.f32.mrf.mxu0
        %v696 = vadd.f32 0.0, %v695
        %697 = vdwg.mxu0
        %v698 = vadd.f32 %v622, %v679
        %v699 = vadd.f32 %v623, %v681
        %v700 = vadd.f32 %v624, %v684
        %v701 = vadd.f32 %v625, %v686
        %v702 = vadd.f32 %v626, %v689
        %v703 = vadd.f32 %v627, %v691
        %v704 = vadd.f32 %v628, %v694
        %v705 = vadd.f32 %v629, %v696
        %v706 = vrot.slane %v280, 2
        %v707 = vrot.slane %v281, 2
        %v708 = vsel %vm457, %v706, %v707
        %v710 = vpack.c.bf16 %v466, %v463
        %v711 = vpack.c.bf16 %v472, %v469
        %v712 = vpack.c.bf16 %v478, %v475
        %v713 = vpack.c.bf16 %v708, %v481
        %s714 = scalar_lea.vmem %s1, 80
        %v715 = vld [vmem:[%s714] sm:$0xf]
        %v716 = vld [vmem:[%s714 + $0x4] sm:$0xf]
        %v717 = vld [vmem:[%s714 + $0x8] sm:$0xf]
        %v718 = vld [vmem:[%s714 + $0xc] sm:$0xf]
        %v723 = vunpack.c.l.b16 %v715
        %v724 = vunpack.c.l.b16 %v716
        %v725 = vunpack.c.l.b16 %v717
        %v726 = vunpack.c.l.b16 %v718
        %v727 = vpack.c.b16 %v724, %v723
        %v728 = vpack.c.b16 %v726, %v725
        %v732 = vsel %vm362, %v710, 0
        %v735 = vsel %vm362, %v711, 0
        %v738 = vsel %vm362, %v712, 0
        %v741 = vsel %vm362, %v713, 0
        %743 = vmatpush.bf16.msra.mxu0 0
        %744 = vmatpush.bf16.msra.mxu0 0
        %745 = vmatpush.bf16.msra.mxu0 0
        %746 = vmatpush.bf16.msra.mxu0 0
        %747 = vmatpush.bf16.msra.mxu0 0
        %748 = vmatpush.bf16.msra.mxu0 0
        %749 = vmatpush.bf16.msra.mxu0 %v728
        %750 = vmatpush.bf16.msra.mxu0 %v727
        %751 = vmatmul.bf16.gmra.mxu0 %v732
        %v752 = vpop.f32.mrf.mxu0
        %v753 = vadd.f32 0.0, %v752
        %v754 = vpop.f32.mrf.mxu0
        %v755 = vadd.f32 0.0, %v754
        %756 = vmatmul.bf16.gmra.mxu0 %v735
        %v757 = vpop.f32.mrf.mxu0
        %v758 = vadd.f32 0.0, %v757
        %v759 = vpop.f32.mrf.mxu0
        %v760 = vadd.f32 0.0, %v759
        %761 = vmatmul.bf16.gmra.mxu0 %v738
        %v762 = vpop.f32.mrf.mxu0
        %v763 = vadd.f32 0.0, %v762
        %v764 = vpop.f32.mrf.mxu0
        %v765 = vadd.f32 0.0, %v764
        %766 = vmatmul.bf16.gmra.mxu0 %v741
        %v767 = vpop.f32.mrf.mxu0
        %v768 = vadd.f32 0.0, %v767
        %v769 = vpop.f32.mrf.mxu0
        %v770 = vadd.f32 0.0, %v769
        %771 = vdwg.mxu0
        %v772 = vadd.f32 %v698, %v753
        %v773 = vadd.f32 %v699, %v755
        %v774 = vadd.f32 %v700, %v758
        %v775 = vadd.f32 %v701, %v760
        %v776 = vadd.f32 %v702, %v763
        %v777 = vadd.f32 %v703, %v765
        %v778 = vadd.f32 %v704, %v768
        %v779 = vadd.f32 %v705, %v770
        %v780 = vpack.c.bf16 %v282, %v280
        %s781 = scalar_lea.vmem %s1, 96
        %v782 = vld [vmem:[%s781] sm:$0xf]
        %v783 = vld [vmem:[%s781 + $0x4] sm:$0xf]
        %v784 = vld [vmem:[%s781 + $0x8] sm:$0xf]
        %v785 = vld [vmem:[%s781 + $0xc] sm:$0xf]
        %v790 = vunpack.c.l.b16 %v782
        %v791 = vunpack.c.l.b16 %v783
        %v792 = vunpack.c.l.b16 %v784
        %v793 = vunpack.c.l.b16 %v785
        %v794 = vpack.c.b16 %v791, %v790
        %v795 = vpack.c.b16 %v793, %v792
        %v799 = vsel %vm362, %v780, 0
        %801 = vmatpush.bf16.msra.mxu0 0
        %802 = vmatpush.bf16.msra.mxu0 0
        %803 = vmatpush.bf16.msra.mxu0 0
        %804 = vmatpush.bf16.msra.mxu0 0
        %805 = vmatpush.bf16.msra.mxu0 0
        %806 = vmatpush.bf16.msra.mxu0 0
        %807 = vmatpush.bf16.msra.mxu0 %v795
        %808 = vmatpush.bf16.msra.mxu0 %v794
        %809 = vmatmul.bf16.gmra.mxu0 %v420
        %v810 = vpop.f32.mrf.mxu0
        %v811 = vadd.f32 0.0, %v810
        %v812 = vpop.f32.mrf.mxu0
        %v813 = vadd.f32 0.0, %v812
        %814 = vmatmul.bf16.gmra.mxu0 %v423
        %v815 = vpop.f32.mrf.mxu0
        %v816 = vadd.f32 0.0, %v815
        %v817 = vpop.f32.mrf.mxu0
        %v818 = vadd.f32 0.0, %v817
        %819 = vmatmul.bf16.gmra.mxu0 %v426
        %v820 = vpop.f32.mrf.mxu0
        %v821 = vadd.f32 0.0, %v820
        %v822 = vpop.f32.mrf.mxu0
        %v823 = vadd.f32 0.0, %v822
        %824 = vmatmul.bf16.gmra.mxu0 %v799
        %v825 = vpop.f32.mrf.mxu0
        %v826 = vadd.f32 0.0, %v825
        %v827 = vpop.f32.mrf.mxu0
        %v828 = vadd.f32 0.0, %v827
        %829 = vdwg.mxu0
        %v830 = vadd.f32 %v772, %v811
        %v831 = vadd.f32 %v773, %v813
        %v832 = vadd.f32 %v774, %v816
        %v833 = vadd.f32 %v775, %v818
        %v834 = vadd.f32 %v776, %v821
        %v835 = vadd.f32 %v777, %v823
        %v836 = vadd.f32 %v778, %v826
        %v837 = vadd.f32 %v779, %v828
        %v840 = vrot.slane %v282, 1
        %v841 = vrot.slane %v283, 1
        %v842 = vsel %vm308, %v840, %v841
        %v844 = vpack.c.bf16 %v842, %v634
        %s845 = scalar_lea.vmem %s1, 112
        %v846 = vld [vmem:[%s845] sm:$0xf]
        %v847 = vld [vmem:[%s845 + $0x4] sm:$0xf]
        %v848 = vld [vmem:[%s845 + $0x8] sm:$0xf]
        %v849 = vld [vmem:[%s845 + $0xc] sm:$0xf]
        %v854 = vunpack.c.l.b16 %v846
        %v855 = vunpack.c.l.b16 %v847
        %v856 = vunpack.c.l.b16 %v848
        %v857 = vunpack.c.l.b16 %v849
        %v858 = vpack.c.b16 %v855, %v854
        %v859 = vpack.c.b16 %v857, %v856
        %v863 = vsel %vm362, %v844, 0
        %865 = vmatpush.bf16.msra.mxu0 0
        %866 = vmatpush.bf16.msra.mxu0 0
        %867 = vmatpush.bf16.msra.mxu0 0
        %868 = vmatpush.bf16.msra.mxu0 0
        %869 = vmatpush.bf16.msra.mxu0 0
        %870 = vmatpush.bf16.msra.mxu0 0
        %871 = vmatpush.bf16.msra.mxu0 %v859
        %872 = vmatpush.bf16.msra.mxu0 %v858
        %873 = vmatmul.bf16.gmra.mxu0 %v367
        %v874 = vpop.f32.mrf.mxu0
        %v875 = vadd.f32 0.0, %v874
        %v876 = vpop.f32.mrf.mxu0
        %v877 = vadd.f32 0.0, %v876
        %878 = vmatmul.bf16.gmra.mxu0 %v370
        %v879 = vpop.f32.mrf.mxu0
        %v880 = vadd.f32 0.0, %v879
        %v881 = vpop.f32.mrf.mxu0
        %v882 = vadd.f32 0.0, %v881
        %883 = vmatmul.bf16.gmra.mxu0 %v373
        %v884 = vpop.f32.mrf.mxu0
        %v885 = vadd.f32 0.0, %v884
        %v886 = vpop.f32.mrf.mxu0
        %v887 = vadd.f32 0.0, %v886
        %888 = vmatmul.bf16.gmra.mxu0 %v863
        %v889 = vpop.f32.mrf.mxu0
        %v890 = vadd.f32 0.0, %v889
        %v891 = vpop.f32.mrf.mxu0
        %v892 = vadd.f32 0.0, %v891
        %893 = vdwg.mxu0
        %v894 = vadd.f32 %v830, %v875
        %v895 = vadd.f32 %v831, %v877
        %v896 = vadd.f32 %v832, %v880
        %v897 = vadd.f32 %v833, %v882
        %v898 = vadd.f32 %v834, %v885
        %v899 = vadd.f32 %v835, %v887
        %v900 = vadd.f32 %v836, %v890
        %v901 = vadd.f32 %v837, %v892
        %v902 = vrot.slane %v282, 2
        %v903 = vrot.slane %v283, 2
        %v904 = vsel %vm457, %v902, %v903
        %v906 = vpack.c.bf16 %v904, %v708
        %s907 = scalar_lea.vmem %s1, 128
        %v908 = vld [vmem:[%s907] sm:$0xf]
        %v909 = vld [vmem:[%s907 + $0x4] sm:$0xf]
        %v910 = vld [vmem:[%s907 + $0x8] sm:$0xf]
        %v911 = vld [vmem:[%s907 + $0xc] sm:$0xf]
        %v916 = vunpack.c.l.b16 %v908
        %v917 = vunpack.c.l.b16 %v909
        %v918 = vunpack.c.l.b16 %v910
        %v919 = vunpack.c.l.b16 %v911
        %v920 = vpack.c.b16 %v917, %v916
        %v921 = vpack.c.b16 %v919, %v918
        %v925 = vsel %vm362, %v906, 0
        %927 = vmatpush.bf16.msra.mxu0 0
        %928 = vmatpush.bf16.msra.mxu0 0
        %929 = vmatpush.bf16.msra.mxu0 0
        %930 = vmatpush.bf16.msra.mxu0 0
        %931 = vmatpush.bf16.msra.mxu0 0
        %932 = vmatpush.bf16.msra.mxu0 0
        %933 = vmatpush.bf16.msra.mxu0 %v921
        %934 = vmatpush.bf16.msra.mxu0 %v920
        %935 = vmatmul.bf16.gmra.mxu0 %v515
        %v936 = vpop.f32.mrf.mxu0
        %v937 = vadd.f32 0.0, %v936
        %v938 = vpop.f32.mrf.mxu0
        %v939 = vadd.f32 0.0, %v938
        %940 = vmatmul.bf16.gmra.mxu0 %v518
        %v941 = vpop.f32.mrf.mxu0
        %v942 = vadd.f32 0.0, %v941
        %v943 = vpop.f32.mrf.mxu0
        %v944 = vadd.f32 0.0, %v943
        %945 = vmatmul.bf16.gmra.mxu0 %v521
        %v946 = vpop.f32.mrf.mxu0
        %v947 = vadd.f32 0.0, %v946
        %v948 = vpop.f32.mrf.mxu0
        %v949 = vadd.f32 0.0, %v948
        %950 = vmatmul.bf16.gmra.mxu0 %v925
        %v951 = vpop.f32.mrf.mxu0
        %v952 = vadd.f32 0.0, %v951
        %v953 = vpop.f32.mrf.mxu0
        %v954 = vadd.f32 0.0, %v953
        %955 = vdwg.mxu0
        %v956 = vadd.f32 %v894, %v937
        %v957 = vadd.f32 %v895, %v939
        %v958 = vadd.f32 %v896, %v942
        %v959 = vadd.f32 %v897, %v944
        %v960 = vadd.f32 %v898, %v947
        %v961 = vadd.f32 %v899, %v949
        %v962 = vadd.f32 %v900, %v952
        %v963 = vadd.f32 %v901, %v954
        %v964 = vld [vmem:[%s2] sm:$0x1]
        %v965 = vld [vmem:[%s3] sm:$0x1]
        %v966 = vsel %vm362, %v956, 0.0
        %v967 = vsel %vm362, %v957, 0.0
        %v968 = vadd.f32 %v966, %v967
        %v969 = vsel %vm362, %v958, 0.0
        %v970 = vadd.f32 %v968, %v969
        %v971 = vsel %vm362, %v959, 0.0
        %v972 = vadd.f32 %v970, %v971
        %v973 = vsel %vm362, %v960, 0.0
        %v974 = vadd.f32 %v972, %v973
        %v975 = vsel %vm362, %v961, 0.0
        %v976 = vadd.f32 %v974, %v975
        %v977 = vsel %vm362, %v962, 0.0
        %v978 = vadd.f32 %v976, %v977
        %v979 = vsel %vm362, %v963, 0.0
        %v980 = vadd.f32 %v978, %v979
        %v981 = vrot.slane %v980, 4
        %v982 = vadd.f32 %v980, %v981
        %v983 = vrot.slane %v982, 2
        %v984 = vadd.f32 %v982, %v983
        %v985 = vrot.slane %v984, 1
        %v986 = vadd.f32 %v984, %v985
        %v987 = vmul.f32 %v956, %v956
        %v988 = vmul.f32 %v957, %v957
        %v989 = vmul.f32 %v958, %v958
        %v990 = vmul.f32 %v959, %v959
        %v991 = vmul.f32 %v960, %v960
        %v992 = vmul.f32 %v961, %v961
        %v993 = vmul.f32 %v962, %v962
        %v994 = vmul.f32 %v963, %v963
        %v995 = vsel %vm362, %v987, 0.0
        %v996 = vsel %vm362, %v988, 0.0
        %v997 = vadd.f32 %v995, %v996
        %v998 = vsel %vm362, %v989, 0.0
        %v999 = vadd.f32 %v997, %v998
        %v1000 = vsel %vm362, %v990, 0.0
        %v1001 = vadd.f32 %v999, %v1000
        %v1002 = vsel %vm362, %v991, 0.0
        %v1003 = vadd.f32 %v1001, %v1002
        %v1004 = vsel %vm362, %v992, 0.0
        %v1005 = vadd.f32 %v1003, %v1004
        %v1006 = vsel %vm362, %v993, 0.0
        %v1007 = vadd.f32 %v1005, %v1006
        %v1008 = vsel %vm362, %v994, 0.0
        %v1009 = vadd.f32 %v1007, %v1008
        %v1010 = vrot.slane %v1009, 4
        %v1011 = vadd.f32 %v1009, %v1010
        %v1012 = vrot.slane %v1011, 2
        %v1013 = vadd.f32 %v1011, %v1012
        %v1014 = vrot.slane %v1013, 1
        %v1015 = vadd.f32 %v1013, %v1014
        %v1016 = vmul.f32 %v986, 0.015625
        %v1017 = vmul.f32 %v1015, 0.015625
        %v1018 = vmul.f32 %v1016, %v1016
        %v1019 = vsub.f32 %v1017, %v1018
        %v1020 = vmax.f32 %v1019, 0.0
        %v1021 = vadd.f32 %v1020, 1e-05
        %v1022 = vrsqrt.pop %v1021
        %v1023 = vmul.f32 %v1022, %v1021
        %v1024 = vmul.f32 %v1023, %v1022
        %v1025 = vmul.f32 0.5, %v1024
        %v1026 = vsub.f32 1.5, %v1025
        %v1027 = vmul.f32 %v1022, %v1026
        %vm1028 = vweird.f32 %v1021
        %vm1029 = vweird.f32 %v1022
        %vm1030 = vmor %vm1028, %vm1029
        %v1031 = vsel %vm1030, %v1022, %v1027
        %v1032 = vsub.f32 %v956, %v1016
        %v1033 = vsub.f32 %v957, %v1016
        %v1034 = vsub.f32 %v958, %v1016
        %v1035 = vsub.f32 %v959, %v1016
        %v1036 = vsub.f32 %v960, %v1016
        %v1037 = vsub.f32 %v961, %v1016
        %v1038 = vsub.f32 %v962, %v1016
        %v1039 = vsub.f32 %v963, %v1016
        %v1040 = vmul.f32 %v1032, %v1031
        %v1041 = vmul.f32 %v1033, %v1031
        %v1042 = vmul.f32 %v1034, %v1031
        %v1043 = vmul.f32 %v1035, %v1031
        %v1044 = vmul.f32 %v1036, %v1031
        %v1045 = vmul.f32 %v1037, %v1031
        %v1046 = vmul.f32 %v1038, %v1031
        %v1047 = vmul.f32 %v1039, %v1031
        %v1049 = vperm.slane %v964, 0
        %v1051 = vmul.f32 %v1040, %v1049
        %v1052 = vmul.f32 %v1041, %v1049
        %v1053 = vmul.f32 %v1042, %v1049
        %v1054 = vmul.f32 %v1043, %v1049
        %v1055 = vmul.f32 %v1044, %v1049
        %v1056 = vmul.f32 %v1045, %v1049
        %v1057 = vmul.f32 %v1046, %v1049
        %v1058 = vmul.f32 %v1047, %v1049
        %v1060 = vperm.slane %v965, 0
        %v1062 = vadd.f32 %v1051, %v1060
        %v1063 = vadd.f32 %v1052, %v1060
        %v1064 = vadd.f32 %v1053, %v1060
        %v1065 = vadd.f32 %v1054, %v1060
        %v1066 = vadd.f32 %v1055, %v1060
        %v1067 = vadd.f32 %v1056, %v1060
        %v1068 = vadd.f32 %v1057, %v1060
        %v1069 = vadd.f32 %v1058, %v1060
        %v1070 = vld [vmem:[%s242] sm:$0xff]
        %v1071 = vld [vmem:[%s242 + $0x8] sm:$0xff]
        %v1072 = vld [vmem:[%s242 + $0x10] sm:$0xff]
        %v1073 = vld [vmem:[%s242 + $0x18] sm:$0xff]
        %v1074 = vld [vmem:[%s242 + $0x20] sm:$0xff]
        %v1075 = vld [vmem:[%s242 + $0x28] sm:$0xff]
        %v1076 = vld [vmem:[%s242 + $0x30] sm:$0xff]
        %v1077 = vld [vmem:[%s242 + $0x38] sm:$0xff]
        %v1078 = vadd.f32 %v1062, %v1070
        %v1079 = vadd.f32 %v1063, %v1071
        %v1080 = vadd.f32 %v1064, %v1072
        %v1081 = vadd.f32 %v1065, %v1073
        %v1082 = vadd.f32 %v1066, %v1074
        %v1083 = vadd.f32 %v1067, %v1075
        %v1084 = vadd.f32 %v1068, %v1076
        %v1085 = vadd.f32 %v1069, %v1077
        %v1086 = vmax.f32 %v1078, 0.0
        %v1087 = vmax.f32 %v1079, 0.0
        %v1088 = vmax.f32 %v1080, 0.0
        %v1089 = vmax.f32 %v1081, 0.0
        %v1090 = vmax.f32 %v1082, 0.0
        %v1091 = vmax.f32 %v1083, 0.0
        %v1092 = vmax.f32 %v1084, 0.0
        %v1093 = vmax.f32 %v1085, 0.0
        %1094 = vst.msk [vmem:[%s232] sm:$0xff] %vm362, %v1086
        %1095 = vst.msk [vmem:[%s232 + $0x8] sm:$0xff] %vm362, %v1087
        %1096 = vst.msk [vmem:[%s232 + $0x10] sm:$0xff] %vm362, %v1088
        %1097 = vst.msk [vmem:[%s232 + $0x18] sm:$0xff] %vm362, %v1089
        %1098 = vst.msk [vmem:[%s232 + $0x20] sm:$0xff] %vm362, %v1090
        %1099 = vst.msk [vmem:[%s232 + $0x28] sm:$0xff] %vm362, %v1091
        %1100 = vst.msk [vmem:[%s232 + $0x30] sm:$0xff] %vm362, %v1092
        %1101 = vst.msk [vmem:[%s232 + $0x38] sm:$0xff] %vm362, %v1093
        %s1102 = sand.u32 %s142, 1
        %s1103 = scalar_lea.sflag [#allocation3], %s1102
        %s1104 = sand.u32 %s142, 1
        %s1105 = smul.addr %s1104, 64
        %s1106 = scalar_lea.vmem [#allocation2], %s1105
        // Predicated region
        $region41: #{forward.7} parent=39 // pred_check
          %p1107 = pneg %p152
        $region42: #{forward.7} parent=39 // pred_check_branch
          %1109 = sbr.rel (%p1107) target = $region44
        $region43: #{forward.7} parent=39 // pred_region
          %1111 = vsyncadd %s1103, 0
          %s1112 = smul.addr %s19, 8
          %s1113 = smul.addr %s1112, 8
          %s1114 = scalar_lea.hbm %s5, %s1113
          %s1115 = sshll.u32 %s1106, 4
          %s1116 = int_to_ptr.vmem [resolvable:$true] %s1115
          %s1117 = sshll.u32 %s1114, 4
          %s1118 = int_to_ptr.hbm [resolvable:$true] %s1117
          %1123 = dma.vmem_to_hbm [thread:$0]  %s1116, 1024, %s1118, %s1103, 128, 128, 8
        $region44: #{forward.7} parent=39 // pred_fallthru
          _
      $region40: #{forward.7} parent=5 // pred_fallthru
        _
      %p1124 = scmp.le.s32.totalorder 2, %s14
      // Predicated region
      $region45: #{forward.7} parent=5 // pred_check
        %p1125 = pneg %p1124
      $region46: #{forward.7} parent=5 // pred_check_branch
        %1127 = sbr.rel (%p1125) target = $region48
      $region47: #{forward.7} parent=5 // pred_region
        %s1128 = ssub.s32 %s14, 2
        // Predicated region
        $region49: #{forward.7} parent=47 // pred_check
          %p1129 = pneg %p158
        $region50: #{forward.7} parent=47 // pred_check_branch
          %1131 = sbr.rel (%p1129) target = $region52
        $region51: #{forward.7} parent=47 // pred_region
          %s1132 = sand.u32 %s143, 1
          %s1133 = scalar_lea.sflag [#allocation3], %s1132
          %s1134 = sand.u32 %s143, 1
          %s1135 = smul.addr %s1134, 64
          %s1136 = scalar_lea.vmem [#allocation2], %s1135
          %1138 = dma.done %s1133, 1024
        $region52: #{forward.7} parent=47 // pred_fallthru
          _
      $region48: #{forward.7} parent=5 // pred_fallthru
        _
    $region6: #{forward.7} parent=1 // loop_footer
      %s18 = sadd.s32 1, %s14
    $region7: #{forward.7} parent=1 // loop_footer_branch
      %13 = sbr.rel target = $region3
    $region8: #{forward.7} parent=1 // loop_exit
      _
    %1139 = vsyncpa [#allocation3], 1
    %s1140 = scalar_lea.sflag [#allocation3], 1
    %1141 = vsyncpa %s1140, 1

</llo_original>
